<compile_context>
chip_gen: v7x
topology: tpu7x:2x2x1
jax: 0.10.0
libtpu: 0.0.40
codegen_flags: <defaults>
</compile_context>

<pallas_src>
import numpy as np
import jax
import jax.numpy as jnp
from jax import lax
from jax.experimental import pallas as pl
from jax.experimental.pallas import tpu as pltpu

# Static SMPL kinematic tree (24 joints) — structural constant of the model.
PARENTS = (-1, 0, 0, 0, 1, 2, 3, 4, 5, 6, 7, 8, 9, 9, 9,
           12, 13, 14, 16, 17, 18, 19, 20, 21)
NUM_JOINTS = 24
NUM_BONES = 24   # LBS weight channels produced by the voxel deformer
LANES = 128


def _round_up(x, m):
    return ((x + m - 1) // m) * m


# --------------------------------------------------------------------------
# Pose branch kernel: axis_angle_to_matrix + batch_rigid_transform + A @ A0_inv
# Level-parallel tree composition; all planes are (B_pad, 128) lane-dense.
# Per level: ONE fused (12*B, 128) @ (128, 128) parent-gather matmul.
# --------------------------------------------------------------------------
def _make_pose_kernel(num_levels):
    def kernel(theta_ref, relj_ref, jrow_ref, a0_ref, gm_ref, depth_ref, out_ref):
        # theta_ref : (3, B, 128)  axis-angle components, joints on lanes (padded)
        # relj_ref  : (3, 128)     parent-relative joint offsets (root = absolute)
        # jrow_ref  : (3, 128)     canonical joint positions
        # a0_ref    : (16, 128)    A0_inv, component-major (row*4+col, joint)
        # gm_ref    : (128, 128)   one-hot parent-gather matrix GM[parent[i], i] = 1
        # depth_ref : (1, 128)     tree depth per joint (padded lanes = -1)
        # out_ref   : (16, B, 128) output A, component-major
        B = theta_ref.shape[1]
        L = theta_ref.shape[2]

        tx = theta_ref[0]
        ty = theta_ref[1]
        tz = theta_ref[2]

        # ---- axis-angle -> rotation matrix (pytorch3d quaternion route) ----
        ang2 = tx * tx + ty * ty + tz * tz
        angle = jnp.sqrt(ang2)
        half = 0.5 * angle
        small = angle < 1e-6
        safe = jnp.where(small, 1.0, angle)
        s = jnp.where(small, 0.5 - ang2 / 48.0, jnp.sin(half) / safe)
        qw = jnp.cos(half)
        qx = tx * s
        qy = ty * s
        qz = tz * s
        two_s = 2.0 / (qw * qw + qx * qx + qy * qy + qz * qz)
        R = [
            [1.0 - two_s * (qy * qy + qz * qz), two_s * (qx * qy - qz * qw), two_s * (qx * qz + qy * qw)],
            [two_s * (qx * qy + qz * qw), 1.0 - two_s * (qx * qx + qz * qz), two_s * (qy * qz - qx * qw)],
            [two_s * (qx * qz - qy * qw), two_s * (qy * qz + qx * qw), 1.0 - two_s * (qx * qx + qy * qy)],
        ]

        lT = [relj_ref[r:r + 1, :] for r in range(3)]           # (1, 128) local translations
        gm = gm_ref[...]                                        # (128, 128)
        depth = depth_ref[...]                                  # (1, 128)

        # globals initialized with locals; root (depth 0) is already final.
        G_rot = [[R[r][c] for c in range(3)] for r in range(3)]
        G_t = [jnp.broadcast_to(lT[r], (B, L)) for r in range(3)]

        # ---- level-parallel kinematic chain (8 levels, fully unrolled) ----
        for lvl in range(1, num_levels + 1):
            mask = depth == float(lvl)                          # (1, 128) bool
            # ONE fused parent gather for all 12 planes on the MXU:
            # stack along the sublane axis -> (12*B, 128) @ (128, 128).
            stacked = jnp.concatenate(
                [G_rot[0][0], G_rot[0][1], G_rot[0][2],
                 G_rot[1][0], G_rot[1][1], G_rot[1][2],
                 G_rot[2][0], G_rot[2][1], G_rot[2][2],
                 G_t[0], G_t[1], G_t[2]], axis=0)               # (12B, 128)
            gathered = jnp.dot(stacked, gm, preferred_element_type=jnp.float32)

            def plane(p):                                       # (B, 128) slice, aligned
                return gathered[p * B:(p + 1) * B]

            Gp_rot = [[plane(3 * r + c) for c in range(3)] for r in range(3)]
            Gp_t = [plane(9 + r) for r in range(3)]
            # compose gathered-parent transform with the local transform
            comp_rot = [[Gp_rot[r][0] * R[0][c] + Gp_rot[r][1] * R[1][c] + Gp_rot[r][2] * R[2][c]
                         for c in range(3)] for r in range(3)]
            comp_t = [Gp_rot[r][0] * lT[0] + Gp_rot[r][1] * lT[1] + Gp_rot[r][2] * lT[2] + Gp_t[r]
                      for r in range(3)]
            # commit only the joints at this level
            G_rot = [[jnp.where(mask, comp_rot[r][c], G_rot[r][c]) for c in range(3)]
                     for r in range(3)]
            G_t = [jnp.where(mask, comp_t[r], G_t[r]) for r in range(3)]

        # rel_transforms: subtract R_chain @ J_canonical from the translation column
        Jrow = [jrow_ref[r:r + 1, :] for r in range(3)]
        TREL = [G_t[r] - (G_rot[r][0] * Jrow[0] + G_rot[r][1] * Jrow[1] + G_rot[r][2] * Jrow[2])
                for r in range(3)]

        # A = rel_transform @ A0_inv   (einsum 'bnij,njk->bnik'), vectorized over joints
        def a0(k, c):                                          # (1, 128)
            idx = k * 4 + c
            return a0_ref[idx:idx + 1, :]

        for r in range(3):
            for c in range(4):
                out_ref[r * 4 + c] = (G_rot[r][0] * a0(0, c) + G_rot[r][1] * a0(1, c)
                                      + G_rot[r][2] * a0(2, c) + TREL[r] * a0(3, c))
        for c in range(4):                                     # row 3 of A_rel is exactly [0,0,0,1]
            out_ref[12 + c] = jnp.broadcast_to(a0(3, c), (B, L))

    return kernel


def pose_forward(theta, J_canonical, A0_inv):
    """theta (B,24,3) -> A (B,24,4,4); the `theta is not None` branch of forward."""
    B = theta.shape[0]
    N = NUM_JOINTS
    B_pad = _round_up(B, 8)                                  # sublane-aligned batch
    parents = np.asarray(PARENTS)

    # tree depths + parent-gather matrix (all static constants)
    depth = np.zeros(N, np.int64)
    for i in range(1, N):
        depth[i] = depth[parents[i]] + 1
    num_levels = int(depth.max())
    gm_np = np.zeros((LANES, LANES), np.float32)
    for i in range(1, N):
        gm_np[parents[i], i] = 1.0
    depth_np = np.full((1, LANES), -1.0, np.float32)
    depth_np[0, :N] = depth.astype(np.float32)

    J0 = J_canonical[0].astype(jnp.float32)                  # (24, 3)
    relj = J0.at[1:].add(-J0[parents[1:]])                   # rel_joints (root = absolute)

    pad_j = LANES - N
    theta_t = jnp.transpose(theta.astype(jnp.float32), (2, 0, 1))        # (3, B, 24)
    theta_t = jnp.pad(theta_t, ((0, 0), (0, B_pad - B), (0, pad_j)))     # (3, B_pad, 128)
    relj_t = jnp.pad(relj.T, ((0, 0), (0, pad_j)))                       # (3, 128)
    j_t = jnp.pad(J0.T, ((0, 0), (0, pad_j)))                            # (3, 128)
    a0_t = jnp.pad(jnp.transpose(A0_inv.astype(jnp.float32), (1, 2, 0)).reshape(16, N),
                   ((0, 0), (0, pad_j)))                                 # (16, 128)
    gm = jnp.asarray(gm_np)
    depth_f = jnp.asarray(depth_np)

    out = pl.pallas_call(
        _make_pose_kernel(num_levels),
        out_shape=jax.ShapeDtypeStruct((16, B_pad, LANES), jnp.float32),
        grid=(1,),
        in_specs=[
            pl.BlockSpec((3, B_pad, LANES), lambda i: (0, 0, 0)),
            pl.BlockSpec((3, LANES), lambda i: (0, 0)),
            pl.BlockSpec((3, LANES), lambda i: (0, 0)),
            pl.BlockSpec((16, LANES), lambda i: (0, 0)),
            pl.BlockSpec((LANES, LANES), lambda i: (0, 0)),
            pl.BlockSpec((1, LANES), lambda i: (0, 0)),
        ],
        out_specs=pl.BlockSpec((16, B_pad, LANES), lambda i: (0, 0, 0)),
    )(theta_t, relj_t, j_t, a0_t, gm, depth_f)
    return jnp.transpose(out, (1, 2, 0))[:B, :N, :].reshape(B, N, 4, 4)


# --------------------------------------------------------------------------
# Voxel deformer: normalize + trilinear grid_sample (align_corners=True,
# padding_mode='border') as a separable tent-filter matmul on the MXU.
# --------------------------------------------------------------------------
def _tent_dtype():
    """bf16 dense tent math on chips with a packed-bf16 VPU (v6e/v7x); f32 otherwise."""
    try:
        kind = jax.devices()[0].device_kind.lower()
    except Exception:
        return jnp.float32
    if any(t in kind for t in ("v2", "v3", "v4", "v5")):
        return jnp.float32
    return jnp.bfloat16


def _tent_sel(pts_ref, vc_ref, off, scale, ratio, dims, tent_dtype):
    """(TP, Vt) bf16 trilinear selection weights (== grid_sample border/align_corners)."""
    D, H, W = dims
    x = pts_ref[:, 0:1]
    y = pts_ref[:, 1:2]
    z = pts_ref[:, 2:3]
    # VoxelDeformer.normalize (ratio applies to the short-D coordinate)
    gx = (x - off[0]) / scale
    gy = (y - off[1]) / scale
    gz = (z - off[2]) / scale * ratio
    # grid_sample unnormalize (align_corners=True) + border clamp
    ix = jnp.clip((gx + 1.0) * 0.5 * (W - 1), 0.0, float(W - 1))
    iy = jnp.clip((gy + 1.0) * 0.5 * (H - 1), 0.0, float(H - 1))
    iz = jnp.clip((gz + 1.0) * 0.5 * (D - 1), 0.0, float(D - 1))

    vx = vc_ref[0:1, :]                      # (1, Vt)
    vy = vc_ref[1:2, :]
    vz = vc_ref[2:3, :]

    # d = v - i stays f32 (full coordinate range + -1e4 pad sentinel stays finite),
    # then the abs / 1- / relu / combine run in tent_dtype (bf16 on v6e/v7x).
    dx = (vx - ix).astype(tent_dtype)
    dy = (vy - iy).astype(tent_dtype)
    dz = (vz - iz).astype(tent_dtype)
    wx = jnp.maximum(1.0 - jnp.abs(dx), 0.0)                   # (TP, Vt)
    wy = jnp.maximum(1.0 - jnp.abs(dy), 0.0)
    wz = jnp.maximum(1.0 - jnp.abs(dz), 0.0)
    # TODO(synk): full separability (1-D tents on distinct coords + 2 dense combine
    # muls) needs a layout-safe (Dt,H,W) view of the lane axis; tile skipping below
    # already removes most of the dense work, so it is left as a follow-up.
    return (wx * wy * wz).astype(jnp.bfloat16)


def _make_voxel_kernel_single(offset, scale, ratio, dims, tent_dtype):
    off = (float(offset[0]), float(offset[1]), float(offset[2]))
    scale = float(scale)
    ratio = float(ratio)

    def kernel(pts_ref, vc_ref, grid_ref, out_ref):
        # whole grid is one resident tile -> write the matmul straight to out.
        sel = _tent_sel(pts_ref, vc_ref, off, scale, ratio, dims, tent_dtype)
        out_ref[...] = jnp.dot(sel, grid_ref[...], preferred_element_type=jnp.float32)

    return kernel


def _make_voxel_kernel_multi(offset, scale, ratio, dims, tent_dtype, n_v):
    off = (float(offset[0]), float(offset[1]), float(offset[2]))
    scale = float(scale)
    ratio = float(ratio)

    def kernel(kmap_ref, ov_ref, pts_ref, vc_ref, grid_ref, out_ref, acc_ref):
        # kmap_ref / ov_ref : SMEM (n_p*n_v,) int32 scalar-prefetch tables
        # pts_ref  : (TP, 3)      query points
        # vc_ref   : (3, Vt)      voxel coordinates of the (remapped) tile
        # grid_ref : (Vt, C)      bf16 LBS grid tile (channels unpadded)
        # out_ref  : (TP, C) f32  same block across the voxel axis
        # acc_ref  : (TP, C) f32  VMEM accumulator
        i = pl.program_id(0)
        k = pl.program_id(1)

        @pl.when(k == 0)
        def _():
            acc_ref[...] = jnp.zeros_like(acc_ref)

        @pl.when(ov_ref[i * n_v + k] != 0)          # skip non-overlapping voxel tiles
        def _():
            sel = _tent_sel(pts_ref, vc_ref, off, scale, ratio, dims, tent_dtype)
            acc_ref[...] += jnp.dot(sel, grid_ref[...],
                                    preferred_element_type=jnp.float32)

        @pl.when(k == pl.num_programs(1) - 1)
        def _():
            out_ref[...] = acc_ref[...]

    return kernel


def prepare_voxel_constants(grid_flat, res_dhw, v_tile_max=4096):
    """One-time (module-init) preprocessing — hoisted out of the forward pass."""
    D, H, W = res_dhw
    V = D * H * W
    C = grid_flat.shape[1]
    v_tile = min(v_tile_max, _round_up(V, LANES))
    V_pad = _round_up(V, v_tile)
    n_v = V_pad // v_tile

    # per-voxel coordinates in flat (d*H+h)*W+w order; padded voxels get a far
    # sentinel so their tent weight is exactly zero (finite in f32 and bf16).
    zz, yy, xx = jnp.meshgrid(jnp.arange(D, dtype=jnp.float32),
                              jnp.arange(H, dtype=jnp.float32),
                              jnp.arange(W, dtype=jnp.float32), indexing="ij")
    vcoords = jnp.stack([xx.reshape(-1), yy.reshape(-1), zz.reshape(-1)], axis=0)
    vcoords = jnp.pad(vcoords, ((0, 0), (0, V_pad - V)), constant_values=-1e4)

    # LBS grid in HBM: bf16, channels NOT padded to 128 (cuts the dominant
    # re-streamed HBM traffic ~5.3x vs a 128-lane-padded copy).
    grid_pad = jnp.pad(grid_flat.astype(jnp.float32),
                       ((0, V_pad - V), (0, 0))).astype(jnp.bfloat16)

    # z-slab range of the valid voxels in each voxel tile (for tile skipping).
    ks = np.arange(n_v)
    zlo = (ks * v_tile) // (H * W)
    zhi = (np.minimum((ks + 1) * v_tile, V) - 1) // (H * W)

    return dict(vcoords=vcoords, grid=grid_pad, v_tile=int(v_tile), V_pad=int(V_pad),
                n_v=int(n_v), V=int(V), C=int(C), res_dhw=(int(D), int(H), int(W)),
                zlo=jnp.asarray(zlo, jnp.float32), zhi=jnp.asarray(zhi, jnp.float32))


def voxel_deformer_forward(xyz, consts, offset, scale, ratio, tile=256):
    """xyz (..., 3) -> W (..., C); the `xyz_canonical is not None` branch of forward."""
    D, H, W = consts["res_dhw"]
    C = consts["C"]
    v_tile = consts["v_tile"]
    n_v = consts["n_v"]
    V_pad = consts["V_pad"]
    dims = (D, H, W)
    lead_shape = xyz.shape[:-1]

    pts = xyz.reshape(-1, 3).astype(jnp.float32)
    P = pts.shape[0]
    n_p = pl.cdiv(P, tile)
    P_pad = n_p * tile
    pts = jnp.pad(pts, ((0, P_pad - P), (0, 0)))

    tent_dtype = _tent_dtype()

    if n_v == 1:
        # Whole grid fits in one VMEM-resident tile (constant index_map -> one DMA).
        cost = pl.CostEstimate(flops=2 * P_pad * V_pad * C, transcendentals=0,
                               bytes_accessed=V_pad * C * 2 + P_pad * 3 * 4 + P_pad * C * 4)
        out = pl.pallas_call(
            _make_voxel_kernel_single(offset, scale, ratio, dims, tent_dtype),
            out_shape=jax.ShapeDtypeStruct((P_pad, C), jnp.float32),
            grid=(n_p,),
            in_specs=[
                pl.BlockSpec((tile, 3), lambda i: (i, 0)),
                pl.BlockSpec((3, v_tile), lambda i: (0, 0)),
                pl.BlockSpec((v_tile, C), lambda i: (0, 0)),
            ],
            out_specs=pl.BlockSpec((tile, C), lambda i: (i, 0)),
            compiler_params=pltpu.CompilerParams(dimension_semantics=("parallel",)),
            cost_estimate=cost,
        )(pts, consts["vcoords"], consts["grid"])
    else:
        # ---- tile-skip tables (scalar prefetch) ----
        # A point contributes only to voxels with |vz - iz| < 1; test its clamped
        # z range against each voxel tile's z-slab range (conservative, never
        # drops a contributing tile).
        gz = (pts[:, 2] - offset[2]) / scale * ratio
        iz = jnp.clip((gz + 1.0) * 0.5 * (D - 1), 0.0, float(D - 1)).reshape(n_p, tile)
        minz = iz.min(axis=1)
        maxz = iz.max(axis=1)
        ov = ((maxz[:, None] > consts["zlo"][None, :] - 1.0)
              & (minz[:, None] < consts["zhi"][None, :] + 1.0))        # (n_p, n_v)
        k_ids = jnp.arange(n_v, dtype=jnp.int32)
        ff = lax.cummax(jnp.where(ov, k_ids[None, :], -1), axis=1)     # last overlapping k' <= k
        first = jnp.argmax(ov, axis=1).astype(jnp.int32)
        kmap = jnp.where(ff >= 0, ff, first[:, None]).astype(jnp.int32).reshape(-1)
        ov_flat = ov.astype(jnp.int32).reshape(-1)                     # flat 1-D SMEM tables

        def pts_map(i, k, kmap_ref, ov_ref):
            return (i, 0)

        def vc_map(i, k, kmap_ref, ov_ref):
            return (0, kmap_ref[i * n_v + k])

        def grid_map(i, k, kmap_ref, ov_ref):
            return (kmap_ref[i * n_v + k], 0)       # repeat previous block -> no DMA on skip

        def out_map(i, k, kmap_ref, ov_ref):
            return (i, 0)

        cost = pl.CostEstimate(flops=2 * P_pad * V_pad * C, transcendentals=0,
                               bytes_accessed=int(n_p) * V_pad * C * 2
                               + P_pad * 3 * 4 + P_pad * C * 4)
        out = pl.pallas_call(
            _make_voxel_kernel_multi(offset, scale, ratio, dims, tent_dtype, n_v),
            out_shape=jax.ShapeDtypeStruct((P_pad, C), jnp.float32),
            grid_spec=pltpu.PrefetchScalarGridSpec(
                num_scalar_prefetch=2,
                grid=(n_p, n_v),
                in_specs=[
                    pl.BlockSpec((tile, 3), pts_map),
                    pl.BlockSpec((3, v_tile), vc_map),
                    pl.BlockSpec((v_tile, C), grid_map),
                ],
                out_specs=pl.BlockSpec((tile, C), out_map),
                scratch_shapes=[pltpu.VMEM((tile, C), jnp.float32)],
            ),
            compiler_params=pltpu.CompilerParams(
                dimension_semantics=("parallel", "arbitrary")),
            cost_estimate=cost,
        )(kmap, ov_flat, pts, consts["vcoords"], consts["grid"])

    return out[:P].reshape(*lead_shape, C)


# --------------------------------------------------------------------------
# Pure-JAX references (silent sanity checks)
# --------------------------------------------------------------------------
def axis_angle_to_matrix_ref(aa):
    ang2 = (aa * aa).sum(-1, keepdims=True)
    angle = jnp.sqrt(ang2)
    half = 0.5 * angle
    small = angle < 1e-6
    safe = jnp.where(small, 1.0, angle)
    s = jnp.where(small, 0.5 - ang2 / 48.0, jnp.sin(half) / safe)
    q = aa * s
    qw = jnp.cos(half)[..., 0]
    qx, qy, qz = q[..., 0], q[..., 1], q[..., 2]
    two_s = 2.0 / (qw * qw + qx * qx + qy * qy + qz * qz)
    o = jnp.stack([
        1 - two_s * (qy * qy + qz * qz), two_s * (qx * qy - qz * qw), two_s * (qx * qz + qy * qw),
        two_s * (qx * qy + qz * qw), 1 - two_s * (qx * qx + qz * qz), two_s * (qy * qz - qx * qw),
        two_s * (qx * qz - qy * qw), two_s * (qy * qz + qx * qw), 1 - two_s * (qx * qx + qy * qy),
    ], axis=-1)
    return o.reshape(aa.shape[:-1] + (3, 3))


def pose_ref(theta, J_canonical, parents, A0_inv):
    B, N = theta.shape[0], theta.shape[1]
    R = axis_angle_to_matrix_ref(theta)                                  # (B,N,3,3)
    J = jnp.broadcast_to(J_canonical, (B, N, 3))[..., None]              # (B,N,3,1)
    rel = J.at[:, 1:].add(-J[:, parents[1:]])
    bottom = jnp.broadcast_to(jnp.array([0., 0., 0., 1.], jnp.float32), (B, N, 1, 4))
    T = jnp.concatenate([jnp.concatenate([R, rel], -1), bottom], -2)     # (B,N,4,4)

    def mm(a, b):   # exact-f32 small matmul (avoid MXU precision in the reference)
        return (a[..., :, :, None] * b[..., None, :, :]).sum(-2)

    chain = [T[:, 0]]
    for i in range(1, N):
        chain.append(mm(chain[parents[i]], T[:, i]))
    transforms = jnp.stack(chain, axis=1)                                # (B,N,4,4)
    Jh = jnp.concatenate([J, jnp.zeros((B, N, 1, 1), jnp.float32)], -2)[..., 0]
    corr = (transforms * Jh[..., None, :]).sum(-1)                       # (B,N,4)
    rel_tf = transforms.at[..., :, 3].add(-corr)
    return (rel_tf[..., :, :, None] * A0_inv[None, :, None, :, :]).sum(-2)


def voxel_ref(xyz, grid_flat, offset, scale, ratio, D, H, W):
    shape = xyz.shape
    pts = xyz.reshape(-1, 3).astype(jnp.float32)
    gx = (pts[:, 0] - offset[0]) / scale
    gy = (pts[:, 1] - offset[1]) / scale
    gz = (pts[:, 2] - offset[2]) / scale * ratio
    ix = jnp.clip((gx + 1.0) * 0.5 * (W - 1), 0.0, float(W - 1))
    iy = jnp.clip((gy + 1.0) * 0.5 * (H - 1), 0.0, float(H - 1))
    iz = jnp.clip((gz + 1.0) * 0.5 * (D - 1), 0.0, float(D - 1))
    x0f, y0f, z0f = jnp.floor(ix), jnp.floor(iy), jnp.floor(iz)
    fx, fy, fz = ix - x0f, iy - y0f, iz - z0f
    x0, y0, z0 = x0f.astype(jnp.int32), y0f.astype(jnp.int32), z0f.astype(jnp.int32)
    x1 = jnp.minimum(x0 + 1, W - 1)
    y1 = jnp.minimum(y0 + 1, H - 1)
    z1 = jnp.minimum(z0 + 1, D - 1)

    def corner(zi, yi, xi, w):
        flat = (zi * H + yi) * W + xi
        return w[:, None] * grid_flat[flat]

    out = (corner(z0, y0, x0, (1 - fz) * (1 - fy) * (1 - fx))
           + corner(z0, y0, x1, (1 - fz) * (1 - fy) * fx)
           + corner(z0, y1, x0, (1 - fz) * fy * (1 - fx))
           + corner(z0, y1, x1, (1 - fz) * fy * fx)
           + corner(z1, y0, x0, fz * (1 - fy) * (1 - fx))
           + corner(z1, y0, x1, fz * (1 - fy) * fx)
           + corner(z1, y1, x0, fz * fy * (1 - fx))
           + corner(z1, y1, x1, fz * fy * fx))
    return out.reshape(*shape[:-1], grid_flat.shape[-1])


# --------------------------------------------------------------------------
if __name__ == "__main__":
    key = jax.random.PRNGKey(0)
    k_theta, k_J, k_rot, k_t, k_vox, k_xyz, k_vtx = jax.random.split(key, 7)

    B, N_pts = 2, 200
    res = 16
    res_dhw = (res // 4, res, res)          # (D, H, W) = voxel_deformer_res // 4, res, res
    D, H, W = res_dhw

    # ---- synthetic deterministic "buffers" (stand-ins for SMPLLayer-derived state) ----
    # TODO(synk): real module computes J_canonical / A0_inv from SMPLLayer + torch.inverse
    # and the voxel LBS grid from KNN-splatted SMPL skinning weights at __init__ time.
    J_canonical = jax.random.normal(k_J, (1, NUM_JOINTS, 3), jnp.float32) * 0.3
    A0_rot = axis_angle_to_matrix_ref(jax.random.normal(k_rot, (NUM_JOINTS, 3), jnp.float32) * 0.5)
    A0_trn = jax.random.normal(k_t, (NUM_JOINTS, 3, 1), jnp.float32) * 0.3
    A0_bot = jnp.tile(jnp.array([[[0., 0., 0., 1.]]], jnp.float32), (NUM_JOINTS, 1, 1))
    A0_inv = jnp.concatenate([jnp.concatenate([A0_rot, A0_trn], -1), A0_bot], -2)   # (24,4,4)

    vox = jax.random.uniform(k_vox, (NUM_BONES, D, H, W), jnp.float32)
    vox = vox / vox.sum(0, keepdims=True)                 # LBS-like: channels sum to 1
    grid_flat = vox.reshape(NUM_BONES, -1).T              # (V, C), flat index (d*H+h)*W+w

    vtx = jax.random.normal(k_vtx, (512, 3), jnp.float32) * 0.4   # synthetic canonical verts
    bb_min, bb_max = vtx.min(0), vtx.max(0)
    offset = (bb_min + bb_max) * 0.5                       # VoxelDeformer offset buffer
    scale = float((bb_max - bb_min).max() / 2.0 * 1.2)     # global_scale = 1.2
    ratio = float(res_dhw[1]) / float(res_dhw[0])          # long/short resolution ratio

    # one-time module-init preprocessing (hoisted out of forward)
    consts = prepare_voxel_constants(grid_flat, res_dhw)                     # n_v == 1 path
    consts_tiled = prepare_voxel_constants(grid_flat, res_dhw, v_tile_max=256)  # n_v > 1 path

    # ---- forward inputs ----
    theta = jax.random.normal(k_theta, (B, NUM_JOINTS, 3), jnp.float32) * 0.3
    xyz_canonical = jax.random.normal(k_xyz, (B, N_pts, 3), jnp.float32) * 0.45

    # ---- Pallas forward: (W, A) = SMPLTemplate.forward(theta, xyz_canonical) ----
    A = pose_forward(theta, J_canonical, A0_inv)                             # (B, 24, 4, 4)
    W_lbs = voxel_deformer_forward(xyz_canonical, consts, offset, scale, ratio)
    W_lbs_tiled = voxel_deformer_forward(xyz_canonical, consts_tiled, offset, scale, ratio)
    jax.block_until_ready((A, W_lbs, W_lbs_tiled))

    # ---- silent sanity checks vs pure-JAX references ----
    A_ref = pose_ref(theta, J_canonical, np.asarray(PARENTS), A0_inv)
    W_ref = voxel_ref(xyz_canonical, grid_flat, offset, scale, ratio, D, H, W)
    assert A.shape == (B, NUM_JOINTS, 4, 4) and W_lbs.shape == (B, N_pts, NUM_BONES)
    assert jnp.allclose(A, A_ref, rtol=1e-3, atol=5e-4), "pose branch mismatch"
    w_tol = 3e-2 if _tent_dtype() == jnp.bfloat16 else 2e-2
    assert jnp.allclose(W_lbs, W_ref, rtol=w_tol, atol=w_tol), "voxel deformer mismatch"
    assert jnp.allclose(W_lbs_tiled, W_ref, rtol=w_tol, atol=w_tol), "tiled voxel deformer mismatch"

    print("KERNEL_OK")
</pallas_src>

<mosaic_0001>
module attributes {stable_mosaic.version = 11 : i64} {
  func.func @kernel(%arg0: i32, %arg1: memref<3x8x128xf32, #tpu.memory_space<vmem>>, %arg2: memref<3x128xf32, #tpu.memory_space<vmem>>, %arg3: memref<3x128xf32, #tpu.memory_space<vmem>>, %arg4: memref<16x128xf32, #tpu.memory_space<vmem>>, %arg5: memref<128x128xf32, #tpu.memory_space<vmem>>, %arg6: memref<1x128xf32, #tpu.memory_space<vmem>>, %arg7: memref<16x8x128xf32, #tpu.memory_space<vmem>>) attributes {dimension_semantics = [#tpu.dimension_semantics<arbitrary>], iteration_bounds = array<i64: 1>, scalar_prefetch = 0 : i64, scratch_operands = 0 : i64, tpu.core_type = #tpu.core_type<tc>, window_params = [{pipeline_mode = #tpu.pipeline_mode<synchronous>, transform_indices = @transform_0, window_bounds = array<i64: 3, 8, 128>}, {pipeline_mode = #tpu.pipeline_mode<synchronous>, transform_indices = @transform_1, window_bounds = array<i64: 3, 128>}, {pipeline_mode = #tpu.pipeline_mode<synchronous>, transform_indices = @transform_2, window_bounds = array<i64: 3, 128>}, {pipeline_mode = #tpu.pipeline_mode<synchronous>, transform_indices = @transform_3, window_bounds = array<i64: 16, 128>}, {pipeline_mode = #tpu.pipeline_mode<synchronous>, transform_indices = @transform_4, window_bounds = array<i64: 128, 128>}, {pipeline_mode = #tpu.pipeline_mode<synchronous>, transform_indices = @transform_5, window_bounds = array<i64: 1, 128>}, {pipeline_mode = #tpu.pipeline_mode<synchronous>, transform_indices = @transform_6, window_bounds = array<i64: 16, 8, 128>}]} {
    %c0 = arith.constant 0 : index
    %c0_0 = arith.constant 0 : index
    %c0_1 = arith.constant 0 : index
    %0 = vector.load %arg1[%c0, %c0_0, %c0_1] : memref<3x8x128xf32, #tpu.memory_space<vmem>>, vector<1x8x128xf32>
    %1 = vector.shape_cast %0 : vector<1x8x128xf32> to vector<8x128xf32>
    %c1 = arith.constant 1 : index
    %c0_2 = arith.constant 0 : index
    %c0_3 = arith.constant 0 : index
    %2 = vector.load %arg1[%c1, %c0_2, %c0_3] : memref<3x8x128xf32, #tpu.memory_space<vmem>>, vector<1x8x128xf32>
    %3 = vector.shape_cast %2 : vector<1x8x128xf32> to vector<8x128xf32>
    %c2 = arith.constant 2 : index
    %c0_4 = arith.constant 0 : index
    %c0_5 = arith.constant 0 : index
    %4 = vector.load %arg1[%c2, %c0_4, %c0_5] : memref<3x8x128xf32, #tpu.memory_space<vmem>>, vector<1x8x128xf32>
    %5 = vector.shape_cast %4 : vector<1x8x128xf32> to vector<8x128xf32>
    %6 = arith.mulf %1, %1 : vector<8x128xf32>
    %7 = arith.mulf %3, %3 : vector<8x128xf32>
    %8 = arith.addf %6, %7 : vector<8x128xf32>
    %9 = arith.mulf %5, %5 : vector<8x128xf32>
    %10 = arith.addf %8, %9 : vector<8x128xf32>
    %11 = math.sqrt %10 : vector<8x128xf32>
    %cst = arith.constant 5.000000e-01 : f32
    %12 = vector.broadcast %cst : f32 to vector<8x128xf32>
    %13 = arith.mulf %12, %11 : vector<8x128xf32>
    %cst_6 = arith.constant 9.99999997E-7 : f32
    %14 = vector.broadcast %cst_6 : f32 to vector<8x128xf32>
    %15 = arith.cmpf olt, %11, %14 : vector<8x128xf32>
    %cst_7 = arith.constant 1.000000e+00 : f32
    %16 = vector.broadcast %cst_7 : f32 to vector<8x128xf32>
    %17 = arith.select %15, %16, %11 : vector<8x128xi1>, vector<8x128xf32>
    %cst_8 = arith.constant 4.800000e+01 : f32
    %18 = vector.broadcast %cst_8 : f32 to vector<8x128xf32>
    %19 = arith.divf %10, %18 : vector<8x128xf32>
    %cst_9 = arith.constant 5.000000e-01 : f32
    %20 = vector.broadcast %cst_9 : f32 to vector<8x128xf32>
    %21 = arith.subf %20, %19 : vector<8x128xf32>
    %22 = math.sin %13 : vector<8x128xf32>
    %23 = arith.divf %22, %17 : vector<8x128xf32>
    %24 = arith.select %15, %21, %23 : vector<8x128xi1>, vector<8x128xf32>
    %25 = math.cos %13 : vector<8x128xf32>
    %26 = arith.mulf %1, %24 : vector<8x128xf32>
    %27 = arith.mulf %3, %24 : vector<8x128xf32>
    %28 = arith.mulf %5, %24 : vector<8x128xf32>
    %29 = arith.mulf %25, %25 : vector<8x128xf32>
    %30 = arith.mulf %26, %26 : vector<8x128xf32>
    %31 = arith.addf %29, %30 : vector<8x128xf32>
    %32 = arith.mulf %27, %27 : vector<8x128xf32>
    %33 = arith.addf %31, %32 : vector<8x128xf32>
    %34 = arith.mulf %28, %28 : vector<8x128xf32>
    %35 = arith.addf %33, %34 : vector<8x128xf32>
    %cst_10 = arith.constant 2.000000e+00 : f32
    %36 = vector.broadcast %cst_10 : f32 to vector<8x128xf32>
    %37 = arith.divf %36, %35 : vector<8x128xf32>
    %38 = arith.mulf %27, %27 : vector<8x128xf32>
    %39 = arith.mulf %28, %28 : vector<8x128xf32>
    %40 = arith.addf %38, %39 : vector<8x128xf32>
    %41 = arith.mulf %37, %40 : vector<8x128xf32>
    %cst_11 = arith.constant 1.000000e+00 : f32
    %42 = vector.broadcast %cst_11 : f32 to vector<8x128xf32>
    %43 = arith.subf %42, %41 : vector<8x128xf32>
    %44 = arith.mulf %26, %27 : vector<8x128xf32>
    %45 = arith.mulf %28, %25 : vector<8x128xf32>
    %46 = arith.subf %44, %45 : vector<8x128xf32>
    %47 = arith.mulf %37, %46 : vector<8x128xf32>
    %48 = arith.mulf %26, %28 : vector<8x128xf32>
    %49 = arith.mulf %27, %25 : vector<8x128xf32>
    %50 = arith.addf %48, %49 : vector<8x128xf32>
    %51 = arith.mulf %37, %50 : vector<8x128xf32>
    %52 = arith.mulf %26, %27 : vector<8x128xf32>
    %53 = arith.mulf %28, %25 : vector<8x128xf32>
    %54 = arith.addf %52, %53 : vector<8x128xf32>
    %55 = arith.mulf %37, %54 : vector<8x128xf32>
    %56 = arith.mulf %26, %26 : vector<8x128xf32>
    %57 = arith.mulf %28, %28 : vector<8x128xf32>
    %58 = arith.addf %56, %57 : vector<8x128xf32>
    %59 = arith.mulf %37, %58 : vector<8x128xf32>
    %cst_12 = arith.constant 1.000000e+00 : f32
    %60 = vector.broadcast %cst_12 : f32 to vector<8x128xf32>
    %61 = arith.subf %60, %59 : vector<8x128xf32>
    %62 = arith.mulf %27, %28 : vector<8x128xf32>
    %63 = arith.mulf %26, %25 : vector<8x128xf32>
    %64 = arith.subf %62, %63 : vector<8x128xf32>
    %65 = arith.mulf %37, %64 : vector<8x128xf32>
    %66 = arith.mulf %26, %28 : vector<8x128xf32>
    %67 = arith.mulf %27, %25 : vector<8x128xf32>
    %68 = arith.subf %66, %67 : vector<8x128xf32>
    %69 = arith.mulf %37, %68 : vector<8x128xf32>
    %70 = arith.mulf %27, %28 : vector<8x128xf32>
    %71 = arith.mulf %26, %25 : vector<8x128xf32>
    %72 = arith.addf %70, %71 : vector<8x128xf32>
    %73 = arith.mulf %37, %72 : vector<8x128xf32>
    %74 = arith.mulf %26, %26 : vector<8x128xf32>
    %75 = arith.mulf %27, %27 : vector<8x128xf32>
    %76 = arith.addf %74, %75 : vector<8x128xf32>
    %77 = arith.mulf %37, %76 : vector<8x128xf32>
    %cst_13 = arith.constant 1.000000e+00 : f32
    %78 = vector.broadcast %cst_13 : f32 to vector<8x128xf32>
    %79 = arith.subf %78, %77 : vector<8x128xf32>
    %c0_14 = arith.constant 0 : index
    %c0_15 = arith.constant 0 : index
    %80 = vector.load %arg2[%c0_14, %c0_15] : memref<3x128xf32, #tpu.memory_space<vmem>>, vector<1x128xf32>
    %c1_16 = arith.constant 1 : index
    %c0_17 = arith.constant 0 : index
    %81 = vector.load %arg2[%c1_16, %c0_17] : memref<3x128xf32, #tpu.memory_space<vmem>>, vector<1x128xf32>
    %c2_18 = arith.constant 2 : index
    %c0_19 = arith.constant 0 : index
    %82 = vector.load %arg2[%c2_18, %c0_19] : memref<3x128xf32, #tpu.memory_space<vmem>>, vector<1x128xf32>
    %c0_20 = arith.constant 0 : index
    %c0_21 = arith.constant 0 : index
    %83 = vector.load %arg5[%c0_20, %c0_21] : memref<128x128xf32, #tpu.memory_space<vmem>>, vector<128x128xf32>
    %c0_22 = arith.constant 0 : index
    %c0_23 = arith.constant 0 : index
    %84 = vector.load %arg6[%c0_22, %c0_23] : memref<1x128xf32, #tpu.memory_space<vmem>>, vector<1x128xf32>
    %85 = vector.shape_cast %80 : vector<1x128xf32> to vector<1x128xf32>
    %86 = vector.broadcast %85 : vector<1x128xf32> to vector<8x128xf32>
    %87 = vector.shape_cast %81 : vector<1x128xf32> to vector<1x128xf32>
    %88 = vector.broadcast %87 : vector<1x128xf32> to vector<8x128xf32>
    %89 = vector.shape_cast %82 : vector<1x128xf32> to vector<1x128xf32>
    %90 = vector.broadcast %89 : vector<1x128xf32> to vector<8x128xf32>
    %cst_24 = arith.constant 1.000000e+00 : f32
    %91 = vector.broadcast %cst_24 : f32 to vector<1x128xf32>
    %92 = arith.cmpf oeq, %84, %91 : vector<1x128xf32>
    %93 = tpu.concatenate %43, %47, %51, %55, %61, %65, %69, %73, %79, %86, %88, %90 in 0 : vector<8x128xf32>, vector<8x128xf32>, vector<8x128xf32>, vector<8x128xf32>, vector<8x128xf32>, vector<8x128xf32>, vector<8x128xf32>, vector<8x128xf32>, vector<8x128xf32>, vector<8x128xf32>, vector<8x128xf32>, vector<8x128xf32> -> vector<96x128xf32>
    %cst_25 = arith.constant dense<0.000000e+00> : vector<96x128xf32>
    %94 = tpu.matmul %93, %83, %cst_25 {dimension_numbers = #tpu.dot_dimension_numbers<[1], [0], [0], [1], [0, 0, 1, 1], [], []>} : vector<96x128xf32>, vector<128x128xf32>, vector<96x128xf32> -> vector<96x128xf32>
    %95 = vector.extract_strided_slice %94 {offsets = [0, 0], sizes = [8, 128], strides = [1, 1]} : vector<96x128xf32> to vector<8x128xf32>
    %96 = vector.extract_strided_slice %94 {offsets = [8, 0], sizes = [8, 128], strides = [1, 1]} : vector<96x128xf32> to vector<8x128xf32>
    %97 = vector.extract_strided_slice %94 {offsets = [16, 0], sizes = [8, 128], strides = [1, 1]} : vector<96x128xf32> to vector<8x128xf32>
    %98 = vector.extract_strided_slice %94 {offsets = [24, 0], sizes = [8, 128], strides = [1, 1]} : vector<96x128xf32> to vector<8x128xf32>
    %99 = vector.extract_strided_slice %94 {offsets = [32, 0], sizes = [8, 128], strides = [1, 1]} : vector<96x128xf32> to vector<8x128xf32>
    %100 = vector.extract_strided_slice %94 {offsets = [40, 0], sizes = [8, 128], strides = [1, 1]} : vector<96x128xf32> to vector<8x128xf32>
    %101 = vector.extract_strided_slice %94 {offsets = [48, 0], sizes = [8, 128], strides = [1, 1]} : vector<96x128xf32> to vector<8x128xf32>
    %102 = vector.extract_strided_slice %94 {offsets = [56, 0], sizes = [8, 128], strides = [1, 1]} : vector<96x128xf32> to vector<8x128xf32>
    %103 = vector.extract_strided_slice %94 {offsets = [64, 0], sizes = [8, 128], strides = [1, 1]} : vector<96x128xf32> to vector<8x128xf32>
    %104 = vector.extract_strided_slice %94 {offsets = [72, 0], sizes = [8, 128], strides = [1, 1]} : vector<96x128xf32> to vector<8x128xf32>
    %105 = vector.extract_strided_slice %94 {offsets = [80, 0], sizes = [8, 128], strides = [1, 1]} : vector<96x128xf32> to vector<8x128xf32>
    %106 = vector.extract_strided_slice %94 {offsets = [88, 0], sizes = [8, 128], strides = [1, 1]} : vector<96x128xf32> to vector<8x128xf32>
    %107 = arith.mulf %95, %43 : vector<8x128xf32>
    %108 = arith.mulf %96, %55 : vector<8x128xf32>
    %109 = arith.addf %107, %108 : vector<8x128xf32>
    %110 = arith.mulf %97, %69 : vector<8x128xf32>
    %111 = arith.addf %109, %110 : vector<8x128xf32>
    %112 = arith.mulf %95, %47 : vector<8x128xf32>
    %113 = arith.mulf %96, %61 : vector<8x128xf32>
    %114 = arith.addf %112, %113 : vector<8x128xf32>
    %115 = arith.mulf %97, %73 : vector<8x128xf32>
    %116 = arith.addf %114, %115 : vector<8x128xf32>
    %117 = arith.mulf %95, %51 : vector<8x128xf32>
    %118 = arith.mulf %96, %65 : vector<8x128xf32>
    %119 = arith.addf %117, %118 : vector<8x128xf32>
    %120 = arith.mulf %97, %79 : vector<8x128xf32>
    %121 = arith.addf %119, %120 : vector<8x128xf32>
    %122 = arith.mulf %98, %43 : vector<8x128xf32>
    %123 = arith.mulf %99, %55 : vector<8x128xf32>
    %124 = arith.addf %122, %123 : vector<8x128xf32>
    %125 = arith.mulf %100, %69 : vector<8x128xf32>
    %126 = arith.addf %124, %125 : vector<8x128xf32>
    %127 = arith.mulf %98, %47 : vector<8x128xf32>
    %128 = arith.mulf %99, %61 : vector<8x128xf32>
    %129 = arith.addf %127, %128 : vector<8x128xf32>
    %130 = arith.mulf %100, %73 : vector<8x128xf32>
    %131 = arith.addf %129, %130 : vector<8x128xf32>
    %132 = arith.mulf %98, %51 : vector<8x128xf32>
    %133 = arith.mulf %99, %65 : vector<8x128xf32>
    %134 = arith.addf %132, %133 : vector<8x128xf32>
    %135 = arith.mulf %100, %79 : vector<8x128xf32>
    %136 = arith.addf %134, %135 : vector<8x128xf32>
    %137 = arith.mulf %101, %43 : vector<8x128xf32>
    %138 = arith.mulf %102, %55 : vector<8x128xf32>
    %139 = arith.addf %137, %138 : vector<8x128xf32>
    %140 = arith.mulf %103, %69 : vector<8x128xf32>
    %141 = arith.addf %139, %140 : vector<8x128xf32>
    %142 = arith.mulf %101, %47 : vector<8x128xf32>
    %143 = arith.mulf %102, %61 : vector<8x128xf32>
    %144 = arith.addf %142, %143 : vector<8x128xf32>
    %145 = arith.mulf %103, %73 : vector<8x128xf32>
    %146 = arith.addf %144, %145 : vector<8x128xf32>
    %147 = arith.mulf %101, %51 : vector<8x128xf32>
    %148 = arith.mulf %102, %65 : vector<8x128xf32>
    %149 = arith.addf %147, %148 : vector<8x128xf32>
    %150 = arith.mulf %103, %79 : vector<8x128xf32>
    %151 = arith.addf %149, %150 : vector<8x128xf32>
    %152 = vector.broadcast %80 : vector<1x128xf32> to vector<8x128xf32>
    %153 = arith.mulf %95, %152 : vector<8x128xf32>
    %154 = vector.broadcast %81 : vector<1x128xf32> to vector<8x128xf32>
    %155 = arith.mulf %96, %154 : vector<8x128xf32>
    %156 = arith.addf %153, %155 : vector<8x128xf32>
    %157 = vector.broadcast %82 : vector<1x128xf32> to vector<8x128xf32>
    %158 = arith.mulf %97, %157 : vector<8x128xf32>
    %159 = arith.addf %156, %158 : vector<8x128xf32>
    %160 = arith.addf %159, %104 : vector<8x128xf32>
    %161 = vector.broadcast %80 : vector<1x128xf32> to vector<8x128xf32>
    %162 = arith.mulf %98, %161 : vector<8x128xf32>
    %163 = vector.broadcast %81 : vector<1x128xf32> to vector<8x128xf32>
    %164 = arith.mulf %99, %163 : vector<8x128xf32>
    %165 = arith.addf %162, %164 : vector<8x128xf32>
    %166 = vector.broadcast %82 : vector<1x128xf32> to vector<8x128xf32>
    %167 = arith.mulf %100, %166 : vector<8x128xf32>
    %168 = arith.addf %165, %167 : vector<8x128xf32>
    %169 = arith.addf %168, %105 : vector<8x128xf32>
    %170 = vector.broadcast %80 : vector<1x128xf32> to vector<8x128xf32>
    %171 = arith.mulf %101, %170 : vector<8x128xf32>
    %172 = vector.broadcast %81 : vector<1x128xf32> to vector<8x128xf32>
    %173 = arith.mulf %102, %172 : vector<8x128xf32>
    %174 = arith.addf %171, %173 : vector<8x128xf32>
    %175 = vector.broadcast %82 : vector<1x128xf32> to vector<8x128xf32>
    %176 = arith.mulf %103, %175 : vector<8x128xf32>
    %177 = arith.addf %174, %176 : vector<8x128xf32>
    %178 = arith.addf %177, %106 : vector<8x128xf32>
    %179 = vector.shape_cast %92 : vector<1x128xi1> to vector<1x128xi1>
    %180 = vector.broadcast %179 : vector<1x128xi1> to vector<8x128xi1>
    %181 = arith.select %180, %111, %43 : vector<8x128xi1>, vector<8x128xf32>
    %182 = vector.shape_cast %92 : vector<1x128xi1> to vector<1x128xi1>
    %183 = vector.broadcast %182 : vector<1x128xi1> to vector<8x128xi1>
    %184 = arith.select %183, %116, %47 : vector<8x128xi1>, vector<8x128xf32>
    %185 = vector.shape_cast %92 : vector<1x128xi1> to vector<1x128xi1>
    %186 = vector.broadcast %185 : vector<1x128xi1> to vector<8x128xi1>
    %187 = arith.select %186, %121, %51 : vector<8x128xi1>, vector<8x128xf32>
    %188 = vector.shape_cast %92 : vector<1x128xi1> to vector<1x128xi1>
    %189 = vector.broadcast %188 : vector<1x128xi1> to vector<8x128xi1>
    %190 = arith.select %189, %126, %55 : vector<8x128xi1>, vector<8x128xf32>
    %191 = vector.shape_cast %92 : vector<1x128xi1> to vector<1x128xi1>
    %192 = vector.broadcast %191 : vector<1x128xi1> to vector<8x128xi1>
    %193 = arith.select %192, %131, %61 : vector<8x128xi1>, vector<8x128xf32>
    %194 = vector.shape_cast %92 : vector<1x128xi1> to vector<1x128xi1>
    %195 = vector.broadcast %194 : vector<1x128xi1> to vector<8x128xi1>
    %196 = arith.select %195, %136, %65 : vector<8x128xi1>, vector<8x128xf32>
    %197 = vector.shape_cast %92 : vector<1x128xi1> to vector<1x128xi1>
    %198 = vector.broadcast %197 : vector<1x128xi1> to vector<8x128xi1>
    %199 = arith.select %198, %141, %69 : vector<8x128xi1>, vector<8x128xf32>
    %200 = vector.shape_cast %92 : vector<1x128xi1> to vector<1x128xi1>
    %201 = vector.broadcast %200 : vector<1x128xi1> to vector<8x128xi1>
    %202 = arith.select %201, %146, %73 : vector<8x128xi1>, vector<8x128xf32>
    %203 = vector.shape_cast %92 : vector<1x128xi1> to vector<1x128xi1>
    %204 = vector.broadcast %203 : vector<1x128xi1> to vector<8x128xi1>
    %205 = arith.select %204, %151, %79 : vector<8x128xi1>, vector<8x128xf32>
    %206 = vector.shape_cast %92 : vector<1x128xi1> to vector<1x128xi1>
    %207 = vector.broadcast %206 : vector<1x128xi1> to vector<8x128xi1>
    %208 = arith.select %207, %160, %86 : vector<8x128xi1>, vector<8x128xf32>
    %209 = vector.shape_cast %92 : vector<1x128xi1> to vector<1x128xi1>
    %210 = vector.broadcast %209 : vector<1x128xi1> to vector<8x128xi1>
    %211 = arith.select %210, %169, %88 : vector<8x128xi1>, vector<8x128xf32>
    %212 = vector.shape_cast %92 : vector<1x128xi1> to vector<1x128xi1>
    %213 = vector.broadcast %212 : vector<1x128xi1> to vector<8x128xi1>
    %214 = arith.select %213, %178, %90 : vector<8x128xi1>, vector<8x128xf32>
    %cst_26 = arith.constant 2.000000e+00 : f32
    %215 = vector.broadcast %cst_26 : f32 to vector<1x128xf32>
    %216 = arith.cmpf oeq, %84, %215 : vector<1x128xf32>
    %217 = tpu.concatenate %181, %184, %187, %190, %193, %196, %199, %202, %205, %208, %211, %214 in 0 : vector<8x128xf32>, vector<8x128xf32>, vector<8x128xf32>, vector<8x128xf32>, vector<8x128xf32>, vector<8x128xf32>, vector<8x128xf32>, vector<8x128xf32>, vector<8x128xf32>, vector<8x128xf32>, vector<8x128xf32>, vector<8x128xf32> -> vector<96x128xf32>
    %cst_27 = arith.constant dense<0.000000e+00> : vector<96x128xf32>
    %218 = tpu.matmul %217, %83, %cst_27 {dimension_numbers = #tpu.dot_dimension_numbers<[1], [0], [0], [1], [0, 0, 1, 1], [], []>} : vector<96x128xf32>, vector<128x128xf32>, vector<96x128xf32> -> vector<96x128xf32>
    %219 = vector.extract_strided_slice %218 {offsets = [0, 0], sizes = [8, 128], strides = [1, 1]} : vector<96x128xf32> to vector<8x128xf32>
    %220 = vector.extract_strided_slice %218 {offsets = [8, 0], sizes = [8, 128], strides = [1, 1]} : vector<96x128xf32> to vector<8x128xf32>
    %221 = vector.extract_strided_slice %218 {offsets = [16, 0], sizes = [8, 128], strides = [1, 1]} : vector<96x128xf32> to vector<8x128xf32>
    %222 = vector.extract_strided_slice %218 {offsets = [24, 0], sizes = [8, 128], strides = [1, 1]} : vector<96x128xf32> to vector<8x128xf32>
    %223 = vector.extract_strided_slice %218 {offsets = [32, 0], sizes = [8, 128], strides = [1, 1]} : vector<96x128xf32> to vector<8x128xf32>
    %224 = vector.extract_strided_slice %218 {offsets = [40, 0], sizes = [8, 128], strides = [1, 1]} : vector<96x128xf32> to vector<8x128xf32>
    %225 = vector.extract_strided_slice %218 {offsets = [48, 0], sizes = [8, 128], strides = [1, 1]} : vector<96x128xf32> to vector<8x128xf32>
    %226 = vector.extract_strided_slice %218 {offsets = [56, 0], sizes = [8, 128], strides = [1, 1]} : vector<96x128xf32> to vector<8x128xf32>
    %227 = vector.extract_strided_slice %218 {offsets = [64, 0], sizes = [8, 128], strides = [1, 1]} : vector<96x128xf32> to vector<8x128xf32>
    %228 = vector.extract_strided_slice %218 {offsets = [72, 0], sizes = [8, 128], strides = [1, 1]} : vector<96x128xf32> to vector<8x128xf32>
    %229 = vector.extract_strided_slice %218 {offsets = [80, 0], sizes = [8, 128], strides = [1, 1]} : vector<96x128xf32> to vector<8x128xf32>
    %230 = vector.extract_strided_slice %218 {offsets = [88, 0], sizes = [8, 128], strides = [1, 1]} : vector<96x128xf32> to vector<8x128xf32>
    %231 = arith.mulf %219, %43 : vector<8x128xf32>
    %232 = arith.mulf %220, %55 : vector<8x128xf32>
    %233 = arith.addf %231, %232 : vector<8x128xf32>
    %234 = arith.mulf %221, %69 : vector<8x128xf32>
    %235 = arith.addf %233, %234 : vector<8x128xf32>
    %236 = arith.mulf %219, %47 : vector<8x128xf32>
    %237 = arith.mulf %220, %61 : vector<8x128xf32>
    %238 = arith.addf %236, %237 : vector<8x128xf32>
    %239 = arith.mulf %221, %73 : vector<8x128xf32>
    %240 = arith.addf %238, %239 : vector<8x128xf32>
    %241 = arith.mulf %219, %51 : vector<8x128xf32>
    %242 = arith.mulf %220, %65 : vector<8x128xf32>
    %243 = arith.addf %241, %242 : vector<8x128xf32>
    %244 = arith.mulf %221, %79 : vector<8x128xf32>
    %245 = arith.addf %243, %244 : vector<8x128xf32>
    %246 = arith.mulf %222, %43 : vector<8x128xf32>
    %247 = arith.mulf %223, %55 : vector<8x128xf32>
    %248 = arith.addf %246, %247 : vector<8x128xf32>
    %249 = arith.mulf %224, %69 : vector<8x128xf32>
    %250 = arith.addf %248, %249 : vector<8x128xf32>
    %251 = arith.mulf %222, %47 : vector<8x128xf32>
    %252 = arith.mulf %223, %61 : vector<8x128xf32>
    %253 = arith.addf %251, %252 : vector<8x128xf32>
    %254 = arith.mulf %224, %73 : vector<8x128xf32>
    %255 = arith.addf %253, %254 : vector<8x128xf32>
    %256 = arith.mulf %222, %51 : vector<8x128xf32>
    %257 = arith.mulf %223, %65 : vector<8x128xf32>
    %258 = arith.addf %256, %257 : vector<8x128xf32>
    %259 = arith.mulf %224, %79 : vector<8x128xf32>
    %260 = arith.addf %258, %259 : vector<8x128xf32>
    %261 = arith.mulf %225, %43 : vector<8x128xf32>
    %262 = arith.mulf %226, %55 : vector<8x128xf32>
    %263 = arith.addf %261, %262 : vector<8x128xf32>
    %264 = arith.mulf %227, %69 : vector<8x128xf32>
    %265 = arith.addf %263, %264 : vector<8x128xf32>
    %266 = arith.mulf %225, %47 : vector<8x128xf32>
    %267 = arith.mulf %226, %61 : vector<8x128xf32>
    %268 = arith.addf %266, %267 : vector<8x128xf32>
    %269 = arith.mulf %227, %73 : vector<8x128xf32>
    %270 = arith.addf %268, %269 : vector<8x128xf32>
    %271 = arith.mulf %225, %51 : vector<8x128xf32>
    %272 = arith.mulf %226, %65 : vector<8x128xf32>
    %273 = arith.addf %271, %272 : vector<8x128xf32>
    %274 = arith.mulf %227, %79 : vector<8x128xf32>
    %275 = arith.addf %273, %274 : vector<8x128xf32>
    %276 = vector.broadcast %80 : vector<1x128xf32> to vector<8x128xf32>
    %277 = arith.mulf %219, %276 : vector<8x128xf32>
    %278 = vector.broadcast %81 : vector<1x128xf32> to vector<8x128xf32>
    %279 = arith.mulf %220, %278 : vector<8x128xf32>
    %280 = arith.addf %277, %279 : vector<8x128xf32>
    %281 = vector.broadcast %82 : vector<1x128xf32> to vector<8x128xf32>
    %282 = arith.mulf %221, %281 : vector<8x128xf32>
    %283 = arith.addf %280, %282 : vector<8x128xf32>
    %284 = arith.addf %283, %228 : vector<8x128xf32>
    %285 = vector.broadcast %80 : vector<1x128xf32> to vector<8x128xf32>
    %286 = arith.mulf %222, %285 : vector<8x128xf32>
    %287 = vector.broadcast %81 : vector<1x128xf32> to vector<8x128xf32>
    %288 = arith.mulf %223, %287 : vector<8x128xf32>
    %289 = arith.addf %286, %288 : vector<8x128xf32>
    %290 = vector.broadcast %82 : vector<1x128xf32> to vector<8x128xf32>
    %291 = arith.mulf %224, %290 : vector<8x128xf32>
    %292 = arith.addf %289, %291 : vector<8x128xf32>
    %293 = arith.addf %292, %229 : vector<8x128xf32>
    %294 = vector.broadcast %80 : vector<1x128xf32> to vector<8x128xf32>
    %295 = arith.mulf %225, %294 : vector<8x128xf32>
    %296 = vector.broadcast %81 : vector<1x128xf32> to vector<8x128xf32>
    %297 = arith.mulf %226, %296 : vector<8x128xf32>
    %298 = arith.addf %295, %297 : vector<8x128xf32>
    %299 = vector.broadcast %82 : vector<1x128xf32> to vector<8x128xf32>
    %300 = arith.mulf %227, %299 : vector<8x128xf32>
    %301 = arith.addf %298, %300 : vector<8x128xf32>
    %302 = arith.addf %301, %230 : vector<8x128xf32>
    %303 = vector.shape_cast %216 : vector<1x128xi1> to vector<1x128xi1>
    %304 = vector.broadcast %303 : vector<1x128xi1> to vector<8x128xi1>
    %305 = arith.select %304, %235, %181 : vector<8x128xi1>, vector<8x128xf32>
    %306 = vector.shape_cast %216 : vector<1x128xi1> to vector<1x128xi1>
    %307 = vector.broadcast %306 : vector<1x128xi1> to vector<8x128xi1>
    %308 = arith.select %307, %240, %184 : vector<8x128xi1>, vector<8x128xf32>
    %309 = vector.shape_cast %216 : vector<1x128xi1> to vector<1x128xi1>
    %310 = vector.broadcast %309 : vector<1x128xi1> to vector<8x128xi1>
    %311 = arith.select %310, %245, %187 : vector<8x128xi1>, vector<8x128xf32>
    %312 = vector.shape_cast %216 : vector<1x128xi1> to vector<1x128xi1>
    %313 = vector.broadcast %312 : vector<1x128xi1> to vector<8x128xi1>
    %314 = arith.select %313, %250, %190 : vector<8x128xi1>, vector<8x128xf32>
    %315 = vector.shape_cast %216 : vector<1x128xi1> to vector<1x128xi1>
    %316 = vector.broadcast %315 : vector<1x128xi1> to vector<8x128xi1>
    %317 = arith.select %316, %255, %193 : vector<8x128xi1>, vector<8x128xf32>
    %318 = vector.shape_cast %216 : vector<1x128xi1> to vector<1x128xi1>
    %319 = vector.broadcast %318 : vector<1x128xi1> to vector<8x128xi1>
    %320 = arith.select %319, %260, %196 : vector<8x128xi1>, vector<8x128xf32>
    %321 = vector.shape_cast %216 : vector<1x128xi1> to vector<1x128xi1>
    %322 = vector.broadcast %321 : vector<1x128xi1> to vector<8x128xi1>
    %323 = arith.select %322, %265, %199 : vector<8x128xi1>, vector<8x128xf32>
    %324 = vector.shape_cast %216 : vector<1x128xi1> to vector<1x128xi1>
    %325 = vector.broadcast %324 : vector<1x128xi1> to vector<8x128xi1>
    %326 = arith.select %325, %270, %202 : vector<8x128xi1>, vector<8x128xf32>
    %327 = vector.shape_cast %216 : vector<1x128xi1> to vector<1x128xi1>
    %328 = vector.broadcast %327 : vector<1x128xi1> to vector<8x128xi1>
    %329 = arith.select %328, %275, %205 : vector<8x128xi1>, vector<8x128xf32>
    %330 = vector.shape_cast %216 : vector<1x128xi1> to vector<1x128xi1>
    %331 = vector.broadcast %330 : vector<1x128xi1> to vector<8x128xi1>
    %332 = arith.select %331, %284, %208 : vector<8x128xi1>, vector<8x128xf32>
    %333 = vector.shape_cast %216 : vector<1x128xi1> to vector<1x128xi1>
    %334 = vector.broadcast %333 : vector<1x128xi1> to vector<8x128xi1>
    %335 = arith.select %334, %293, %211 : vector<8x128xi1>, vector<8x128xf32>
    %336 = vector.shape_cast %216 : vector<1x128xi1> to vector<1x128xi1>
    %337 = vector.broadcast %336 : vector<1x128xi1> to vector<8x128xi1>
    %338 = arith.select %337, %302, %214 : vector<8x128xi1>, vector<8x128xf32>
    %cst_28 = arith.constant 3.000000e+00 : f32
    %339 = vector.broadcast %cst_28 : f32 to vector<1x128xf32>
    %340 = arith.cmpf oeq, %84, %339 : vector<1x128xf32>
    %341 = tpu.concatenate %305, %308, %311, %314, %317, %320, %323, %326, %329, %332, %335, %338 in 0 : vector<8x128xf32>, vector<8x128xf32>, vector<8x128xf32>, vector<8x128xf32>, vector<8x128xf32>, vector<8x128xf32>, vector<8x128xf32>, vector<8x128xf32>, vector<8x128xf32>, vector<8x128xf32>, vector<8x128xf32>, vector<8x128xf32> -> vector<96x128xf32>
    %cst_29 = arith.constant dense<0.000000e+00> : vector<96x128xf32>
    %342 = tpu.matmul %341, %83, %cst_29 {dimension_numbers = #tpu.dot_dimension_numbers<[1], [0], [0], [1], [0, 0, 1, 1], [], []>} : vector<96x128xf32>, vector<128x128xf32>, vector<96x128xf32> -> vector<96x128xf32>
    %343 = vector.extract_strided_slice %342 {offsets = [0, 0], sizes = [8, 128], strides = [1, 1]} : vector<96x128xf32> to vector<8x128xf32>
    %344 = vector.extract_strided_slice %342 {offsets = [8, 0], sizes = [8, 128], strides = [1, 1]} : vector<96x128xf32> to vector<8x128xf32>
    %345 = vector.extract_strided_slice %342 {offsets = [16, 0], sizes = [8, 128], strides = [1, 1]} : vector<96x128xf32> to vector<8x128xf32>
    %346 = vector.extract_strided_slice %342 {offsets = [24, 0], sizes = [8, 128], strides = [1, 1]} : vector<96x128xf32> to vector<8x128xf32>
    %347 = vector.extract_strided_slice %342 {offsets = [32, 0], sizes = [8, 128], strides = [1, 1]} : vector<96x128xf32> to vector<8x128xf32>
    %348 = vector.extract_strided_slice %342 {offsets = [40, 0], sizes = [8, 128], strides = [1, 1]} : vector<96x128xf32> to vector<8x128xf32>
    %349 = vector.extract_strided_slice %342 {offsets = [48, 0], sizes = [8, 128], strides = [1, 1]} : vector<96x128xf32> to vector<8x128xf32>
    %350 = vector.extract_strided_slice %342 {offsets = [56, 0], sizes = [8, 128], strides = [1, 1]} : vector<96x128xf32> to vector<8x128xf32>
    %351 = vector.extract_strided_slice %342 {offsets = [64, 0], sizes = [8, 128], strides = [1, 1]} : vector<96x128xf32> to vector<8x128xf32>
    %352 = vector.extract_strided_slice %342 {offsets = [72, 0], sizes = [8, 128], strides = [1, 1]} : vector<96x128xf32> to vector<8x128xf32>
    %353 = vector.extract_strided_slice %342 {offsets = [80, 0], sizes = [8, 128], strides = [1, 1]} : vector<96x128xf32> to vector<8x128xf32>
    %354 = vector.extract_strided_slice %342 {offsets = [88, 0], sizes = [8, 128], strides = [1, 1]} : vector<96x128xf32> to vector<8x128xf32>
    %355 = arith.mulf %343, %43 : vector<8x128xf32>
    %356 = arith.mulf %344, %55 : vector<8x128xf32>
    %357 = arith.addf %355, %356 : vector<8x128xf32>
    %358 = arith.mulf %345, %69 : vector<8x128xf32>
    %359 = arith.addf %357, %358 : vector<8x128xf32>
    %360 = arith.mulf %343, %47 : vector<8x128xf32>
    %361 = arith.mulf %344, %61 : vector<8x128xf32>
    %362 = arith.addf %360, %361 : vector<8x128xf32>
    %363 = arith.mulf %345, %73 : vector<8x128xf32>
    %364 = arith.addf %362, %363 : vector<8x128xf32>
    %365 = arith.mulf %343, %51 : vector<8x128xf32>
    %366 = arith.mulf %344, %65 : vector<8x128xf32>
    %367 = arith.addf %365, %366 : vector<8x128xf32>
    %368 = arith.mulf %345, %79 : vector<8x128xf32>
    %369 = arith.addf %367, %368 : vector<8x128xf32>
    %370 = arith.mulf %346, %43 : vector<8x128xf32>
    %371 = arith.mulf %347, %55 : vector<8x128xf32>
    %372 = arith.addf %370, %371 : vector<8x128xf32>
    %373 = arith.mulf %348, %69 : vector<8x128xf32>
    %374 = arith.addf %372, %373 : vector<8x128xf32>
    %375 = arith.mulf %346, %47 : vector<8x128xf32>
    %376 = arith.mulf %347, %61 : vector<8x128xf32>
    %377 = arith.addf %375, %376 : vector<8x128xf32>
    %378 = arith.mulf %348, %73 : vector<8x128xf32>
    %379 = arith.addf %377, %378 : vector<8x128xf32>
    %380 = arith.mulf %346, %51 : vector<8x128xf32>
    %381 = arith.mulf %347, %65 : vector<8x128xf32>
    %382 = arith.addf %380, %381 : vector<8x128xf32>
    %383 = arith.mulf %348, %79 : vector<8x128xf32>
    %384 = arith.addf %382, %383 : vector<8x128xf32>
    %385 = arith.mulf %349, %43 : vector<8x128xf32>
    %386 = arith.mulf %350, %55 : vector<8x128xf32>
    %387 = arith.addf %385, %386 : vector<8x128xf32>
    %388 = arith.mulf %351, %69 : vector<8x128xf32>
    %389 = arith.addf %387, %388 : vector<8x128xf32>
    %390 = arith.mulf %349, %47 : vector<8x128xf32>
    %391 = arith.mulf %350, %61 : vector<8x128xf32>
    %392 = arith.addf %390, %391 : vector<8x128xf32>
    %393 = arith.mulf %351, %73 : vector<8x128xf32>
    %394 = arith.addf %392, %393 : vector<8x128xf32>
    %395 = arith.mulf %349, %51 : vector<8x128xf32>
    %396 = arith.mulf %350, %65 : vector<8x128xf32>
    %397 = arith.addf %395, %396 : vector<8x128xf32>
    %398 = arith.mulf %351, %79 : vector<8x128xf32>
    %399 = arith.addf %397, %398 : vector<8x128xf32>
    %400 = vector.broadcast %80 : vector<1x128xf32> to vector<8x128xf32>
    %401 = arith.mulf %343, %400 : vector<8x128xf32>
    %402 = vector.broadcast %81 : vector<1x128xf32> to vector<8x128xf32>
    %403 = arith.mulf %344, %402 : vector<8x128xf32>
    %404 = arith.addf %401, %403 : vector<8x128xf32>
    %405 = vector.broadcast %82 : vector<1x128xf32> to vector<8x128xf32>
    %406 = arith.mulf %345, %405 : vector<8x128xf32>
    %407 = arith.addf %404, %406 : vector<8x128xf32>
    %408 = arith.addf %407, %352 : vector<8x128xf32>
    %409 = vector.broadcast %80 : vector<1x128xf32> to vector<8x128xf32>
    %410 = arith.mulf %346, %409 : vector<8x128xf32>
    %411 = vector.broadcast %81 : vector<1x128xf32> to vector<8x128xf32>
    %412 = arith.mulf %347, %411 : vector<8x128xf32>
    %413 = arith.addf %410, %412 : vector<8x128xf32>
    %414 = vector.broadcast %82 : vector<1x128xf32> to vector<8x128xf32>
    %415 = arith.mulf %348, %414 : vector<8x128xf32>
    %416 = arith.addf %413, %415 : vector<8x128xf32>
    %417 = arith.addf %416, %353 : vector<8x128xf32>
    %418 = vector.broadcast %80 : vector<1x128xf32> to vector<8x128xf32>
    %419 = arith.mulf %349, %418 : vector<8x128xf32>
    %420 = vector.broadcast %81 : vector<1x128xf32> to vector<8x128xf32>
    %421 = arith.mulf %350, %420 : vector<8x128xf32>
    %422 = arith.addf %419, %421 : vector<8x128xf32>
    %423 = vector.broadcast %82 : vector<1x128xf32> to vector<8x128xf32>
    %424 = arith.mulf %351, %423 : vector<8x128xf32>
    %425 = arith.addf %422, %424 : vector<8x128xf32>
    %426 = arith.addf %425, %354 : vector<8x128xf32>
    %427 = vector.shape_cast %340 : vector<1x128xi1> to vector<1x128xi1>
    %428 = vector.broadcast %427 : vector<1x128xi1> to vector<8x128xi1>
    %429 = arith.select %428, %359, %305 : vector<8x128xi1>, vector<8x128xf32>
    %430 = vector.shape_cast %340 : vector<1x128xi1> to vector<1x128xi1>
    %431 = vector.broadcast %430 : vector<1x128xi1> to vector<8x128xi1>
    %432 = arith.select %431, %364, %308 : vector<8x128xi1>, vector<8x128xf32>
    %433 = vector.shape_cast %340 : vector<1x128xi1> to vector<1x128xi1>
    %434 = vector.broadcast %433 : vector<1x128xi1> to vector<8x128xi1>
    %435 = arith.select %434, %369, %311 : vector<8x128xi1>, vector<8x128xf32>
    %436 = vector.shape_cast %340 : vector<1x128xi1> to vector<1x128xi1>
    %437 = vector.broadcast %436 : vector<1x128xi1> to vector<8x128xi1>
    %438 = arith.select %437, %374, %314 : vector<8x128xi1>, vector<8x128xf32>
    %439 = vector.shape_cast %340 : vector<1x128xi1> to vector<1x128xi1>
    %440 = vector.broadcast %439 : vector<1x128xi1> to vector<8x128xi1>
    %441 = arith.select %440, %379, %317 : vector<8x128xi1>, vector<8x128xf32>
    %442 = vector.shape_cast %340 : vector<1x128xi1> to vector<1x128xi1>
    %443 = vector.broadcast %442 : vector<1x128xi1> to vector<8x128xi1>
    %444 = arith.select %443, %384, %320 : vector<8x128xi1>, vector<8x128xf32>
    %445 = vector.shape_cast %340 : vector<1x128xi1> to vector<1x128xi1>
    %446 = vector.broadcast %445 : vector<1x128xi1> to vector<8x128xi1>
    %447 = arith.select %446, %389, %323 : vector<8x128xi1>, vector<8x128xf32>
    %448 = vector.shape_cast %340 : vector<1x128xi1> to vector<1x128xi1>
    %449 = vector.broadcast %448 : vector<1x128xi1> to vector<8x128xi1>
    %450 = arith.select %449, %394, %326 : vector<8x128xi1>, vector<8x128xf32>
    %451 = vector.shape_cast %340 : vector<1x128xi1> to vector<1x128xi1>
    %452 = vector.broadcast %451 : vector<1x128xi1> to vector<8x128xi1>
    %453 = arith.select %452, %399, %329 : vector<8x128xi1>, vector<8x128xf32>
    %454 = vector.shape_cast %340 : vector<1x128xi1> to vector<1x128xi1>
    %455 = vector.broadcast %454 : vector<1x128xi1> to vector<8x128xi1>
    %456 = arith.select %455, %408, %332 : vector<8x128xi1>, vector<8x128xf32>
    %457 = vector.shape_cast %340 : vector<1x128xi1> to vector<1x128xi1>
    %458 = vector.broadcast %457 : vector<1x128xi1> to vector<8x128xi1>
    %459 = arith.select %458, %417, %335 : vector<8x128xi1>, vector<8x128xf32>
    %460 = vector.shape_cast %340 : vector<1x128xi1> to vector<1x128xi1>
    %461 = vector.broadcast %460 : vector<1x128xi1> to vector<8x128xi1>
    %462 = arith.select %461, %426, %338 : vector<8x128xi1>, vector<8x128xf32>
    %cst_30 = arith.constant 4.000000e+00 : f32
    %463 = vector.broadcast %cst_30 : f32 to vector<1x128xf32>
    %464 = arith.cmpf oeq, %84, %463 : vector<1x128xf32>
    %465 = tpu.concatenate %429, %432, %435, %438, %441, %444, %447, %450, %453, %456, %459, %462 in 0 : vector<8x128xf32>, vector<8x128xf32>, vector<8x128xf32>, vector<8x128xf32>, vector<8x128xf32>, vector<8x128xf32>, vector<8x128xf32>, vector<8x128xf32>, vector<8x128xf32>, vector<8x128xf32>, vector<8x128xf32>, vector<8x128xf32> -> vector<96x128xf32>
    %cst_31 = arith.constant dense<0.000000e+00> : vector<96x128xf32>
    %466 = tpu.matmul %465, %83, %cst_31 {dimension_numbers = #tpu.dot_dimension_numbers<[1], [0], [0], [1], [0, 0, 1, 1], [], []>} : vector<96x128xf32>, vector<128x128xf32>, vector<96x128xf32> -> vector<96x128xf32>
    %467 = vector.extract_strided_slice %466 {offsets = [0, 0], sizes = [8, 128], strides = [1, 1]} : vector<96x128xf32> to vector<8x128xf32>
    %468 = vector.extract_strided_slice %466 {offsets = [8, 0], sizes = [8, 128], strides = [1, 1]} : vector<96x128xf32> to vector<8x128xf32>
    %469 = vector.extract_strided_slice %466 {offsets = [16, 0], sizes = [8, 128], strides = [1, 1]} : vector<96x128xf32> to vector<8x128xf32>
    %470 = vector.extract_strided_slice %466 {offsets = [24, 0], sizes = [8, 128], strides = [1, 1]} : vector<96x128xf32> to vector<8x128xf32>
    %471 = vector.extract_strided_slice %466 {offsets = [32, 0], sizes = [8, 128], strides = [1, 1]} : vector<96x128xf32> to vector<8x128xf32>
    %472 = vector.extract_strided_slice %466 {offsets = [40, 0], sizes = [8, 128], strides = [1, 1]} : vector<96x128xf32> to vector<8x128xf32>
    %473 = vector.extract_strided_slice %466 {offsets = [48, 0], sizes = [8, 128], strides = [1, 1]} : vector<96x128xf32> to vector<8x128xf32>
    %474 = vector.extract_strided_slice %466 {offsets = [56, 0], sizes = [8, 128], strides = [1, 1]} : vector<96x128xf32> to vector<8x128xf32>
    %475 = vector.extract_strided_slice %466 {offsets = [64, 0], sizes = [8, 128], strides = [1, 1]} : vector<96x128xf32> to vector<8x128xf32>
    %476 = vector.extract_strided_slice %466 {offsets = [72, 0], sizes = [8, 128], strides = [1, 1]} : vector<96x128xf32> to vector<8x128xf32>
    %477 = vector.extract_strided_slice %466 {offsets = [80, 0], sizes = [8, 128], strides = [1, 1]} : vector<96x128xf32> to vector<8x128xf32>
    %478 = vector.extract_strided_slice %466 {offsets = [88, 0], sizes = [8, 128], strides = [1, 1]} : vector<96x128xf32> to vector<8x128xf32>
    %479 = arith.mulf %467, %43 : vector<8x128xf32>
    %480 = arith.mulf %468, %55 : vector<8x128xf32>
    %481 = arith.addf %479, %480 : vector<8x128xf32>
    %482 = arith.mulf %469, %69 : vector<8x128xf32>
    %483 = arith.addf %481, %482 : vector<8x128xf32>
    %484 = arith.mulf %467, %47 : vector<8x128xf32>
    %485 = arith.mulf %468, %61 : vector<8x128xf32>
    %486 = arith.addf %484, %485 : vector<8x128xf32>
    %487 = arith.mulf %469, %73 : vector<8x128xf32>
    %488 = arith.addf %486, %487 : vector<8x128xf32>
    %489 = arith.mulf %467, %51 : vector<8x128xf32>
    %490 = arith.mulf %468, %65 : vector<8x128xf32>
    %491 = arith.addf %489, %490 : vector<8x128xf32>
    %492 = arith.mulf %469, %79 : vector<8x128xf32>
    %493 = arith.addf %491, %492 : vector<8x128xf32>
    %494 = arith.mulf %470, %43 : vector<8x128xf32>
    %495 = arith.mulf %471, %55 : vector<8x128xf32>
    %496 = arith.addf %494, %495 : vector<8x128xf32>
    %497 = arith.mulf %472, %69 : vector<8x128xf32>
    %498 = arith.addf %496, %497 : vector<8x128xf32>
    %499 = arith.mulf %470, %47 : vector<8x128xf32>
    %500 = arith.mulf %471, %61 : vector<8x128xf32>
    %501 = arith.addf %499, %500 : vector<8x128xf32>
    %502 = arith.mulf %472, %73 : vector<8x128xf32>
    %503 = arith.addf %501, %502 : vector<8x128xf32>
    %504 = arith.mulf %470, %51 : vector<8x128xf32>
    %505 = arith.mulf %471, %65 : vector<8x128xf32>
    %506 = arith.addf %504, %505 : vector<8x128xf32>
    %507 = arith.mulf %472, %79 : vector<8x128xf32>
    %508 = arith.addf %506, %507 : vector<8x128xf32>
    %509 = arith.mulf %473, %43 : vector<8x128xf32>
    %510 = arith.mulf %474, %55 : vector<8x128xf32>
    %511 = arith.addf %509, %510 : vector<8x128xf32>
    %512 = arith.mulf %475, %69 : vector<8x128xf32>
    %513 = arith.addf %511, %512 : vector<8x128xf32>
    %514 = arith.mulf %473, %47 : vector<8x128xf32>
    %515 = arith.mulf %474, %61 : vector<8x128xf32>
    %516 = arith.addf %514, %515 : vector<8x128xf32>
    %517 = arith.mulf %475, %73 : vector<8x128xf32>
    %518 = arith.addf %516, %517 : vector<8x128xf32>
    %519 = arith.mulf %473, %51 : vector<8x128xf32>
    %520 = arith.mulf %474, %65 : vector<8x128xf32>
    %521 = arith.addf %519, %520 : vector<8x128xf32>
    %522 = arith.mulf %475, %79 : vector<8x128xf32>
    %523 = arith.addf %521, %522 : vector<8x128xf32>
    %524 = vector.broadcast %80 : vector<1x128xf32> to vector<8x128xf32>
    %525 = arith.mulf %467, %524 : vector<8x128xf32>
    %526 = vector.broadcast %81 : vector<1x128xf32> to vector<8x128xf32>
    %527 = arith.mulf %468, %526 : vector<8x128xf32>
    %528 = arith.addf %525, %527 : vector<8x128xf32>
    %529 = vector.broadcast %82 : vector<1x128xf32> to vector<8x128xf32>
    %530 = arith.mulf %469, %529 : vector<8x128xf32>
    %531 = arith.addf %528, %530 : vector<8x128xf32>
    %532 = arith.addf %531, %476 : vector<8x128xf32>
    %533 = vector.broadcast %80 : vector<1x128xf32> to vector<8x128xf32>
    %534 = arith.mulf %470, %533 : vector<8x128xf32>
    %535 = vector.broadcast %81 : vector<1x128xf32> to vector<8x128xf32>
    %536 = arith.mulf %471, %535 : vector<8x128xf32>
    %537 = arith.addf %534, %536 : vector<8x128xf32>
    %538 = vector.broadcast %82 : vector<1x128xf32> to vector<8x128xf32>
    %539 = arith.mulf %472, %538 : vector<8x128xf32>
    %540 = arith.addf %537, %539 : vector<8x128xf32>
    %541 = arith.addf %540, %477 : vector<8x128xf32>
    %542 = vector.broadcast %80 : vector<1x128xf32> to vector<8x128xf32>
    %543 = arith.mulf %473, %542 : vector<8x128xf32>
    %544 = vector.broadcast %81 : vector<1x128xf32> to vector<8x128xf32>
    %545 = arith.mulf %474, %544 : vector<8x128xf32>
    %546 = arith.addf %543, %545 : vector<8x128xf32>
    %547 = vector.broadcast %82 : vector<1x128xf32> to vector<8x128xf32>
    %548 = arith.mulf %475, %547 : vector<8x128xf32>
    %549 = arith.addf %546, %548 : vector<8x128xf32>
    %550 = arith.addf %549, %478 : vector<8x128xf32>
    %551 = vector.shape_cast %464 : vector<1x128xi1> to vector<1x128xi1>
    %552 = vector.broadcast %551 : vector<1x128xi1> to vector<8x128xi1>
    %553 = arith.select %552, %483, %429 : vector<8x128xi1>, vector<8x128xf32>
    %554 = vector.shape_cast %464 : vector<1x128xi1> to vector<1x128xi1>
    %555 = vector.broadcast %554 : vector<1x128xi1> to vector<8x128xi1>
    %556 = arith.select %555, %488, %432 : vector<8x128xi1>, vector<8x128xf32>
    %557 = vector.shape_cast %464 : vector<1x128xi1> to vector<1x128xi1>
    %558 = vector.broadcast %557 : vector<1x128xi1> to vector<8x128xi1>
    %559 = arith.select %558, %493, %435 : vector<8x128xi1>, vector<8x128xf32>
    %560 = vector.shape_cast %464 : vector<1x128xi1> to vector<1x128xi1>
    %561 = vector.broadcast %560 : vector<1x128xi1> to vector<8x128xi1>
    %562 = arith.select %561, %498, %438 : vector<8x128xi1>, vector<8x128xf32>
    %563 = vector.shape_cast %464 : vector<1x128xi1> to vector<1x128xi1>
    %564 = vector.broadcast %563 : vector<1x128xi1> to vector<8x128xi1>
    %565 = arith.select %564, %503, %441 : vector<8x128xi1>, vector<8x128xf32>
    %566 = vector.shape_cast %464 : vector<1x128xi1> to vector<1x128xi1>
    %567 = vector.broadcast %566 : vector<1x128xi1> to vector<8x128xi1>
    %568 = arith.select %567, %508, %444 : vector<8x128xi1>, vector<8x128xf32>
    %569 = vector.shape_cast %464 : vector<1x128xi1> to vector<1x128xi1>
    %570 = vector.broadcast %569 : vector<1x128xi1> to vector<8x128xi1>
    %571 = arith.select %570, %513, %447 : vector<8x128xi1>, vector<8x128xf32>
    %572 = vector.shape_cast %464 : vector<1x128xi1> to vector<1x128xi1>
    %573 = vector.broadcast %572 : vector<1x128xi1> to vector<8x128xi1>
    %574 = arith.select %573, %518, %450 : vector<8x128xi1>, vector<8x128xf32>
    %575 = vector.shape_cast %464 : vector<1x128xi1> to vector<1x128xi1>
    %576 = vector.broadcast %575 : vector<1x128xi1> to vector<8x128xi1>
    %577 = arith.select %576, %523, %453 : vector<8x128xi1>, vector<8x128xf32>
    %578 = vector.shape_cast %464 : vector<1x128xi1> to vector<1x128xi1>
    %579 = vector.broadcast %578 : vector<1x128xi1> to vector<8x128xi1>
    %580 = arith.select %579, %532, %456 : vector<8x128xi1>, vector<8x128xf32>
    %581 = vector.shape_cast %464 : vector<1x128xi1> to vector<1x128xi1>
    %582 = vector.broadcast %581 : vector<1x128xi1> to vector<8x128xi1>
    %583 = arith.select %582, %541, %459 : vector<8x128xi1>, vector<8x128xf32>
    %584 = vector.shape_cast %464 : vector<1x128xi1> to vector<1x128xi1>
    %585 = vector.broadcast %584 : vector<1x128xi1> to vector<8x128xi1>
    %586 = arith.select %585, %550, %462 : vector<8x128xi1>, vector<8x128xf32>
    %cst_32 = arith.constant 5.000000e+00 : f32
    %587 = vector.broadcast %cst_32 : f32 to vector<1x128xf32>
    %588 = arith.cmpf oeq, %84, %587 : vector<1x128xf32>
    %589 = tpu.concatenate %553, %556, %559, %562, %565, %568, %571, %574, %577, %580, %583, %586 in 0 : vector<8x128xf32>, vector<8x128xf32>, vector<8x128xf32>, vector<8x128xf32>, vector<8x128xf32>, vector<8x128xf32>, vector<8x128xf32>, vector<8x128xf32>, vector<8x128xf32>, vector<8x128xf32>, vector<8x128xf32>, vector<8x128xf32> -> vector<96x128xf32>
    %cst_33 = arith.constant dense<0.000000e+00> : vector<96x128xf32>
    %590 = tpu.matmul %589, %83, %cst_33 {dimension_numbers = #tpu.dot_dimension_numbers<[1], [0], [0], [1], [0, 0, 1, 1], [], []>} : vector<96x128xf32>, vector<128x128xf32>, vector<96x128xf32> -> vector<96x128xf32>
    %591 = vector.extract_strided_slice %590 {offsets = [0, 0], sizes = [8, 128], strides = [1, 1]} : vector<96x128xf32> to vector<8x128xf32>
    %592 = vector.extract_strided_slice %590 {offsets = [8, 0], sizes = [8, 128], strides = [1, 1]} : vector<96x128xf32> to vector<8x128xf32>
    %593 = vector.extract_strided_slice %590 {offsets = [16, 0], sizes = [8, 128], strides = [1, 1]} : vector<96x128xf32> to vector<8x128xf32>
    %594 = vector.extract_strided_slice %590 {offsets = [24, 0], sizes = [8, 128], strides = [1, 1]} : vector<96x128xf32> to vector<8x128xf32>
    %595 = vector.extract_strided_slice %590 {offsets = [32, 0], sizes = [8, 128], strides = [1, 1]} : vector<96x128xf32> to vector<8x128xf32>
    %596 = vector.extract_strided_slice %590 {offsets = [40, 0], sizes = [8, 128], strides = [1, 1]} : vector<96x128xf32> to vector<8x128xf32>
    %597 = vector.extract_strided_slice %590 {offsets = [48, 0], sizes = [8, 128], strides = [1, 1]} : vector<96x128xf32> to vector<8x128xf32>
    %598 = vector.extract_strided_slice %590 {offsets = [56, 0], sizes = [8, 128], strides = [1, 1]} : vector<96x128xf32> to vector<8x128xf32>
    %599 = vector.extract_strided_slice %590 {offsets = [64, 0], sizes = [8, 128], strides = [1, 1]} : vector<96x128xf32> to vector<8x128xf32>
    %600 = vector.extract_strided_slice %590 {offsets = [72, 0], sizes = [8, 128], strides = [1, 1]} : vector<96x128xf32> to vector<8x128xf32>
    %601 = vector.extract_strided_slice %590 {offsets = [80, 0], sizes = [8, 128], strides = [1, 1]} : vector<96x128xf32> to vector<8x128xf32>
    %602 = vector.extract_strided_slice %590 {offsets = [88, 0], sizes = [8, 128], strides = [1, 1]} : vector<96x128xf32> to vector<8x128xf32>
    %603 = arith.mulf %591, %43 : vector<8x128xf32>
    %604 = arith.mulf %592, %55 : vector<8x128xf32>
    %605 = arith.addf %603, %604 : vector<8x128xf32>
    %606 = arith.mulf %593, %69 : vector<8x128xf32>
    %607 = arith.addf %605, %606 : vector<8x128xf32>
    %608 = arith.mulf %591, %47 : vector<8x128xf32>
    %609 = arith.mulf %592, %61 : vector<8x128xf32>
    %610 = arith.addf %608, %609 : vector<8x128xf32>
    %611 = arith.mulf %593, %73 : vector<8x128xf32>
    %612 = arith.addf %610, %611 : vector<8x128xf32>
    %613 = arith.mulf %591, %51 : vector<8x128xf32>
    %614 = arith.mulf %592, %65 : vector<8x128xf32>
    %615 = arith.addf %613, %614 : vector<8x128xf32>
    %616 = arith.mulf %593, %79 : vector<8x128xf32>
    %617 = arith.addf %615, %616 : vector<8x128xf32>
    %618 = arith.mulf %594, %43 : vector<8x128xf32>
    %619 = arith.mulf %595, %55 : vector<8x128xf32>
    %620 = arith.addf %618, %619 : vector<8x128xf32>
    %621 = arith.mulf %596, %69 : vector<8x128xf32>
    %622 = arith.addf %620, %621 : vector<8x128xf32>
    %623 = arith.mulf %594, %47 : vector<8x128xf32>
    %624 = arith.mulf %595, %61 : vector<8x128xf32>
    %625 = arith.addf %623, %624 : vector<8x128xf32>
    %626 = arith.mulf %596, %73 : vector<8x128xf32>
    %627 = arith.addf %625, %626 : vector<8x128xf32>
    %628 = arith.mulf %594, %51 : vector<8x128xf32>
    %629 = arith.mulf %595, %65 : vector<8x128xf32>
    %630 = arith.addf %628, %629 : vector<8x128xf32>
    %631 = arith.mulf %596, %79 : vector<8x128xf32>
    %632 = arith.addf %630, %631 : vector<8x128xf32>
    %633 = arith.mulf %597, %43 : vector<8x128xf32>
    %634 = arith.mulf %598, %55 : vector<8x128xf32>
    %635 = arith.addf %633, %634 : vector<8x128xf32>
    %636 = arith.mulf %599, %69 : vector<8x128xf32>
    %637 = arith.addf %635, %636 : vector<8x128xf32>
    %638 = arith.mulf %597, %47 : vector<8x128xf32>
    %639 = arith.mulf %598, %61 : vector<8x128xf32>
    %640 = arith.addf %638, %639 : vector<8x128xf32>
    %641 = arith.mulf %599, %73 : vector<8x128xf32>
    %642 = arith.addf %640, %641 : vector<8x128xf32>
    %643 = arith.mulf %597, %51 : vector<8x128xf32>
    %644 = arith.mulf %598, %65 : vector<8x128xf32>
    %645 = arith.addf %643, %644 : vector<8x128xf32>
    %646 = arith.mulf %599, %79 : vector<8x128xf32>
    %647 = arith.addf %645, %646 : vector<8x128xf32>
    %648 = vector.broadcast %80 : vector<1x128xf32> to vector<8x128xf32>
    %649 = arith.mulf %591, %648 : vector<8x128xf32>
    %650 = vector.broadcast %81 : vector<1x128xf32> to vector<8x128xf32>
    %651 = arith.mulf %592, %650 : vector<8x128xf32>
    %652 = arith.addf %649, %651 : vector<8x128xf32>
    %653 = vector.broadcast %82 : vector<1x128xf32> to vector<8x128xf32>
    %654 = arith.mulf %593, %653 : vector<8x128xf32>
    %655 = arith.addf %652, %654 : vector<8x128xf32>
    %656 = arith.addf %655, %600 : vector<8x128xf32>
    %657 = vector.broadcast %80 : vector<1x128xf32> to vector<8x128xf32>
    %658 = arith.mulf %594, %657 : vector<8x128xf32>
    %659 = vector.broadcast %81 : vector<1x128xf32> to vector<8x128xf32>
    %660 = arith.mulf %595, %659 : vector<8x128xf32>
    %661 = arith.addf %658, %660 : vector<8x128xf32>
    %662 = vector.broadcast %82 : vector<1x128xf32> to vector<8x128xf32>
    %663 = arith.mulf %596, %662 : vector<8x128xf32>
    %664 = arith.addf %661, %663 : vector<8x128xf32>
    %665 = arith.addf %664, %601 : vector<8x128xf32>
    %666 = vector.broadcast %80 : vector<1x128xf32> to vector<8x128xf32>
    %667 = arith.mulf %597, %666 : vector<8x128xf32>
    %668 = vector.broadcast %81 : vector<1x128xf32> to vector<8x128xf32>
    %669 = arith.mulf %598, %668 : vector<8x128xf32>
    %670 = arith.addf %667, %669 : vector<8x128xf32>
    %671 = vector.broadcast %82 : vector<1x128xf32> to vector<8x128xf32>
    %672 = arith.mulf %599, %671 : vector<8x128xf32>
    %673 = arith.addf %670, %672 : vector<8x128xf32>
    %674 = arith.addf %673, %602 : vector<8x128xf32>
    %675 = vector.shape_cast %588 : vector<1x128xi1> to vector<1x128xi1>
    %676 = vector.broadcast %675 : vector<1x128xi1> to vector<8x128xi1>
    %677 = arith.select %676, %607, %553 : vector<8x128xi1>, vector<8x128xf32>
    %678 = vector.shape_cast %588 : vector<1x128xi1> to vector<1x128xi1>
    %679 = vector.broadcast %678 : vector<1x128xi1> to vector<8x128xi1>
    %680 = arith.select %679, %612, %556 : vector<8x128xi1>, vector<8x128xf32>
    %681 = vector.shape_cast %588 : vector<1x128xi1> to vector<1x128xi1>
    %682 = vector.broadcast %681 : vector<1x128xi1> to vector<8x128xi1>
    %683 = arith.select %682, %617, %559 : vector<8x128xi1>, vector<8x128xf32>
    %684 = vector.shape_cast %588 : vector<1x128xi1> to vector<1x128xi1>
    %685 = vector.broadcast %684 : vector<1x128xi1> to vector<8x128xi1>
    %686 = arith.select %685, %622, %562 : vector<8x128xi1>, vector<8x128xf32>
    %687 = vector.shape_cast %588 : vector<1x128xi1> to vector<1x128xi1>
    %688 = vector.broadcast %687 : vector<1x128xi1> to vector<8x128xi1>
    %689 = arith.select %688, %627, %565 : vector<8x128xi1>, vector<8x128xf32>
    %690 = vector.shape_cast %588 : vector<1x128xi1> to vector<1x128xi1>
    %691 = vector.broadcast %690 : vector<1x128xi1> to vector<8x128xi1>
    %692 = arith.select %691, %632, %568 : vector<8x128xi1>, vector<8x128xf32>
    %693 = vector.shape_cast %588 : vector<1x128xi1> to vector<1x128xi1>
    %694 = vector.broadcast %693 : vector<1x128xi1> to vector<8x128xi1>
    %695 = arith.select %694, %637, %571 : vector<8x128xi1>, vector<8x128xf32>
    %696 = vector.shape_cast %588 : vector<1x128xi1> to vector<1x128xi1>
    %697 = vector.broadcast %696 : vector<1x128xi1> to vector<8x128xi1>
    %698 = arith.select %697, %642, %574 : vector<8x128xi1>, vector<8x128xf32>
    %699 = vector.shape_cast %588 : vector<1x128xi1> to vector<1x128xi1>
    %700 = vector.broadcast %699 : vector<1x128xi1> to vector<8x128xi1>
    %701 = arith.select %700, %647, %577 : vector<8x128xi1>, vector<8x128xf32>
    %702 = vector.shape_cast %588 : vector<1x128xi1> to vector<1x128xi1>
    %703 = vector.broadcast %702 : vector<1x128xi1> to vector<8x128xi1>
    %704 = arith.select %703, %656, %580 : vector<8x128xi1>, vector<8x128xf32>
    %705 = vector.shape_cast %588 : vector<1x128xi1> to vector<1x128xi1>
    %706 = vector.broadcast %705 : vector<1x128xi1> to vector<8x128xi1>
    %707 = arith.select %706, %665, %583 : vector<8x128xi1>, vector<8x128xf32>
    %708 = vector.shape_cast %588 : vector<1x128xi1> to vector<1x128xi1>
    %709 = vector.broadcast %708 : vector<1x128xi1> to vector<8x128xi1>
    %710 = arith.select %709, %674, %586 : vector<8x128xi1>, vector<8x128xf32>
    %cst_34 = arith.constant 6.000000e+00 : f32
    %711 = vector.broadcast %cst_34 : f32 to vector<1x128xf32>
    %712 = arith.cmpf oeq, %84, %711 : vector<1x128xf32>
    %713 = tpu.concatenate %677, %680, %683, %686, %689, %692, %695, %698, %701, %704, %707, %710 in 0 : vector<8x128xf32>, vector<8x128xf32>, vector<8x128xf32>, vector<8x128xf32>, vector<8x128xf32>, vector<8x128xf32>, vector<8x128xf32>, vector<8x128xf32>, vector<8x128xf32>, vector<8x128xf32>, vector<8x128xf32>, vector<8x128xf32> -> vector<96x128xf32>
    %cst_35 = arith.constant dense<0.000000e+00> : vector<96x128xf32>
    %714 = tpu.matmul %713, %83, %cst_35 {dimension_numbers = #tpu.dot_dimension_numbers<[1], [0], [0], [1], [0, 0, 1, 1], [], []>} : vector<96x128xf32>, vector<128x128xf32>, vector<96x128xf32> -> vector<96x128xf32>
    %715 = vector.extract_strided_slice %714 {offsets = [0, 0], sizes = [8, 128], strides = [1, 1]} : vector<96x128xf32> to vector<8x128xf32>
    %716 = vector.extract_strided_slice %714 {offsets = [8, 0], sizes = [8, 128], strides = [1, 1]} : vector<96x128xf32> to vector<8x128xf32>
    %717 = vector.extract_strided_slice %714 {offsets = [16, 0], sizes = [8, 128], strides = [1, 1]} : vector<96x128xf32> to vector<8x128xf32>
    %718 = vector.extract_strided_slice %714 {offsets = [24, 0], sizes = [8, 128], strides = [1, 1]} : vector<96x128xf32> to vector<8x128xf32>
    %719 = vector.extract_strided_slice %714 {offsets = [32, 0], sizes = [8, 128], strides = [1, 1]} : vector<96x128xf32> to vector<8x128xf32>
    %720 = vector.extract_strided_slice %714 {offsets = [40, 0], sizes = [8, 128], strides = [1, 1]} : vector<96x128xf32> to vector<8x128xf32>
    %721 = vector.extract_strided_slice %714 {offsets = [48, 0], sizes = [8, 128], strides = [1, 1]} : vector<96x128xf32> to vector<8x128xf32>
    %722 = vector.extract_strided_slice %714 {offsets = [56, 0], sizes = [8, 128], strides = [1, 1]} : vector<96x128xf32> to vector<8x128xf32>
    %723 = vector.extract_strided_slice %714 {offsets = [64, 0], sizes = [8, 128], strides = [1, 1]} : vector<96x128xf32> to vector<8x128xf32>
    %724 = vector.extract_strided_slice %714 {offsets = [72, 0], sizes = [8, 128], strides = [1, 1]} : vector<96x128xf32> to vector<8x128xf32>
    %725 = vector.extract_strided_slice %714 {offsets = [80, 0], sizes = [8, 128], strides = [1, 1]} : vector<96x128xf32> to vector<8x128xf32>
    %726 = vector.extract_strided_slice %714 {offsets = [88, 0], sizes = [8, 128], strides = [1, 1]} : vector<96x128xf32> to vector<8x128xf32>
    %727 = arith.mulf %715, %43 : vector<8x128xf32>
    %728 = arith.mulf %716, %55 : vector<8x128xf32>
    %729 = arith.addf %727, %728 : vector<8x128xf32>
    %730 = arith.mulf %717, %69 : vector<8x128xf32>
    %731 = arith.addf %729, %730 : vector<8x128xf32>
    %732 = arith.mulf %715, %47 : vector<8x128xf32>
    %733 = arith.mulf %716, %61 : vector<8x128xf32>
    %734 = arith.addf %732, %733 : vector<8x128xf32>
    %735 = arith.mulf %717, %73 : vector<8x128xf32>
    %736 = arith.addf %734, %735 : vector<8x128xf32>
    %737 = arith.mulf %715, %51 : vector<8x128xf32>
    %738 = arith.mulf %716, %65 : vector<8x128xf32>
    %739 = arith.addf %737, %738 : vector<8x128xf32>
    %740 = arith.mulf %717, %79 : vector<8x128xf32>
    %741 = arith.addf %739, %740 : vector<8x128xf32>
    %742 = arith.mulf %718, %43 : vector<8x128xf32>
    %743 = arith.mulf %719, %55 : vector<8x128xf32>
    %744 = arith.addf %742, %743 : vector<8x128xf32>
    %745 = arith.mulf %720, %69 : vector<8x128xf32>
    %746 = arith.addf %744, %745 : vector<8x128xf32>
    %747 = arith.mulf %718, %47 : vector<8x128xf32>
    %748 = arith.mulf %719, %61 : vector<8x128xf32>
    %749 = arith.addf %747, %748 : vector<8x128xf32>
    %750 = arith.mulf %720, %73 : vector<8x128xf32>
    %751 = arith.addf %749, %750 : vector<8x128xf32>
    %752 = arith.mulf %718, %51 : vector<8x128xf32>
    %753 = arith.mulf %719, %65 : vector<8x128xf32>
    %754 = arith.addf %752, %753 : vector<8x128xf32>
    %755 = arith.mulf %720, %79 : vector<8x128xf32>
    %756 = arith.addf %754, %755 : vector<8x128xf32>
    %757 = arith.mulf %721, %43 : vector<8x128xf32>
    %758 = arith.mulf %722, %55 : vector<8x128xf32>
    %759 = arith.addf %757, %758 : vector<8x128xf32>
    %760 = arith.mulf %723, %69 : vector<8x128xf32>
    %761 = arith.addf %759, %760 : vector<8x128xf32>
    %762 = arith.mulf %721, %47 : vector<8x128xf32>
    %763 = arith.mulf %722, %61 : vector<8x128xf32>
    %764 = arith.addf %762, %763 : vector<8x128xf32>
    %765 = arith.mulf %723, %73 : vector<8x128xf32>
    %766 = arith.addf %764, %765 : vector<8x128xf32>
    %767 = arith.mulf %721, %51 : vector<8x128xf32>
    %768 = arith.mulf %722, %65 : vector<8x128xf32>
    %769 = arith.addf %767, %768 : vector<8x128xf32>
    %770 = arith.mulf %723, %79 : vector<8x128xf32>
    %771 = arith.addf %769, %770 : vector<8x128xf32>
    %772 = vector.broadcast %80 : vector<1x128xf32> to vector<8x128xf32>
    %773 = arith.mulf %715, %772 : vector<8x128xf32>
    %774 = vector.broadcast %81 : vector<1x128xf32> to vector<8x128xf32>
    %775 = arith.mulf %716, %774 : vector<8x128xf32>
    %776 = arith.addf %773, %775 : vector<8x128xf32>
    %777 = vector.broadcast %82 : vector<1x128xf32> to vector<8x128xf32>
    %778 = arith.mulf %717, %777 : vector<8x128xf32>
    %779 = arith.addf %776, %778 : vector<8x128xf32>
    %780 = arith.addf %779, %724 : vector<8x128xf32>
    %781 = vector.broadcast %80 : vector<1x128xf32> to vector<8x128xf32>
    %782 = arith.mulf %718, %781 : vector<8x128xf32>
    %783 = vector.broadcast %81 : vector<1x128xf32> to vector<8x128xf32>
    %784 = arith.mulf %719, %783 : vector<8x128xf32>
    %785 = arith.addf %782, %784 : vector<8x128xf32>
    %786 = vector.broadcast %82 : vector<1x128xf32> to vector<8x128xf32>
    %787 = arith.mulf %720, %786 : vector<8x128xf32>
    %788 = arith.addf %785, %787 : vector<8x128xf32>
    %789 = arith.addf %788, %725 : vector<8x128xf32>
    %790 = vector.broadcast %80 : vector<1x128xf32> to vector<8x128xf32>
    %791 = arith.mulf %721, %790 : vector<8x128xf32>
    %792 = vector.broadcast %81 : vector<1x128xf32> to vector<8x128xf32>
    %793 = arith.mulf %722, %792 : vector<8x128xf32>
    %794 = arith.addf %791, %793 : vector<8x128xf32>
    %795 = vector.broadcast %82 : vector<1x128xf32> to vector<8x128xf32>
    %796 = arith.mulf %723, %795 : vector<8x128xf32>
    %797 = arith.addf %794, %796 : vector<8x128xf32>
    %798 = arith.addf %797, %726 : vector<8x128xf32>
    %799 = vector.shape_cast %712 : vector<1x128xi1> to vector<1x128xi1>
    %800 = vector.broadcast %799 : vector<1x128xi1> to vector<8x128xi1>
    %801 = arith.select %800, %731, %677 : vector<8x128xi1>, vector<8x128xf32>
    %802 = vector.shape_cast %712 : vector<1x128xi1> to vector<1x128xi1>
    %803 = vector.broadcast %802 : vector<1x128xi1> to vector<8x128xi1>
    %804 = arith.select %803, %736, %680 : vector<8x128xi1>, vector<8x128xf32>
    %805 = vector.shape_cast %712 : vector<1x128xi1> to vector<1x128xi1>
    %806 = vector.broadcast %805 : vector<1x128xi1> to vector<8x128xi1>
    %807 = arith.select %806, %741, %683 : vector<8x128xi1>, vector<8x128xf32>
    %808 = vector.shape_cast %712 : vector<1x128xi1> to vector<1x128xi1>
    %809 = vector.broadcast %808 : vector<1x128xi1> to vector<8x128xi1>
    %810 = arith.select %809, %746, %686 : vector<8x128xi1>, vector<8x128xf32>
    %811 = vector.shape_cast %712 : vector<1x128xi1> to vector<1x128xi1>
    %812 = vector.broadcast %811 : vector<1x128xi1> to vector<8x128xi1>
    %813 = arith.select %812, %751, %689 : vector<8x128xi1>, vector<8x128xf32>
    %814 = vector.shape_cast %712 : vector<1x128xi1> to vector<1x128xi1>
    %815 = vector.broadcast %814 : vector<1x128xi1> to vector<8x128xi1>
    %816 = arith.select %815, %756, %692 : vector<8x128xi1>, vector<8x128xf32>
    %817 = vector.shape_cast %712 : vector<1x128xi1> to vector<1x128xi1>
    %818 = vector.broadcast %817 : vector<1x128xi1> to vector<8x128xi1>
    %819 = arith.select %818, %761, %695 : vector<8x128xi1>, vector<8x128xf32>
    %820 = vector.shape_cast %712 : vector<1x128xi1> to vector<1x128xi1>
    %821 = vector.broadcast %820 : vector<1x128xi1> to vector<8x128xi1>
    %822 = arith.select %821, %766, %698 : vector<8x128xi1>, vector<8x128xf32>
    %823 = vector.shape_cast %712 : vector<1x128xi1> to vector<1x128xi1>
    %824 = vector.broadcast %823 : vector<1x128xi1> to vector<8x128xi1>
    %825 = arith.select %824, %771, %701 : vector<8x128xi1>, vector<8x128xf32>
    %826 = vector.shape_cast %712 : vector<1x128xi1> to vector<1x128xi1>
    %827 = vector.broadcast %826 : vector<1x128xi1> to vector<8x128xi1>
    %828 = arith.select %827, %780, %704 : vector<8x128xi1>, vector<8x128xf32>
    %829 = vector.shape_cast %712 : vector<1x128xi1> to vector<1x128xi1>
    %830 = vector.broadcast %829 : vector<1x128xi1> to vector<8x128xi1>
    %831 = arith.select %830, %789, %707 : vector<8x128xi1>, vector<8x128xf32>
    %832 = vector.shape_cast %712 : vector<1x128xi1> to vector<1x128xi1>
    %833 = vector.broadcast %832 : vector<1x128xi1> to vector<8x128xi1>
    %834 = arith.select %833, %798, %710 : vector<8x128xi1>, vector<8x128xf32>
    %cst_36 = arith.constant 7.000000e+00 : f32
    %835 = vector.broadcast %cst_36 : f32 to vector<1x128xf32>
    %836 = arith.cmpf oeq, %84, %835 : vector<1x128xf32>
    %837 = tpu.concatenate %801, %804, %807, %810, %813, %816, %819, %822, %825, %828, %831, %834 in 0 : vector<8x128xf32>, vector<8x128xf32>, vector<8x128xf32>, vector<8x128xf32>, vector<8x128xf32>, vector<8x128xf32>, vector<8x128xf32>, vector<8x128xf32>, vector<8x128xf32>, vector<8x128xf32>, vector<8x128xf32>, vector<8x128xf32> -> vector<96x128xf32>
    %cst_37 = arith.constant dense<0.000000e+00> : vector<96x128xf32>
    %838 = tpu.matmul %837, %83, %cst_37 {dimension_numbers = #tpu.dot_dimension_numbers<[1], [0], [0], [1], [0, 0, 1, 1], [], []>} : vector<96x128xf32>, vector<128x128xf32>, vector<96x128xf32> -> vector<96x128xf32>
    %839 = vector.extract_strided_slice %838 {offsets = [0, 0], sizes = [8, 128], strides = [1, 1]} : vector<96x128xf32> to vector<8x128xf32>
    %840 = vector.extract_strided_slice %838 {offsets = [8, 0], sizes = [8, 128], strides = [1, 1]} : vector<96x128xf32> to vector<8x128xf32>
    %841 = vector.extract_strided_slice %838 {offsets = [16, 0], sizes = [8, 128], strides = [1, 1]} : vector<96x128xf32> to vector<8x128xf32>
    %842 = vector.extract_strided_slice %838 {offsets = [24, 0], sizes = [8, 128], strides = [1, 1]} : vector<96x128xf32> to vector<8x128xf32>
    %843 = vector.extract_strided_slice %838 {offsets = [32, 0], sizes = [8, 128], strides = [1, 1]} : vector<96x128xf32> to vector<8x128xf32>
    %844 = vector.extract_strided_slice %838 {offsets = [40, 0], sizes = [8, 128], strides = [1, 1]} : vector<96x128xf32> to vector<8x128xf32>
    %845 = vector.extract_strided_slice %838 {offsets = [48, 0], sizes = [8, 128], strides = [1, 1]} : vector<96x128xf32> to vector<8x128xf32>
    %846 = vector.extract_strided_slice %838 {offsets = [56, 0], sizes = [8, 128], strides = [1, 1]} : vector<96x128xf32> to vector<8x128xf32>
    %847 = vector.extract_strided_slice %838 {offsets = [64, 0], sizes = [8, 128], strides = [1, 1]} : vector<96x128xf32> to vector<8x128xf32>
    %848 = vector.extract_strided_slice %838 {offsets = [72, 0], sizes = [8, 128], strides = [1, 1]} : vector<96x128xf32> to vector<8x128xf32>
    %849 = vector.extract_strided_slice %838 {offsets = [80, 0], sizes = [8, 128], strides = [1, 1]} : vector<96x128xf32> to vector<8x128xf32>
    %850 = vector.extract_strided_slice %838 {offsets = [88, 0], sizes = [8, 128], strides = [1, 1]} : vector<96x128xf32> to vector<8x128xf32>
    %851 = arith.mulf %839, %43 : vector<8x128xf32>
    %852 = arith.mulf %840, %55 : vector<8x128xf32>
    %853 = arith.addf %851, %852 : vector<8x128xf32>
    %854 = arith.mulf %841, %69 : vector<8x128xf32>
    %855 = arith.addf %853, %854 : vector<8x128xf32>
    %856 = arith.mulf %839, %47 : vector<8x128xf32>
    %857 = arith.mulf %840, %61 : vector<8x128xf32>
    %858 = arith.addf %856, %857 : vector<8x128xf32>
    %859 = arith.mulf %841, %73 : vector<8x128xf32>
    %860 = arith.addf %858, %859 : vector<8x128xf32>
    %861 = arith.mulf %839, %51 : vector<8x128xf32>
    %862 = arith.mulf %840, %65 : vector<8x128xf32>
    %863 = arith.addf %861, %862 : vector<8x128xf32>
    %864 = arith.mulf %841, %79 : vector<8x128xf32>
    %865 = arith.addf %863, %864 : vector<8x128xf32>
    %866 = arith.mulf %842, %43 : vector<8x128xf32>
    %867 = arith.mulf %843, %55 : vector<8x128xf32>
    %868 = arith.addf %866, %867 : vector<8x128xf32>
    %869 = arith.mulf %844, %69 : vector<8x128xf32>
    %870 = arith.addf %868, %869 : vector<8x128xf32>
    %871 = arith.mulf %842, %47 : vector<8x128xf32>
    %872 = arith.mulf %843, %61 : vector<8x128xf32>
    %873 = arith.addf %871, %872 : vector<8x128xf32>
    %874 = arith.mulf %844, %73 : vector<8x128xf32>
    %875 = arith.addf %873, %874 : vector<8x128xf32>
    %876 = arith.mulf %842, %51 : vector<8x128xf32>
    %877 = arith.mulf %843, %65 : vector<8x128xf32>
    %878 = arith.addf %876, %877 : vector<8x128xf32>
    %879 = arith.mulf %844, %79 : vector<8x128xf32>
    %880 = arith.addf %878, %879 : vector<8x128xf32>
    %881 = arith.mulf %845, %43 : vector<8x128xf32>
    %882 = arith.mulf %846, %55 : vector<8x128xf32>
    %883 = arith.addf %881, %882 : vector<8x128xf32>
    %884 = arith.mulf %847, %69 : vector<8x128xf32>
    %885 = arith.addf %883, %884 : vector<8x128xf32>
    %886 = arith.mulf %845, %47 : vector<8x128xf32>
    %887 = arith.mulf %846, %61 : vector<8x128xf32>
    %888 = arith.addf %886, %887 : vector<8x128xf32>
    %889 = arith.mulf %847, %73 : vector<8x128xf32>
    %890 = arith.addf %888, %889 : vector<8x128xf32>
    %891 = arith.mulf %845, %51 : vector<8x128xf32>
    %892 = arith.mulf %846, %65 : vector<8x128xf32>
    %893 = arith.addf %891, %892 : vector<8x128xf32>
    %894 = arith.mulf %847, %79 : vector<8x128xf32>
    %895 = arith.addf %893, %894 : vector<8x128xf32>
    %896 = vector.broadcast %80 : vector<1x128xf32> to vector<8x128xf32>
    %897 = arith.mulf %839, %896 : vector<8x128xf32>
    %898 = vector.broadcast %81 : vector<1x128xf32> to vector<8x128xf32>
    %899 = arith.mulf %840, %898 : vector<8x128xf32>
    %900 = arith.addf %897, %899 : vector<8x128xf32>
    %901 = vector.broadcast %82 : vector<1x128xf32> to vector<8x128xf32>
    %902 = arith.mulf %841, %901 : vector<8x128xf32>
    %903 = arith.addf %900, %902 : vector<8x128xf32>
    %904 = arith.addf %903, %848 : vector<8x128xf32>
    %905 = vector.broadcast %80 : vector<1x128xf32> to vector<8x128xf32>
    %906 = arith.mulf %842, %905 : vector<8x128xf32>
    %907 = vector.broadcast %81 : vector<1x128xf32> to vector<8x128xf32>
    %908 = arith.mulf %843, %907 : vector<8x128xf32>
    %909 = arith.addf %906, %908 : vector<8x128xf32>
    %910 = vector.broadcast %82 : vector<1x128xf32> to vector<8x128xf32>
    %911 = arith.mulf %844, %910 : vector<8x128xf32>
    %912 = arith.addf %909, %911 : vector<8x128xf32>
    %913 = arith.addf %912, %849 : vector<8x128xf32>
    %914 = vector.broadcast %80 : vector<1x128xf32> to vector<8x128xf32>
    %915 = arith.mulf %845, %914 : vector<8x128xf32>
    %916 = vector.broadcast %81 : vector<1x128xf32> to vector<8x128xf32>
    %917 = arith.mulf %846, %916 : vector<8x128xf32>
    %918 = arith.addf %915, %917 : vector<8x128xf32>
    %919 = vector.broadcast %82 : vector<1x128xf32> to vector<8x128xf32>
    %920 = arith.mulf %847, %919 : vector<8x128xf32>
    %921 = arith.addf %918, %920 : vector<8x128xf32>
    %922 = arith.addf %921, %850 : vector<8x128xf32>
    %923 = vector.shape_cast %836 : vector<1x128xi1> to vector<1x128xi1>
    %924 = vector.broadcast %923 : vector<1x128xi1> to vector<8x128xi1>
    %925 = arith.select %924, %855, %801 : vector<8x128xi1>, vector<8x128xf32>
    %926 = vector.shape_cast %836 : vector<1x128xi1> to vector<1x128xi1>
    %927 = vector.broadcast %926 : vector<1x128xi1> to vector<8x128xi1>
    %928 = arith.select %927, %860, %804 : vector<8x128xi1>, vector<8x128xf32>
    %929 = vector.shape_cast %836 : vector<1x128xi1> to vector<1x128xi1>
    %930 = vector.broadcast %929 : vector<1x128xi1> to vector<8x128xi1>
    %931 = arith.select %930, %865, %807 : vector<8x128xi1>, vector<8x128xf32>
    %932 = vector.shape_cast %836 : vector<1x128xi1> to vector<1x128xi1>
    %933 = vector.broadcast %932 : vector<1x128xi1> to vector<8x128xi1>
    %934 = arith.select %933, %870, %810 : vector<8x128xi1>, vector<8x128xf32>
    %935 = vector.shape_cast %836 : vector<1x128xi1> to vector<1x128xi1>
    %936 = vector.broadcast %935 : vector<1x128xi1> to vector<8x128xi1>
    %937 = arith.select %936, %875, %813 : vector<8x128xi1>, vector<8x128xf32>
    %938 = vector.shape_cast %836 : vector<1x128xi1> to vector<1x128xi1>
    %939 = vector.broadcast %938 : vector<1x128xi1> to vector<8x128xi1>
    %940 = arith.select %939, %880, %816 : vector<8x128xi1>, vector<8x128xf32>
    %941 = vector.shape_cast %836 : vector<1x128xi1> to vector<1x128xi1>
    %942 = vector.broadcast %941 : vector<1x128xi1> to vector<8x128xi1>
    %943 = arith.select %942, %885, %819 : vector<8x128xi1>, vector<8x128xf32>
    %944 = vector.shape_cast %836 : vector<1x128xi1> to vector<1x128xi1>
    %945 = vector.broadcast %944 : vector<1x128xi1> to vector<8x128xi1>
    %946 = arith.select %945, %890, %822 : vector<8x128xi1>, vector<8x128xf32>
    %947 = vector.shape_cast %836 : vector<1x128xi1> to vector<1x128xi1>
    %948 = vector.broadcast %947 : vector<1x128xi1> to vector<8x128xi1>
    %949 = arith.select %948, %895, %825 : vector<8x128xi1>, vector<8x128xf32>
    %950 = vector.shape_cast %836 : vector<1x128xi1> to vector<1x128xi1>
    %951 = vector.broadcast %950 : vector<1x128xi1> to vector<8x128xi1>
    %952 = arith.select %951, %904, %828 : vector<8x128xi1>, vector<8x128xf32>
    %953 = vector.shape_cast %836 : vector<1x128xi1> to vector<1x128xi1>
    %954 = vector.broadcast %953 : vector<1x128xi1> to vector<8x128xi1>
    %955 = arith.select %954, %913, %831 : vector<8x128xi1>, vector<8x128xf32>
    %956 = vector.shape_cast %836 : vector<1x128xi1> to vector<1x128xi1>
    %957 = vector.broadcast %956 : vector<1x128xi1> to vector<8x128xi1>
    %958 = arith.select %957, %922, %834 : vector<8x128xi1>, vector<8x128xf32>
    %cst_38 = arith.constant 8.000000e+00 : f32
    %959 = vector.broadcast %cst_38 : f32 to vector<1x128xf32>
    %960 = arith.cmpf oeq, %84, %959 : vector<1x128xf32>
    %961 = tpu.concatenate %925, %928, %931, %934, %937, %940, %943, %946, %949, %952, %955, %958 in 0 : vector<8x128xf32>, vector<8x128xf32>, vector<8x128xf32>, vector<8x128xf32>, vector<8x128xf32>, vector<8x128xf32>, vector<8x128xf32>, vector<8x128xf32>, vector<8x128xf32>, vector<8x128xf32>, vector<8x128xf32>, vector<8x128xf32> -> vector<96x128xf32>
    %cst_39 = arith.constant dense<0.000000e+00> : vector<96x128xf32>
    %962 = tpu.matmul %961, %83, %cst_39 {dimension_numbers = #tpu.dot_dimension_numbers<[1], [0], [0], [1], [0, 0, 1, 1], [], []>} : vector<96x128xf32>, vector<128x128xf32>, vector<96x128xf32> -> vector<96x128xf32>
    %963 = vector.extract_strided_slice %962 {offsets = [0, 0], sizes = [8, 128], strides = [1, 1]} : vector<96x128xf32> to vector<8x128xf32>
    %964 = vector.extract_strided_slice %962 {offsets = [8, 0], sizes = [8, 128], strides = [1, 1]} : vector<96x128xf32> to vector<8x128xf32>
    %965 = vector.extract_strided_slice %962 {offsets = [16, 0], sizes = [8, 128], strides = [1, 1]} : vector<96x128xf32> to vector<8x128xf32>
    %966 = vector.extract_strided_slice %962 {offsets = [24, 0], sizes = [8, 128], strides = [1, 1]} : vector<96x128xf32> to vector<8x128xf32>
    %967 = vector.extract_strided_slice %962 {offsets = [32, 0], sizes = [8, 128], strides = [1, 1]} : vector<96x128xf32> to vector<8x128xf32>
    %968 = vector.extract_strided_slice %962 {offsets = [40, 0], sizes = [8, 128], strides = [1, 1]} : vector<96x128xf32> to vector<8x128xf32>
    %969 = vector.extract_strided_slice %962 {offsets = [48, 0], sizes = [8, 128], strides = [1, 1]} : vector<96x128xf32> to vector<8x128xf32>
    %970 = vector.extract_strided_slice %962 {offsets = [56, 0], sizes = [8, 128], strides = [1, 1]} : vector<96x128xf32> to vector<8x128xf32>
    %971 = vector.extract_strided_slice %962 {offsets = [64, 0], sizes = [8, 128], strides = [1, 1]} : vector<96x128xf32> to vector<8x128xf32>
    %972 = vector.extract_strided_slice %962 {offsets = [72, 0], sizes = [8, 128], strides = [1, 1]} : vector<96x128xf32> to vector<8x128xf32>
    %973 = vector.extract_strided_slice %962 {offsets = [80, 0], sizes = [8, 128], strides = [1, 1]} : vector<96x128xf32> to vector<8x128xf32>
    %974 = vector.extract_strided_slice %962 {offsets = [88, 0], sizes = [8, 128], strides = [1, 1]} : vector<96x128xf32> to vector<8x128xf32>
    %975 = arith.mulf %963, %43 : vector<8x128xf32>
    %976 = arith.mulf %964, %55 : vector<8x128xf32>
    %977 = arith.addf %975, %976 : vector<8x128xf32>
    %978 = arith.mulf %965, %69 : vector<8x128xf32>
    %979 = arith.addf %977, %978 : vector<8x128xf32>
    %980 = arith.mulf %963, %47 : vector<8x128xf32>
    %981 = arith.mulf %964, %61 : vector<8x128xf32>
    %982 = arith.addf %980, %981 : vector<8x128xf32>
    %983 = arith.mulf %965, %73 : vector<8x128xf32>
    %984 = arith.addf %982, %983 : vector<8x128xf32>
    %985 = arith.mulf %963, %51 : vector<8x128xf32>
    %986 = arith.mulf %964, %65 : vector<8x128xf32>
    %987 = arith.addf %985, %986 : vector<8x128xf32>
    %988 = arith.mulf %965, %79 : vector<8x128xf32>
    %989 = arith.addf %987, %988 : vector<8x128xf32>
    %990 = arith.mulf %966, %43 : vector<8x128xf32>
    %991 = arith.mulf %967, %55 : vector<8x128xf32>
    %992 = arith.addf %990, %991 : vector<8x128xf32>
    %993 = arith.mulf %968, %69 : vector<8x128xf32>
    %994 = arith.addf %992, %993 : vector<8x128xf32>
    %995 = arith.mulf %966, %47 : vector<8x128xf32>
    %996 = arith.mulf %967, %61 : vector<8x128xf32>
    %997 = arith.addf %995, %996 : vector<8x128xf32>
    %998 = arith.mulf %968, %73 : vector<8x128xf32>
    %999 = arith.addf %997, %998 : vector<8x128xf32>
    %1000 = arith.mulf %966, %51 : vector<8x128xf32>
    %1001 = arith.mulf %967, %65 : vector<8x128xf32>
    %1002 = arith.addf %1000, %1001 : vector<8x128xf32>
    %1003 = arith.mulf %968, %79 : vector<8x128xf32>
    %1004 = arith.addf %1002, %1003 : vector<8x128xf32>
    %1005 = arith.mulf %969, %43 : vector<8x128xf32>
    %1006 = arith.mulf %970, %55 : vector<8x128xf32>
    %1007 = arith.addf %1005, %1006 : vector<8x128xf32>
    %1008 = arith.mulf %971, %69 : vector<8x128xf32>
    %1009 = arith.addf %1007, %1008 : vector<8x128xf32>
    %1010 = arith.mulf %969, %47 : vector<8x128xf32>
    %1011 = arith.mulf %970, %61 : vector<8x128xf32>
    %1012 = arith.addf %1010, %1011 : vector<8x128xf32>
    %1013 = arith.mulf %971, %73 : vector<8x128xf32>
    %1014 = arith.addf %1012, %1013 : vector<8x128xf32>
    %1015 = arith.mulf %969, %51 : vector<8x128xf32>
    %1016 = arith.mulf %970, %65 : vector<8x128xf32>
    %1017 = arith.addf %1015, %1016 : vector<8x128xf32>
    %1018 = arith.mulf %971, %79 : vector<8x128xf32>
    %1019 = arith.addf %1017, %1018 : vector<8x128xf32>
    %1020 = vector.broadcast %80 : vector<1x128xf32> to vector<8x128xf32>
    %1021 = arith.mulf %963, %1020 : vector<8x128xf32>
    %1022 = vector.broadcast %81 : vector<1x128xf32> to vector<8x128xf32>
    %1023 = arith.mulf %964, %1022 : vector<8x128xf32>
    %1024 = arith.addf %1021, %1023 : vector<8x128xf32>
    %1025 = vector.broadcast %82 : vector<1x128xf32> to vector<8x128xf32>
    %1026 = arith.mulf %965, %1025 : vector<8x128xf32>
    %1027 = arith.addf %1024, %1026 : vector<8x128xf32>
    %1028 = arith.addf %1027, %972 : vector<8x128xf32>
    %1029 = vector.broadcast %80 : vector<1x128xf32> to vector<8x128xf32>
    %1030 = arith.mulf %966, %1029 : vector<8x128xf32>
    %1031 = vector.broadcast %81 : vector<1x128xf32> to vector<8x128xf32>
    %1032 = arith.mulf %967, %1031 : vector<8x128xf32>
    %1033 = arith.addf %1030, %1032 : vector<8x128xf32>
    %1034 = vector.broadcast %82 : vector<1x128xf32> to vector<8x128xf32>
    %1035 = arith.mulf %968, %1034 : vector<8x128xf32>
    %1036 = arith.addf %1033, %1035 : vector<8x128xf32>
    %1037 = arith.addf %1036, %973 : vector<8x128xf32>
    %1038 = vector.broadcast %80 : vector<1x128xf32> to vector<8x128xf32>
    %1039 = arith.mulf %969, %1038 : vector<8x128xf32>
    %1040 = vector.broadcast %81 : vector<1x128xf32> to vector<8x128xf32>
    %1041 = arith.mulf %970, %1040 : vector<8x128xf32>
    %1042 = arith.addf %1039, %1041 : vector<8x128xf32>
    %1043 = vector.broadcast %82 : vector<1x128xf32> to vector<8x128xf32>
    %1044 = arith.mulf %971, %1043 : vector<8x128xf32>
    %1045 = arith.addf %1042, %1044 : vector<8x128xf32>
    %1046 = arith.addf %1045, %974 : vector<8x128xf32>
    %1047 = vector.shape_cast %960 : vector<1x128xi1> to vector<1x128xi1>
    %1048 = vector.broadcast %1047 : vector<1x128xi1> to vector<8x128xi1>
    %1049 = arith.select %1048, %979, %925 : vector<8x128xi1>, vector<8x128xf32>
    %1050 = vector.shape_cast %960 : vector<1x128xi1> to vector<1x128xi1>
    %1051 = vector.broadcast %1050 : vector<1x128xi1> to vector<8x128xi1>
    %1052 = arith.select %1051, %984, %928 : vector<8x128xi1>, vector<8x128xf32>
    %1053 = vector.shape_cast %960 : vector<1x128xi1> to vector<1x128xi1>
    %1054 = vector.broadcast %1053 : vector<1x128xi1> to vector<8x128xi1>
    %1055 = arith.select %1054, %989, %931 : vector<8x128xi1>, vector<8x128xf32>
    %1056 = vector.shape_cast %960 : vector<1x128xi1> to vector<1x128xi1>
    %1057 = vector.broadcast %1056 : vector<1x128xi1> to vector<8x128xi1>
    %1058 = arith.select %1057, %994, %934 : vector<8x128xi1>, vector<8x128xf32>
    %1059 = vector.shape_cast %960 : vector<1x128xi1> to vector<1x128xi1>
    %1060 = vector.broadcast %1059 : vector<1x128xi1> to vector<8x128xi1>
    %1061 = arith.select %1060, %999, %937 : vector<8x128xi1>, vector<8x128xf32>
    %1062 = vector.shape_cast %960 : vector<1x128xi1> to vector<1x128xi1>
    %1063 = vector.broadcast %1062 : vector<1x128xi1> to vector<8x128xi1>
    %1064 = arith.select %1063, %1004, %940 : vector<8x128xi1>, vector<8x128xf32>
    %1065 = vector.shape_cast %960 : vector<1x128xi1> to vector<1x128xi1>
    %1066 = vector.broadcast %1065 : vector<1x128xi1> to vector<8x128xi1>
    %1067 = arith.select %1066, %1009, %943 : vector<8x128xi1>, vector<8x128xf32>
    %1068 = vector.shape_cast %960 : vector<1x128xi1> to vector<1x128xi1>
    %1069 = vector.broadcast %1068 : vector<1x128xi1> to vector<8x128xi1>
    %1070 = arith.select %1069, %1014, %946 : vector<8x128xi1>, vector<8x128xf32>
    %1071 = vector.shape_cast %960 : vector<1x128xi1> to vector<1x128xi1>
    %1072 = vector.broadcast %1071 : vector<1x128xi1> to vector<8x128xi1>
    %1073 = arith.select %1072, %1019, %949 : vector<8x128xi1>, vector<8x128xf32>
    %1074 = vector.shape_cast %960 : vector<1x128xi1> to vector<1x128xi1>
    %1075 = vector.broadcast %1074 : vector<1x128xi1> to vector<8x128xi1>
    %1076 = arith.select %1075, %1028, %952 : vector<8x128xi1>, vector<8x128xf32>
    %1077 = vector.shape_cast %960 : vector<1x128xi1> to vector<1x128xi1>
    %1078 = vector.broadcast %1077 : vector<1x128xi1> to vector<8x128xi1>
    %1079 = arith.select %1078, %1037, %955 : vector<8x128xi1>, vector<8x128xf32>
    %1080 = vector.shape_cast %960 : vector<1x128xi1> to vector<1x128xi1>
    %1081 = vector.broadcast %1080 : vector<1x128xi1> to vector<8x128xi1>
    %1082 = arith.select %1081, %1046, %958 : vector<8x128xi1>, vector<8x128xf32>
    %c0_40 = arith.constant 0 : index
    %c0_41 = arith.constant 0 : index
    %1083 = vector.load %arg3[%c0_40, %c0_41] : memref<3x128xf32, #tpu.memory_space<vmem>>, vector<1x128xf32>
    %c1_42 = arith.constant 1 : index
    %c0_43 = arith.constant 0 : index
    %1084 = vector.load %arg3[%c1_42, %c0_43] : memref<3x128xf32, #tpu.memory_space<vmem>>, vector<1x128xf32>
    %c2_44 = arith.constant 2 : index
    %c0_45 = arith.constant 0 : index
    %1085 = vector.load %arg3[%c2_44, %c0_45] : memref<3x128xf32, #tpu.memory_space<vmem>>, vector<1x128xf32>
    %1086 = vector.broadcast %1083 : vector<1x128xf32> to vector<8x128xf32>
    %1087 = arith.mulf %1049, %1086 : vector<8x128xf32>
    %1088 = vector.broadcast %1084 : vector<1x128xf32> to vector<8x128xf32>
    %1089 = arith.mulf %1052, %1088 : vector<8x128xf32>
    %1090 = arith.addf %1087, %1089 : vector<8x128xf32>
    %1091 = vector.broadcast %1085 : vector<1x128xf32> to vector<8x128xf32>
    %1092 = arith.mulf %1055, %1091 : vector<8x128xf32>
    %1093 = arith.addf %1090, %1092 : vector<8x128xf32>
    %1094 = arith.subf %1076, %1093 : vector<8x128xf32>
    %1095 = vector.broadcast %1083 : vector<1x128xf32> to vector<8x128xf32>
    %1096 = arith.mulf %1058, %1095 : vector<8x128xf32>
    %1097 = vector.broadcast %1084 : vector<1x128xf32> to vector<8x128xf32>
    %1098 = arith.mulf %1061, %1097 : vector<8x128xf32>
    %1099 = arith.addf %1096, %1098 : vector<8x128xf32>
    %1100 = vector.broadcast %1085 : vector<1x128xf32> to vector<8x128xf32>
    %1101 = arith.mulf %1064, %1100 : vector<8x128xf32>
    %1102 = arith.addf %1099, %1101 : vector<8x128xf32>
    %1103 = arith.subf %1079, %1102 : vector<8x128xf32>
    %1104 = vector.broadcast %1083 : vector<1x128xf32> to vector<8x128xf32>
    %1105 = arith.mulf %1067, %1104 : vector<8x128xf32>
    %1106 = vector.broadcast %1084 : vector<1x128xf32> to vector<8x128xf32>
    %1107 = arith.mulf %1070, %1106 : vector<8x128xf32>
    %1108 = arith.addf %1105, %1107 : vector<8x128xf32>
    %1109 = vector.broadcast %1085 : vector<1x128xf32> to vector<8x128xf32>
    %1110 = arith.mulf %1073, %1109 : vector<8x128xf32>
    %1111 = arith.addf %1108, %1110 : vector<8x128xf32>
    %1112 = arith.subf %1082, %1111 : vector<8x128xf32>
    %c0_46 = arith.constant 0 : index
    %c0_47 = arith.constant 0 : index
    %1113 = vector.load %arg4[%c0_46, %c0_47] : memref<16x128xf32, #tpu.memory_space<vmem>>, vector<1x128xf32>
    %1114 = vector.broadcast %1113 : vector<1x128xf32> to vector<8x128xf32>
    %1115 = arith.mulf %1049, %1114 : vector<8x128xf32>
    %c4 = arith.constant 4 : index
    %c0_48 = arith.constant 0 : index
    %1116 = vector.load %arg4[%c4, %c0_48] : memref<16x128xf32, #tpu.memory_space<vmem>>, vector<1x128xf32>
    %1117 = vector.broadcast %1116 : vector<1x128xf32> to vector<8x128xf32>
    %1118 = arith.mulf %1052, %1117 : vector<8x128xf32>
    %1119 = arith.addf %1115, %1118 : vector<8x128xf32>
    %c8 = arith.constant 8 : index
    %c0_49 = arith.constant 0 : index
    %1120 = vector.load %arg4[%c8, %c0_49] : memref<16x128xf32, #tpu.memory_space<vmem>>, vector<1x128xf32>
    %1121 = vector.broadcast %1120 : vector<1x128xf32> to vector<8x128xf32>
    %1122 = arith.mulf %1055, %1121 : vector<8x128xf32>
    %1123 = arith.addf %1119, %1122 : vector<8x128xf32>
    %c12 = arith.constant 12 : index
    %c0_50 = arith.constant 0 : index
    %1124 = vector.load %arg4[%c12, %c0_50] : memref<16x128xf32, #tpu.memory_space<vmem>>, vector<1x128xf32>
    %1125 = vector.broadcast %1124 : vector<1x128xf32> to vector<8x128xf32>
    %1126 = arith.mulf %1094, %1125 : vector<8x128xf32>
    %1127 = arith.addf %1123, %1126 : vector<8x128xf32>
    %c0_51 = arith.constant 0 : index
    %c0_52 = arith.constant 0 : index
    %c0_53 = arith.constant 0 : index
    %1128 = vector.load %arg7[%c0_51, %c0_52, %c0_53] : memref<16x8x128xf32, #tpu.memory_space<vmem>>, vector<1x8x128xf32>
    %1129 = vector.shape_cast %1128 : vector<1x8x128xf32> to vector<8x128xf32>
    %1130 = vector.shape_cast %1127 : vector<8x128xf32> to vector<1x8x128xf32>
    tpu.vector_store %arg7[%c0_51, %c0_52, %c0_53], %1130 {strides = array<i32>} : memref<16x8x128xf32, #tpu.memory_space<vmem>>, vector<1x8x128xf32>,
    %c1_54 = arith.constant 1 : index
    %c0_55 = arith.constant 0 : index
    %1131 = vector.load %arg4[%c1_54, %c0_55] : memref<16x128xf32, #tpu.memory_space<vmem>>, vector<1x128xf32>
    %1132 = vector.broadcast %1131 : vector<1x128xf32> to vector<8x128xf32>
    %1133 = arith.mulf %1049, %1132 : vector<8x128xf32>
    %c5 = arith.constant 5 : index
    %c0_56 = arith.constant 0 : index
    %1134 = vector.load %arg4[%c5, %c0_56] : memref<16x128xf32, #tpu.memory_space<vmem>>, vector<1x128xf32>
    %1135 = vector.broadcast %1134 : vector<1x128xf32> to vector<8x128xf32>
    %1136 = arith.mulf %1052, %1135 : vector<8x128xf32>
    %1137 = arith.addf %1133, %1136 : vector<8x128xf32>
    %c9 = arith.constant 9 : index
    %c0_57 = arith.constant 0 : index
    %1138 = vector.load %arg4[%c9, %c0_57] : memref<16x128xf32, #tpu.memory_space<vmem>>, vector<1x128xf32>
    %1139 = vector.broadcast %1138 : vector<1x128xf32> to vector<8x128xf32>
    %1140 = arith.mulf %1055, %1139 : vector<8x128xf32>
    %1141 = arith.addf %1137, %1140 : vector<8x128xf32>
    %c13 = arith.constant 13 : index
    %c0_58 = arith.constant 0 : index
    %1142 = vector.load %arg4[%c13, %c0_58] : memref<16x128xf32, #tpu.memory_space<vmem>>, vector<1x128xf32>
    %1143 = vector.broadcast %1142 : vector<1x128xf32> to vector<8x128xf32>
    %1144 = arith.mulf %1094, %1143 : vector<8x128xf32>
    %1145 = arith.addf %1141, %1144 : vector<8x128xf32>
    %c1_59 = arith.constant 1 : index
    %c0_60 = arith.constant 0 : index
    %c0_61 = arith.constant 0 : index
    %1146 = vector.load %arg7[%c1_59, %c0_60, %c0_61] : memref<16x8x128xf32, #tpu.memory_space<vmem>>, vector<1x8x128xf32>
    %1147 = vector.shape_cast %1146 : vector<1x8x128xf32> to vector<8x128xf32>
    %1148 = vector.shape_cast %1145 : vector<8x128xf32> to vector<1x8x128xf32>
    tpu.vector_store %arg7[%c1_59, %c0_60, %c0_61], %1148 {strides = array<i32>} : memref<16x8x128xf32, #tpu.memory_space<vmem>>, vector<1x8x128xf32>,
    %c2_62 = arith.constant 2 : index
    %c0_63 = arith.constant 0 : index
    %1149 = vector.load %arg4[%c2_62, %c0_63] : memref<16x128xf32, #tpu.memory_space<vmem>>, vector<1x128xf32>
    %1150 = vector.broadcast %1149 : vector<1x128xf32> to vector<8x128xf32>
    %1151 = arith.mulf %1049, %1150 : vector<8x128xf32>
    %c6 = arith.constant 6 : index
    %c0_64 = arith.constant 0 : index
    %1152 = vector.load %arg4[%c6, %c0_64] : memref<16x128xf32, #tpu.memory_space<vmem>>, vector<1x128xf32>
    %1153 = vector.broadcast %1152 : vector<1x128xf32> to vector<8x128xf32>
    %1154 = arith.mulf %1052, %1153 : vector<8x128xf32>
    %1155 = arith.addf %1151, %1154 : vector<8x128xf32>
    %c10 = arith.constant 10 : index
    %c0_65 = arith.constant 0 : index
    %1156 = vector.load %arg4[%c10, %c0_65] : memref<16x128xf32, #tpu.memory_space<vmem>>, vector<1x128xf32>
    %1157 = vector.broadcast %1156 : vector<1x128xf32> to vector<8x128xf32>
    %1158 = arith.mulf %1055, %1157 : vector<8x128xf32>
    %1159 = arith.addf %1155, %1158 : vector<8x128xf32>
    %c14 = arith.constant 14 : index
    %c0_66 = arith.constant 0 : index
    %1160 = vector.load %arg4[%c14, %c0_66] : memref<16x128xf32, #tpu.memory_space<vmem>>, vector<1x128xf32>
    %1161 = vector.broadcast %1160 : vector<1x128xf32> to vector<8x128xf32>
    %1162 = arith.mulf %1094, %1161 : vector<8x128xf32>
    %1163 = arith.addf %1159, %1162 : vector<8x128xf32>
    %c2_67 = arith.constant 2 : index
    %c0_68 = arith.constant 0 : index
    %c0_69 = arith.constant 0 : index
    %1164 = vector.load %arg7[%c2_67, %c0_68, %c0_69] : memref<16x8x128xf32, #tpu.memory_space<vmem>>, vector<1x8x128xf32>
    %1165 = vector.shape_cast %1164 : vector<1x8x128xf32> to vector<8x128xf32>
    %1166 = vector.shape_cast %1163 : vector<8x128xf32> to vector<1x8x128xf32>
    tpu.vector_store %arg7[%c2_67, %c0_68, %c0_69], %1166 {strides = array<i32>} : memref<16x8x128xf32, #tpu.memory_space<vmem>>, vector<1x8x128xf32>,
    %c3 = arith.constant 3 : index
    %c0_70 = arith.constant 0 : index
    %1167 = vector.load %arg4[%c3, %c0_70] : memref<16x128xf32, #tpu.memory_space<vmem>>, vector<1x128xf32>
    %1168 = vector.broadcast %1167 : vector<1x128xf32> to vector<8x128xf32>
    %1169 = arith.mulf %1049, %1168 : vector<8x128xf32>
    %c7 = arith.constant 7 : index
    %c0_71 = arith.constant 0 : index
    %1170 = vector.load %arg4[%c7, %c0_71] : memref<16x128xf32, #tpu.memory_space<vmem>>, vector<1x128xf32>
    %1171 = vector.broadcast %1170 : vector<1x128xf32> to vector<8x128xf32>
    %1172 = arith.mulf %1052, %1171 : vector<8x128xf32>
    %1173 = arith.addf %1169, %1172 : vector<8x128xf32>
    %c11 = arith.constant 11 : index
    %c0_72 = arith.constant 0 : index
    %1174 = vector.load %arg4[%c11, %c0_72] : memref<16x128xf32, #tpu.memory_space<vmem>>, vector<1x128xf32>
    %1175 = vector.broadcast %1174 : vector<1x128xf32> to vector<8x128xf32>
    %1176 = arith.mulf %1055, %1175 : vector<8x128xf32>
    %1177 = arith.addf %1173, %1176 : vector<8x128xf32>
    %c15 = arith.constant 15 : index
    %c0_73 = arith.constant 0 : index
    %1178 = vector.load %arg4[%c15, %c0_73] : memref<16x128xf32, #tpu.memory_space<vmem>>, vector<1x128xf32>
    %1179 = vector.broadcast %1178 : vector<1x128xf32> to vector<8x128xf32>
    %1180 = arith.mulf %1094, %1179 : vector<8x128xf32>
    %1181 = arith.addf %1177, %1180 : vector<8x128xf32>
    %c3_74 = arith.constant 3 : index
    %c0_75 = arith.constant 0 : index
    %c0_76 = arith.constant 0 : index
    %1182 = vector.load %arg7[%c3_74, %c0_75, %c0_76] : memref<16x8x128xf32, #tpu.memory_space<vmem>>, vector<1x8x128xf32>
    %1183 = vector.shape_cast %1182 : vector<1x8x128xf32> to vector<8x128xf32>
    %1184 = vector.shape_cast %1181 : vector<8x128xf32> to vector<1x8x128xf32>
    tpu.vector_store %arg7[%c3_74, %c0_75, %c0_76], %1184 {strides = array<i32>} : memref<16x8x128xf32, #tpu.memory_space<vmem>>, vector<1x8x128xf32>,
    %c0_77 = arith.constant 0 : index
    %c0_78 = arith.constant 0 : index
    %1185 = vector.load %arg4[%c0_77, %c0_78] : memref<16x128xf32, #tpu.memory_space<vmem>>, vector<1x128xf32>
    %1186 = vector.broadcast %1185 : vector<1x128xf32> to vector<8x128xf32>
    %1187 = arith.mulf %1058, %1186 : vector<8x128xf32>
    %c4_79 = arith.constant 4 : index
    %c0_80 = arith.constant 0 : index
    %1188 = vector.load %arg4[%c4_79, %c0_80] : memref<16x128xf32, #tpu.memory_space<vmem>>, vector<1x128xf32>
    %1189 = vector.broadcast %1188 : vector<1x128xf32> to vector<8x128xf32>
    %1190 = arith.mulf %1061, %1189 : vector<8x128xf32>
    %1191 = arith.addf %1187, %1190 : vector<8x128xf32>
    %c8_81 = arith.constant 8 : index
    %c0_82 = arith.constant 0 : index
    %1192 = vector.load %arg4[%c8_81, %c0_82] : memref<16x128xf32, #tpu.memory_space<vmem>>, vector<1x128xf32>
    %1193 = vector.broadcast %1192 : vector<1x128xf32> to vector<8x128xf32>
    %1194 = arith.mulf %1064, %1193 : vector<8x128xf32>
    %1195 = arith.addf %1191, %1194 : vector<8x128xf32>
    %c12_83 = arith.constant 12 : index
    %c0_84 = arith.constant 0 : index
    %1196 = vector.load %arg4[%c12_83, %c0_84] : memref<16x128xf32, #tpu.memory_space<vmem>>, vector<1x128xf32>
    %1197 = vector.broadcast %1196 : vector<1x128xf32> to vector<8x128xf32>
    %1198 = arith.mulf %1103, %1197 : vector<8x128xf32>
    %1199 = arith.addf %1195, %1198 : vector<8x128xf32>
    %c4_85 = arith.constant 4 : index
    %c0_86 = arith.constant 0 : index
    %c0_87 = arith.constant 0 : index
    %1200 = vector.load %arg7[%c4_85, %c0_86, %c0_87] : memref<16x8x128xf32, #tpu.memory_space<vmem>>, vector<1x8x128xf32>
    %1201 = vector.shape_cast %1200 : vector<1x8x128xf32> to vector<8x128xf32>
    %1202 = vector.shape_cast %1199 : vector<8x128xf32> to vector<1x8x128xf32>
    tpu.vector_store %arg7[%c4_85, %c0_86, %c0_87], %1202 {strides = array<i32>} : memref<16x8x128xf32, #tpu.memory_space<vmem>>, vector<1x8x128xf32>,
    %c1_88 = arith.constant 1 : index
    %c0_89 = arith.constant 0 : index
    %1203 = vector.load %arg4[%c1_88, %c0_89] : memref<16x128xf32, #tpu.memory_space<vmem>>, vector<1x128xf32>
    %1204 = vector.broadcast %1203 : vector<1x128xf32> to vector<8x128xf32>
    %1205 = arith.mulf %1058, %1204 : vector<8x128xf32>
    %c5_90 = arith.constant 5 : index
    %c0_91 = arith.constant 0 : index
    %1206 = vector.load %arg4[%c5_90, %c0_91] : memref<16x128xf32, #tpu.memory_space<vmem>>, vector<1x128xf32>
    %1207 = vector.broadcast %1206 : vector<1x128xf32> to vector<8x128xf32>
    %1208 = arith.mulf %1061, %1207 : vector<8x128xf32>
    %1209 = arith.addf %1205, %1208 : vector<8x128xf32>
    %c9_92 = arith.constant 9 : index
    %c0_93 = arith.constant 0 : index
    %1210 = vector.load %arg4[%c9_92, %c0_93] : memref<16x128xf32, #tpu.memory_space<vmem>>, vector<1x128xf32>
    %1211 = vector.broadcast %1210 : vector<1x128xf32> to vector<8x128xf32>
    %1212 = arith.mulf %1064, %1211 : vector<8x128xf32>
    %1213 = arith.addf %1209, %1212 : vector<8x128xf32>
    %c13_94 = arith.constant 13 : index
    %c0_95 = arith.constant 0 : index
    %1214 = vector.load %arg4[%c13_94, %c0_95] : memref<16x128xf32, #tpu.memory_space<vmem>>, vector<1x128xf32>
    %1215 = vector.broadcast %1214 : vector<1x128xf32> to vector<8x128xf32>
    %1216 = arith.mulf %1103, %1215 : vector<8x128xf32>
    %1217 = arith.addf %1213, %1216 : vector<8x128xf32>
    %c5_96 = arith.constant 5 : index
    %c0_97 = arith.constant 0 : index
    %c0_98 = arith.constant 0 : index
    %1218 = vector.load %arg7[%c5_96, %c0_97, %c0_98] : memref<16x8x128xf32, #tpu.memory_space<vmem>>, vector<1x8x128xf32>
    %1219 = vector.shape_cast %1218 : vector<1x8x128xf32> to vector<8x128xf32>
    %1220 = vector.shape_cast %1217 : vector<8x128xf32> to vector<1x8x128xf32>
    tpu.vector_store %arg7[%c5_96, %c0_97, %c0_98], %1220 {strides = array<i32>} : memref<16x8x128xf32, #tpu.memory_space<vmem>>, vector<1x8x128xf32>,
    %c2_99 = arith.constant 2 : index
    %c0_100 = arith.constant 0 : index
    %1221 = vector.load %arg4[%c2_99, %c0_100] : memref<16x128xf32, #tpu.memory_space<vmem>>, vector<1x128xf32>
    %1222 = vector.broadcast %1221 : vector<1x128xf32> to vector<8x128xf32>
    %1223 = arith.mulf %1058, %1222 : vector<8x128xf32>
    %c6_101 = arith.constant 6 : index
    %c0_102 = arith.constant 0 : index
    %1224 = vector.load %arg4[%c6_101, %c0_102] : memref<16x128xf32, #tpu.memory_space<vmem>>, vector<1x128xf32>
    %1225 = vector.broadcast %1224 : vector<1x128xf32> to vector<8x128xf32>
    %1226 = arith.mulf %1061, %1225 : vector<8x128xf32>
    %1227 = arith.addf %1223, %1226 : vector<8x128xf32>
    %c10_103 = arith.constant 10 : index
    %c0_104 = arith.constant 0 : index
    %1228 = vector.load %arg4[%c10_103, %c0_104] : memref<16x128xf32, #tpu.memory_space<vmem>>, vector<1x128xf32>
    %1229 = vector.broadcast %1228 : vector<1x128xf32> to vector<8x128xf32>
    %1230 = arith.mulf %1064, %1229 : vector<8x128xf32>
    %1231 = arith.addf %1227, %1230 : vector<8x128xf32>
    %c14_105 = arith.constant 14 : index
    %c0_106 = arith.constant 0 : index
    %1232 = vector.load %arg4[%c14_105, %c0_106] : memref<16x128xf32, #tpu.memory_space<vmem>>, vector<1x128xf32>
    %1233 = vector.broadcast %1232 : vector<1x128xf32> to vector<8x128xf32>
    %1234 = arith.mulf %1103, %1233 : vector<8x128xf32>
    %1235 = arith.addf %1231, %1234 : vector<8x128xf32>
    %c6_107 = arith.constant 6 : index
    %c0_108 = arith.constant 0 : index
    %c0_109 = arith.constant 0 : index
    %1236 = vector.load %arg7[%c6_107, %c0_108, %c0_109] : memref<16x8x128xf32, #tpu.memory_space<vmem>>, vector<1x8x128xf32>
    %1237 = vector.shape_cast %1236 : vector<1x8x128xf32> to vector<8x128xf32>
    %1238 = vector.shape_cast %1235 : vector<8x128xf32> to vector<1x8x128xf32>
    tpu.vector_store %arg7[%c6_107, %c0_108, %c0_109], %1238 {strides = array<i32>} : memref<16x8x128xf32, #tpu.memory_space<vmem>>, vector<1x8x128xf32>,
    %c3_110 = arith.constant 3 : index
    %c0_111 = arith.constant 0 : index
    %1239 = vector.load %arg4[%c3_110, %c0_111] : memref<16x128xf32, #tpu.memory_space<vmem>>, vector<1x128xf32>
    %1240 = vector.broadcast %1239 : vector<1x128xf32> to vector<8x128xf32>
    %1241 = arith.mulf %1058, %1240 : vector<8x128xf32>
    %c7_112 = arith.constant 7 : index
    %c0_113 = arith.constant 0 : index
    %1242 = vector.load %arg4[%c7_112, %c0_113] : memref<16x128xf32, #tpu.memory_space<vmem>>, vector<1x128xf32>
    %1243 = vector.broadcast %1242 : vector<1x128xf32> to vector<8x128xf32>
    %1244 = arith.mulf %1061, %1243 : vector<8x128xf32>
    %1245 = arith.addf %1241, %1244 : vector<8x128xf32>
    %c11_114 = arith.constant 11 : index
    %c0_115 = arith.constant 0 : index
    %1246 = vector.load %arg4[%c11_114, %c0_115] : memref<16x128xf32, #tpu.memory_space<vmem>>, vector<1x128xf32>
    %1247 = vector.broadcast %1246 : vector<1x128xf32> to vector<8x128xf32>
    %1248 = arith.mulf %1064, %1247 : vector<8x128xf32>
    %1249 = arith.addf %1245, %1248 : vector<8x128xf32>
    %c15_116 = arith.constant 15 : index
    %c0_117 = arith.constant 0 : index
    %1250 = vector.load %arg4[%c15_116, %c0_117] : memref<16x128xf32, #tpu.memory_space<vmem>>, vector<1x128xf32>
    %1251 = vector.broadcast %1250 : vector<1x128xf32> to vector<8x128xf32>
    %1252 = arith.mulf %1103, %1251 : vector<8x128xf32>
    %1253 = arith.addf %1249, %1252 : vector<8x128xf32>
    %c7_118 = arith.constant 7 : index
    %c0_119 = arith.constant 0 : index
    %c0_120 = arith.constant 0 : index
    %1254 = vector.load %arg7[%c7_118, %c0_119, %c0_120] : memref<16x8x128xf32, #tpu.memory_space<vmem>>, vector<1x8x128xf32>
    %1255 = vector.shape_cast %1254 : vector<1x8x128xf32> to vector<8x128xf32>
    %1256 = vector.shape_cast %1253 : vector<8x128xf32> to vector<1x8x128xf32>
    tpu.vector_store %arg7[%c7_118, %c0_119, %c0_120], %1256 {strides = array<i32>} : memref<16x8x128xf32, #tpu.memory_space<vmem>>, vector<1x8x128xf32>,
    %c0_121 = arith.constant 0 : index
    %c0_122 = arith.constant 0 : index
    %1257 = vector.load %arg4[%c0_121, %c0_122] : memref<16x128xf32, #tpu.memory_space<vmem>>, vector<1x128xf32>
    %1258 = vector.broadcast %1257 : vector<1x128xf32> to vector<8x128xf32>
    %1259 = arith.mulf %1067, %1258 : vector<8x128xf32>
    %c4_123 = arith.constant 4 : index
    %c0_124 = arith.constant 0 : index
    %1260 = vector.load %arg4[%c4_123, %c0_124] : memref<16x128xf32, #tpu.memory_space<vmem>>, vector<1x128xf32>
    %1261 = vector.broadcast %1260 : vector<1x128xf32> to vector<8x128xf32>
    %1262 = arith.mulf %1070, %1261 : vector<8x128xf32>
    %1263 = arith.addf %1259, %1262 : vector<8x128xf32>
    %c8_125 = arith.constant 8 : index
    %c0_126 = arith.constant 0 : index
    %1264 = vector.load %arg4[%c8_125, %c0_126] : memref<16x128xf32, #tpu.memory_space<vmem>>, vector<1x128xf32>
    %1265 = vector.broadcast %1264 : vector<1x128xf32> to vector<8x128xf32>
    %1266 = arith.mulf %1073, %1265 : vector<8x128xf32>
    %1267 = arith.addf %1263, %1266 : vector<8x128xf32>
    %c12_127 = arith.constant 12 : index
    %c0_128 = arith.constant 0 : index
    %1268 = vector.load %arg4[%c12_127, %c0_128] : memref<16x128xf32, #tpu.memory_space<vmem>>, vector<1x128xf32>
    %1269 = vector.broadcast %1268 : vector<1x128xf32> to vector<8x128xf32>
    %1270 = arith.mulf %1112, %1269 : vector<8x128xf32>
    %1271 = arith.addf %1267, %1270 : vector<8x128xf32>
    %c8_129 = arith.constant 8 : index
    %c0_130 = arith.constant 0 : index
    %c0_131 = arith.constant 0 : index
    %1272 = vector.load %arg7[%c8_129, %c0_130, %c0_131] : memref<16x8x128xf32, #tpu.memory_space<vmem>>, vector<1x8x128xf32>
    %1273 = vector.shape_cast %1272 : vector<1x8x128xf32> to vector<8x128xf32>
    %1274 = vector.shape_cast %1271 : vector<8x128xf32> to vector<1x8x128xf32>
    tpu.vector_store %arg7[%c8_129, %c0_130, %c0_131], %1274 {strides = array<i32>} : memref<16x8x128xf32, #tpu.memory_space<vmem>>, vector<1x8x128xf32>,
    %c1_132 = arith.constant 1 : index
    %c0_133 = arith.constant 0 : index
    %1275 = vector.load %arg4[%c1_132, %c0_133] : memref<16x128xf32, #tpu.memory_space<vmem>>, vector<1x128xf32>
    %1276 = vector.broadcast %1275 : vector<1x128xf32> to vector<8x128xf32>
    %1277 = arith.mulf %1067, %1276 : vector<8x128xf32>
    %c5_134 = arith.constant 5 : index
    %c0_135 = arith.constant 0 : index
    %1278 = vector.load %arg4[%c5_134, %c0_135] : memref<16x128xf32, #tpu.memory_space<vmem>>, vector<1x128xf32>
    %1279 = vector.broadcast %1278 : vector<1x128xf32> to vector<8x128xf32>
    %1280 = arith.mulf %1070, %1279 : vector<8x128xf32>
    %1281 = arith.addf %1277, %1280 : vector<8x128xf32>
    %c9_136 = arith.constant 9 : index
    %c0_137 = arith.constant 0 : index
    %1282 = vector.load %arg4[%c9_136, %c0_137] : memref<16x128xf32, #tpu.memory_space<vmem>>, vector<1x128xf32>
    %1283 = vector.broadcast %1282 : vector<1x128xf32> to vector<8x128xf32>
    %1284 = arith.mulf %1073, %1283 : vector<8x128xf32>
    %1285 = arith.addf %1281, %1284 : vector<8x128xf32>
    %c13_138 = arith.constant 13 : index
    %c0_139 = arith.constant 0 : index
    %1286 = vector.load %arg4[%c13_138, %c0_139] : memref<16x128xf32, #tpu.memory_space<vmem>>, vector<1x128xf32>
    %1287 = vector.broadcast %1286 : vector<1x128xf32> to vector<8x128xf32>
    %1288 = arith.mulf %1112, %1287 : vector<8x128xf32>
    %1289 = arith.addf %1285, %1288 : vector<8x128xf32>
    %c9_140 = arith.constant 9 : index
    %c0_141 = arith.constant 0 : index
    %c0_142 = arith.constant 0 : index
    %1290 = vector.load %arg7[%c9_140, %c0_141, %c0_142] : memref<16x8x128xf32, #tpu.memory_space<vmem>>, vector<1x8x128xf32>
    %1291 = vector.shape_cast %1290 : vector<1x8x128xf32> to vector<8x128xf32>
    %1292 = vector.shape_cast %1289 : vector<8x128xf32> to vector<1x8x128xf32>
    tpu.vector_store %arg7[%c9_140, %c0_141, %c0_142], %1292 {strides = array<i32>} : memref<16x8x128xf32, #tpu.memory_space<vmem>>, vector<1x8x128xf32>,
    %c2_143 = arith.constant 2 : index
    %c0_144 = arith.constant 0 : index
    %1293 = vector.load %arg4[%c2_143, %c0_144] : memref<16x128xf32, #tpu.memory_space<vmem>>, vector<1x128xf32>
    %1294 = vector.broadcast %1293 : vector<1x128xf32> to vector<8x128xf32>
    %1295 = arith.mulf %1067, %1294 : vector<8x128xf32>
    %c6_145 = arith.constant 6 : index
    %c0_146 = arith.constant 0 : index
    %1296 = vector.load %arg4[%c6_145, %c0_146] : memref<16x128xf32, #tpu.memory_space<vmem>>, vector<1x128xf32>
    %1297 = vector.broadcast %1296 : vector<1x128xf32> to vector<8x128xf32>
    %1298 = arith.mulf %1070, %1297 : vector<8x128xf32>
    %1299 = arith.addf %1295, %1298 : vector<8x128xf32>
    %c10_147 = arith.constant 10 : index
    %c0_148 = arith.constant 0 : index
    %1300 = vector.load %arg4[%c10_147, %c0_148] : memref<16x128xf32, #tpu.memory_space<vmem>>, vector<1x128xf32>
    %1301 = vector.broadcast %1300 : vector<1x128xf32> to vector<8x128xf32>
    %1302 = arith.mulf %1073, %1301 : vector<8x128xf32>
    %1303 = arith.addf %1299, %1302 : vector<8x128xf32>
    %c14_149 = arith.constant 14 : index
    %c0_150 = arith.constant 0 : index
    %1304 = vector.load %arg4[%c14_149, %c0_150] : memref<16x128xf32, #tpu.memory_space<vmem>>, vector<1x128xf32>
    %1305 = vector.broadcast %1304 : vector<1x128xf32> to vector<8x128xf32>
    %1306 = arith.mulf %1112, %1305 : vector<8x128xf32>
    %1307 = arith.addf %1303, %1306 : vector<8x128xf32>
    %c10_151 = arith.constant 10 : index
    %c0_152 = arith.constant 0 : index
    %c0_153 = arith.constant 0 : index
    %1308 = vector.load %arg7[%c10_151, %c0_152, %c0_153] : memref<16x8x128xf32, #tpu.memory_space<vmem>>, vector<1x8x128xf32>
    %1309 = vector.shape_cast %1308 : vector<1x8x128xf32> to vector<8x128xf32>
    %1310 = vector.shape_cast %1307 : vector<8x128xf32> to vector<1x8x128xf32>
    tpu.vector_store %arg7[%c10_151, %c0_152, %c0_153], %1310 {strides = array<i32>} : memref<16x8x128xf32, #tpu.memory_space<vmem>>, vector<1x8x128xf32>,
    %c3_154 = arith.constant 3 : index
    %c0_155 = arith.constant 0 : index
    %1311 = vector.load %arg4[%c3_154, %c0_155] : memref<16x128xf32, #tpu.memory_space<vmem>>, vector<1x128xf32>
    %1312 = vector.broadcast %1311 : vector<1x128xf32> to vector<8x128xf32>
    %1313 = arith.mulf %1067, %1312 : vector<8x128xf32>
    %c7_156 = arith.constant 7 : index
    %c0_157 = arith.constant 0 : index
    %1314 = vector.load %arg4[%c7_156, %c0_157] : memref<16x128xf32, #tpu.memory_space<vmem>>, vector<1x128xf32>
    %1315 = vector.broadcast %1314 : vector<1x128xf32> to vector<8x128xf32>
    %1316 = arith.mulf %1070, %1315 : vector<8x128xf32>
    %1317 = arith.addf %1313, %1316 : vector<8x128xf32>
    %c11_158 = arith.constant 11 : index
    %c0_159 = arith.constant 0 : index
    %1318 = vector.load %arg4[%c11_158, %c0_159] : memref<16x128xf32, #tpu.memory_space<vmem>>, vector<1x128xf32>
    %1319 = vector.broadcast %1318 : vector<1x128xf32> to vector<8x128xf32>
    %1320 = arith.mulf %1073, %1319 : vector<8x128xf32>
    %1321 = arith.addf %1317, %1320 : vector<8x128xf32>
    %c15_160 = arith.constant 15 : index
    %c0_161 = arith.constant 0 : index
    %1322 = vector.load %arg4[%c15_160, %c0_161] : memref<16x128xf32, #tpu.memory_space<vmem>>, vector<1x128xf32>
    %1323 = vector.broadcast %1322 : vector<1x128xf32> to vector<8x128xf32>
    %1324 = arith.mulf %1112, %1323 : vector<8x128xf32>
    %1325 = arith.addf %1321, %1324 : vector<8x128xf32>
    %c11_162 = arith.constant 11 : index
    %c0_163 = arith.constant 0 : index
    %c0_164 = arith.constant 0 : index
    %1326 = vector.load %arg7[%c11_162, %c0_163, %c0_164] : memref<16x8x128xf32, #tpu.memory_space<vmem>>, vector<1x8x128xf32>
    %1327 = vector.shape_cast %1326 : vector<1x8x128xf32> to vector<8x128xf32>
    %1328 = vector.shape_cast %1325 : vector<8x128xf32> to vector<1x8x128xf32>
    tpu.vector_store %arg7[%c11_162, %c0_163, %c0_164], %1328 {strides = array<i32>} : memref<16x8x128xf32, #tpu.memory_space<vmem>>, vector<1x8x128xf32>,
    %c12_165 = arith.constant 12 : index
    %c0_166 = arith.constant 0 : index
    %1329 = vector.load %arg4[%c12_165, %c0_166] : memref<16x128xf32, #tpu.memory_space<vmem>>, vector<1x128xf32>
    %1330 = vector.shape_cast %1329 : vector<1x128xf32> to vector<1x128xf32>
    %1331 = vector.broadcast %1330 : vector<1x128xf32> to vector<8x128xf32>
    %c12_167 = arith.constant 12 : index
    %c0_168 = arith.constant 0 : index
    %c0_169 = arith.constant 0 : index
    %1332 = vector.load %arg7[%c12_167, %c0_168, %c0_169] : memref<16x8x128xf32, #tpu.memory_space<vmem>>, vector<1x8x128xf32>
    %1333 = vector.shape_cast %1332 : vector<1x8x128xf32> to vector<8x128xf32>
    %1334 = vector.shape_cast %1331 : vector<8x128xf32> to vector<1x8x128xf32>
    tpu.vector_store %arg7[%c12_167, %c0_168, %c0_169], %1334 {strides = array<i32>} : memref<16x8x128xf32, #tpu.memory_space<vmem>>, vector<1x8x128xf32>,
    %c13_170 = arith.constant 13 : index
    %c0_171 = arith.constant 0 : index
    %1335 = vector.load %arg4[%c13_170, %c0_171] : memref<16x128xf32, #tpu.memory_space<vmem>>, vector<1x128xf32>
    %1336 = vector.shape_cast %1335 : vector<1x128xf32> to vector<1x128xf32>
    %1337 = vector.broadcast %1336 : vector<1x128xf32> to vector<8x128xf32>
    %c13_172 = arith.constant 13 : index
    %c0_173 = arith.constant 0 : index
    %c0_174 = arith.constant 0 : index
    %1338 = vector.load %arg7[%c13_172, %c0_173, %c0_174] : memref<16x8x128xf32, #tpu.memory_space<vmem>>, vector<1x8x128xf32>
    %1339 = vector.shape_cast %1338 : vector<1x8x128xf32> to vector<8x128xf32>
    %1340 = vector.shape_cast %1337 : vector<8x128xf32> to vector<1x8x128xf32>
    tpu.vector_store %arg7[%c13_172, %c0_173, %c0_174], %1340 {strides = array<i32>} : memref<16x8x128xf32, #tpu.memory_space<vmem>>, vector<1x8x128xf32>,
    %c14_175 = arith.constant 14 : index
    %c0_176 = arith.constant 0 : index
    %1341 = vector.load %arg4[%c14_175, %c0_176] : memref<16x128xf32, #tpu.memory_space<vmem>>, vector<1x128xf32>
    %1342 = vector.shape_cast %1341 : vector<1x128xf32> to vector<1x128xf32>
    %1343 = vector.broadcast %1342 : vector<1x128xf32> to vector<8x128xf32>
    %c14_177 = arith.constant 14 : index
    %c0_178 = arith.constant 0 : index
    %c0_179 = arith.constant 0 : index
    %1344 = vector.load %arg7[%c14_177, %c0_178, %c0_179] : memref<16x8x128xf32, #tpu.memory_space<vmem>>, vector<1x8x128xf32>
    %1345 = vector.shape_cast %1344 : vector<1x8x128xf32> to vector<8x128xf32>
    %1346 = vector.shape_cast %1343 : vector<8x128xf32> to vector<1x8x128xf32>
    tpu.vector_store %arg7[%c14_177, %c0_178, %c0_179], %1346 {strides = array<i32>} : memref<16x8x128xf32, #tpu.memory_space<vmem>>, vector<1x8x128xf32>,
    %c15_180 = arith.constant 15 : index
    %c0_181 = arith.constant 0 : index
    %1347 = vector.load %arg4[%c15_180, %c0_181] : memref<16x128xf32, #tpu.memory_space<vmem>>, vector<1x128xf32>
    %1348 = vector.shape_cast %1347 : vector<1x128xf32> to vector<1x128xf32>
    %1349 = vector.broadcast %1348 : vector<1x128xf32> to vector<8x128xf32>
    %c15_182 = arith.constant 15 : index
    %c0_183 = arith.constant 0 : index
    %c0_184 = arith.constant 0 : index
    %1350 = vector.load %arg7[%c15_182, %c0_183, %c0_184] : memref<16x8x128xf32, #tpu.memory_space<vmem>>, vector<1x8x128xf32>
    %1351 = vector.shape_cast %1350 : vector<1x8x128xf32> to vector<8x128xf32>
    %1352 = vector.shape_cast %1349 : vector<8x128xf32> to vector<1x8x128xf32>
    tpu.vector_store %arg7[%c15_182, %c0_183, %c0_184], %1352 {strides = array<i32>} : memref<16x8x128xf32, #tpu.memory_space<vmem>>, vector<1x8x128xf32>,
    return
  }
  func.func @transform_0(%arg0: i32) -> (i32, i32, i32) {
    %c0_i32 = arith.constant 0 : i32
    %c0_i32_0 = arith.constant 0 : i32
    %c0_i32_1 = arith.constant 0 : i32
    %c0_i32_2 = arith.constant 0 : i32
    return %c0_i32, %c0_i32_0, %c0_i32_1 : i32, i32, i32
  }
  func.func @transform_1(%arg0: i32) -> (i32, i32) {
    %c0_i32 = arith.constant 0 : i32
    %c0_i32_0 = arith.constant 0 : i32
    %c0_i32_1 = arith.constant 0 : i32
    return %c0_i32, %c0_i32_0 : i32, i32
  }
  func.func @transform_2(%arg0: i32) -> (i32, i32) {
    %c0_i32 = arith.constant 0 : i32
    %c0_i32_0 = arith.constant 0 : i32
    %c0_i32_1 = arith.constant 0 : i32
    return %c0_i32, %c0_i32_0 : i32, i32
  }
  func.func @transform_3(%arg0: i32) -> (i32, i32) {
    %c0_i32 = arith.constant 0 : i32
    %c0_i32_0 = arith.constant 0 : i32
    %c0_i32_1 = arith.constant 0 : i32
    return %c0_i32, %c0_i32_0 : i32, i32
  }
  func.func @transform_4(%arg0: i32) -> (i32, i32) {
    %c0_i32 = arith.constant 0 : i32
    %c0_i32_0 = arith.constant 0 : i32
    %c0_i32_1 = arith.constant 0 : i32
    return %c0_i32, %c0_i32_0 : i32, i32
  }
  func.func @transform_5(%arg0: i32) -> (i32, i32) {
    %c0_i32 = arith.constant 0 : i32
    %c0_i32_0 = arith.constant 0 : i32
    %c0_i32_1 = arith.constant 0 : i32
    return %c0_i32, %c0_i32_0 : i32, i32
  }
  func.func @transform_6(%arg0: i32) -> (i32, i32, i32) {
    %c0_i32 = arith.constant 0 : i32
    %c0_i32_0 = arith.constant 0 : i32
    %c0_i32_1 = arith.constant 0 : i32
    %c0_i32_2 = arith.constant 0 : i32
    return %c0_i32, %c0_i32_0, %c0_i32_1 : i32, i32, i32
  }
}

</mosaic_0001>

<llo_original>
// kernel: tpu_custom_call.1
$region0: #{tpu_custom_call.1}
  #allocation0 [shape = 'u32[]', space=smem, size = 0x4, offset = 0x4, fixed_abs, tag = 'smem constant byte address 0x4 - core index']
  #allocation1 [shape = 'u32[144,128]{1,0:T(1,128)}', space=vmem, size = 0x12000, scoped, tag = 'internal scratch']
  %s0 = inlined_call_operand.hbm [shape: f32[3,8,128], index: 0, kind: input, shape index: {}]
  %s1 = inlined_call_operand.hbm [shape: f32[3,128], index: 1, kind: input, shape index: {}]
  %s2 = inlined_call_operand.vmem [shape: f32[3,128], index: 2, kind: input, shape index: {}]
  %s3 = inlined_call_operand.hbm [shape: f32[16,128], index: 3, kind: input, shape index: {}]
  %s4 = inlined_call_operand.hbm [shape: f32[128,128], index: 4, kind: input, shape index: {}]
  %s5 = inlined_call_operand.vmem [shape: f32[1,128], index: 5, kind: input, shape index: {}]
  %s6 = inlined_call_operand.hbm [shape: f32[16,8,128], index: 6, kind: output, shape index: {}]
  %s7 = sld [smem:[#allocation0]]
  $region50: #{tpu_custom_call.1} parent=0
    _
  %s9 = ssub.s32 1, %s7
  %s10 = scalar_select 0, %s9, %s7
  $region1: #{tpu_custom_call.1} parent=0
    #allocation2 [shape = 'u8[12288]{0}', space=vmem, size = 0x3000, scoped, tag = 'input window, operand 0, single buffered']
    #allocation3 [shape = 's32[1]{0}', space=sflag, size = 0x4, scoped, tag = 'scoped memory for tpu_custom_call.1']
    #allocation4 [shape = 's32[1]{0}', space=sflag, size = 0x4, scoped, tag = 'scoped memory for tpu_custom_call.1']
    #allocation5 [shape = 'u8[2048]{0}', space=vmem, size = 0x800, scoped, tag = 'input window, operand 1, single buffered']
    #allocation6 [shape = 's32[1]{0}', space=sflag, size = 0x4, scoped, tag = 'scoped memory for tpu_custom_call.1']
    #allocation7 [shape = 'u8[8192]{0}', space=vmem, size = 0x2000, scoped, tag = 'input window, operand 3, single buffered']
    #allocation8 [shape = 'u8[65536]{0}', space=vmem, size = 0x10000, scoped, tag = 'input window, operand 4, single buffered']
    #allocation9 [shape = 's32[1]{0}', space=sflag, size = 0x4, scoped, tag = 'scoped memory for tpu_custom_call.1']
    #allocation10 [shape = 'u8[65536]{0}', space=vmem, size = 0x10000, scoped, tag = 'output window, operand 0, single buffered']
    %11 = vsyncpa [#allocation3], 0
    %12 = vsyncpa [#allocation6], 0
    %13 = vsyncpa [#allocation9], 0
    %14 = vsyncpa [#allocation4], 0
    // Predicated region
    $region2: #{tpu_custom_call.1} parent=1 // pred_check
      _
    $region3: #{tpu_custom_call.1} parent=1 // pred_check_branch
      %16 = sbr.rel (0) target = $region5
    $region4: #{tpu_custom_call.1} parent=1 // pred_region
      %s18 = ssub.s32 384, 384
      %19 = vsyncadd [#allocation3], %s18
      %s20 = sshll.u32 [#allocation2], 4
      %s21 = int_to_ptr.vmem [resolvable:$true] %s20
      %26 = dma.hbm_to_vmem [thread:$0]  %s0, 384, %s21, [#allocation3], 128, 128, 8
    $region5: #{tpu_custom_call.1} parent=1 // pred_fallthru
      _
    // Predicated region
    $region6: #{tpu_custom_call.1} parent=1 // pred_check
      _
    $region7: #{tpu_custom_call.1} parent=1 // pred_check_branch
      %28 = sbr.rel (0) target = $region9
    $region8: #{tpu_custom_call.1} parent=1 // pred_region
      %s30 = ssub.s32 64, 64
      %31 = vsyncadd [#allocation6], %s30
      %s33 = sshll.u32 [#allocation5], 4
      %s34 = int_to_ptr.vmem [resolvable:$true] %s33
      %36 = dma.hbm_to_vmem [thread:$0]  %s1, 64, %s34, [#allocation6]
    $region9: #{tpu_custom_call.1} parent=1 // pred_fallthru
      _
    // Predicated region
    $region10: #{tpu_custom_call.1} parent=1 // pred_check
      _
    $region11: #{tpu_custom_call.1} parent=1 // pred_check_branch
      %38 = sbr.rel (0) target = $region13
    $region12: #{tpu_custom_call.1} parent=1 // pred_region
      _
    $region13: #{tpu_custom_call.1} parent=1 // pred_fallthru
      _
    // Predicated region
    $region14: #{tpu_custom_call.1} parent=1 // pred_check
      _
    $region15: #{tpu_custom_call.1} parent=1 // pred_check_branch
      %40 = sbr.rel (0) target = $region17
    $region16: #{tpu_custom_call.1} parent=1 // pred_region
      %s42 = ssub.s32 256, 256
      %43 = vsyncadd [#allocation6], %s42
      %s44 = sshll.u32 [#allocation7], 4
      %s45 = int_to_ptr.vmem [resolvable:$true] %s44
      %50 = dma.hbm_to_vmem [thread:$0]  %s3, 256, %s45, [#allocation6], 128, 128, 8
    $region17: #{tpu_custom_call.1} parent=1 // pred_fallthru
      _
    // Predicated region
    $region18: #{tpu_custom_call.1} parent=1 // pred_check
      _
    $region19: #{tpu_custom_call.1} parent=1 // pred_check_branch
      %52 = sbr.rel (0) target = $region21
    $region20: #{tpu_custom_call.1} parent=1 // pred_region
      %s54 = ssub.s32 2048, 2048
      %55 = vsyncadd [#allocation9], %s54
      %s56 = sshll.u32 [#allocation8], 4
      %s57 = int_to_ptr.vmem [resolvable:$true] %s56
      %62 = dma.hbm_to_vmem [thread:$0]  %s4, 2048, %s57, [#allocation9], 128, 128, 8
    $region21: #{tpu_custom_call.1} parent=1 // pred_fallthru
      _
    // Predicated region
    $region22: #{tpu_custom_call.1} parent=1 // pred_check
      _
    $region23: #{tpu_custom_call.1} parent=1 // pred_check_branch
      %64 = sbr.rel (0) target = $region25
    $region24: #{tpu_custom_call.1} parent=1 // pred_region
      _
    $region25: #{tpu_custom_call.1} parent=1 // pred_fallthru
      _
    // Predicated region
    $region26: #{tpu_custom_call.1} parent=1 // pred_check
      _
    $region27: #{tpu_custom_call.1} parent=1 // pred_check_branch
      %66 = sbr.rel (0) target = $region29
    $region28: #{tpu_custom_call.1} parent=1 // pred_region
      %67 = dma.done [#allocation3], 384
    $region29: #{tpu_custom_call.1} parent=1 // pred_fallthru
      _
    // Predicated region
    $region30: #{tpu_custom_call.1} parent=1 // pred_check
      _
    $region31: #{tpu_custom_call.1} parent=1 // pred_check_branch
      %69 = sbr.rel (0) target = $region33
    $region32: #{tpu_custom_call.1} parent=1 // pred_region
      %70 = dma.done [#allocation6], 64
    $region33: #{tpu_custom_call.1} parent=1 // pred_fallthru
      _
    // Predicated region
    $region34: #{tpu_custom_call.1} parent=1 // pred_check
      _
    $region35: #{tpu_custom_call.1} parent=1 // pred_check_branch
      %72 = sbr.rel (0) target = $region37
    $region36: #{tpu_custom_call.1} parent=1 // pred_region
      %73 = dma.done [#allocation6], 256
    $region37: #{tpu_custom_call.1} parent=1 // pred_fallthru
      _
    // Predicated region
    $region38: #{tpu_custom_call.1} parent=1 // pred_check
      _
    $region39: #{tpu_custom_call.1} parent=1 // pred_check_branch
      %75 = sbr.rel (0) target = $region41
    $region40: #{tpu_custom_call.1} parent=1 // pred_region
      %76 = dma.done [#allocation9], 2048
    $region41: #{tpu_custom_call.1} parent=1 // pred_fallthru
      _
    %v77 = vld [vmem:[#allocation2] sm:$0xff]
    %s78 = scalar_lea.vmem [#allocation2], 8
    %v79 = vld [vmem:[%s78] sm:$0xff]
    %s80 = scalar_lea.vmem [#allocation2], 16
    %v81 = vld [vmem:[%s80] sm:$0xff]
    %v82 = vmul.f32 %v77, %v77
    %v83 = vmul.f32 %v79, %v79
    %v84 = vadd.f32 %v82, %v83
    %v85 = vmul.f32 %v81, %v81
    %v86 = vadd.f32 %v84, %v85
    %v87 = vrsqrt.pop %v86
    %v88 = vmul.f32 %v86, %v87
    %vm89 = vcmp.eq.f32.partialorder %v86, inf
    %v90 = vsel %vm89, %v86, %v88
    %vm91 = vcmp.eq.f32.partialorder %v86, 0.0
    %v92 = vand.u32 %v86, 2147483648
    %v93 = vsel %vm91, %v92, %v90
    %v94 = vmul.f32 %v93, 0.5
    %vm95 = vcmp.lt.f32.partialorder %v93, 1e-06
    %v96 = vsel %vm95, 1.0, %v93
    %v97 = vrcp.pop 48.0
    %v98 = vmul.f32 %v86, %v97
    %v99 = vsub.f32 0.5, %v98
    %v100 = vand.u32 2147483647, %v94
    %vm101 = vcmp.le.f32.partialorder %v100, 0.7853982
    %vm102 = vcmp.lt.s32.totalorder %v94, 0
    %v103 = vand.u32 %v94, 2139095040
    %v104 = vshrl.u32 %v103, 23
    %v105 = vsub.s32 %v104, 127
    %v106 = vand.u32 2147483647, %v94
    %v107 = vand.u32 %v106, 8388607
    %v108 = vor.u32 %v107, 8388608
    %v109 = vsub.s32 0, %v108
    %v110 = vadd.s32 %v105, 1
    %vm111 = vcmp.gt.s32.totalorder %v110, 0
    %v112 = vsel %vm111, %v110, 0
    %v113 = vshrl.u32 %v112, 5
    %v114 = vand.u32 %v112, 31
    %v115 = vsub.s32 32, %v114
    %v116 = vshrl.u32 683565275, %v115
    %v117 = vshll.u32 683565275, %v114
    %v118 = vshrl.u32 2475754826, %v115
    %v119 = vor.u32 %v117, %v118
    %v120 = vshll.u32 2475754826, %v114
    %v121 = vshrl.u32 2131351028, %v115
    %v122 = vor.u32 %v120, %v121
    %v123 = vshll.u32 2131351028, %v114
    %v124 = vshrl.u32 2102212464, %v115
    %v125 = vor.u32 %v123, %v124
    %v126 = vshll.u32 2102212464, %v114
    %v127 = vshrl.u32 920167782, %v115
    %v128 = vor.u32 %v126, %v127
    %v129 = vshll.u32 920167782, %v114
    %v130 = vshrl.u32 1326507024, %v115
    %v131 = vor.u32 %v129, %v130
    %vm132 = vcmp.lt.s32.totalorder %v113, 1
    %vm133 = vcmp.lt.s32.totalorder %v113, 2
    %vm134 = vcmp.lt.s32.totalorder %v113, 3
    %vm135 = vcmp.lt.s32.totalorder %v113, 4
    %v136 = vsel %vm132, %v116, %v119
    %v137 = vsel %vm135, %v125, 2102212464
    %v138 = vsel %vm134, %v122, %v137
    %v139 = vsel %vm133, %v136, %v138
    %v140 = vsel %vm132, %v119, %v122
    %v141 = vsel %vm135, %v128, 920167782
    %v142 = vsel %vm134, %v125, %v141
    %v143 = vsel %vm133, %v140, %v142
    %v144 = vsel %vm132, %v122, %v125
    %v145 = vsel %vm135, %v131, 1326507024
    %v146 = vsel %vm134, %v128, %v145
    %v147 = vsel %vm133, %v144, %v146
    %v148 = vshll.u32 %v108, 8
    %v149 = vmul.u32.u64.compose %v148, %v147
    %v150 = vextract.low.u32 %v149
    %v151 = vextract.high.u32 %v149
    %v152 = vmul.u32.u64.compose %v148, %v143
    %v153 = vextract.low.u32 %v152
    %v154 = vextract.high.u32 %v152
    %v155 = vmul.u32 %v148, %v139
    %v156 = vadd.s32 %v151, %v153
    %vm157 = vc.u32 %v151, %v153
    %v158 = vadd.s32 %v154, 1
    %v159 = vsel %vm157, %v158, %v154
    %v160 = vadd.s32 %v155, %v159
    %v161 = vadd.s32 %v160, 536870912
    %v162 = vshrl.u32 %v161, 30
    %v163 = vshll.u32 %v162, 30
    %v164 = vsub.s32 %v160, %v163
    %vm165 = vcmp.lt.s32.totalorder %v164, 0
    %v166 = vsub.s32 0, %v164
    %v167 = vsel %vm165, %v166, %v164
    %v168 = vclz %v167
    %v169 = vsub.s32 %v168, 2
    %vm170 = vcmp.gt.s32.totalorder 0, %v169
    %v171 = vsel %vm170, 0, %v169
    %v172 = vsub.s32 32, %v171
    %v173 = vshll.u32 %v164, %v171
    %v174 = vshrl.u32 %v156, %v172
    %v175 = vor.u32 %v173, %v174
    %v176 = vsub.s32 4294967266, %v171
    %v177 = vadd.s32 %v176, 127
    %v178 = vshll.u32 %v177, 23
    %v179 = vor.u32 4788187, %v178
    %v180 = vand.u32 2147483647, %v179
    %v182 = vcvt.s32.f32 %v175
    %v183 = vmul.f32 %v182, %v180
    %v184 = vxor.u32 %v183, 2147483648
    %v185 = vsel %vm102, %v184, %v183
    %v186 = vsub.s32 4, %v162
    %v187 = vsel %vm102, %v186, %v162
    %v188 = vsel %vm101, %v94, %v185
    %v189 = vsel %vm101, 0, %v187
    %v190 = vcosq.f32.pop %v188
    %v191 = vsinq.f32.pop %v188
    %vm192 = vweird.f32 %v94
    %v193 = vadd.s32 %v189, 3
    %v194 = vand.u32 %v193, 3
    %vm195 = vcmp.lt.s32.totalorder %v194, 2
    %vm196 = vcmp.eq.s32.totalorder %v194, 0
    %v197 = vxor.u32 %v191, 2147483648
    %v198 = vsel %vm196, %v190, %v197
    %vm199 = vcmp.eq.s32.totalorder %v194, 2
    %v200 = vxor.u32 %v190, 2147483648
    %v201 = vsel %vm199, %v200, %v191
    %v202 = vsel %vm195, %v198, %v201
    %v203 = vsel %vm192, nan, %v202
    %v204 = vrcp.pop %v96
    %v205 = vmul.f32 %v203, %v204
    %v206 = vsel %vm95, %v99, %v205
    %v207 = vand.u32 2147483647, %v94
    %vm208 = vcmp.le.f32.partialorder %v207, 0.7853982
    %vm209 = vcmp.lt.s32.totalorder %v94, 0
    %v210 = vand.u32 %v94, 2139095040
    %v211 = vshrl.u32 %v210, 23
    %v212 = vsub.s32 %v211, 127
    %v213 = vand.u32 2147483647, %v94
    %v214 = vand.u32 %v213, 8388607
    %v215 = vor.u32 %v214, 8388608
    %v216 = vsub.s32 0, %v215
    %v217 = vadd.s32 %v212, 1
    %vm218 = vcmp.gt.s32.totalorder %v217, 0
    %v219 = vsel %vm218, %v217, 0
    %v220 = vshrl.u32 %v219, 5
    %v221 = vand.u32 %v219, 31
    %v222 = vsub.s32 32, %v221
    %v223 = vshrl.u32 683565275, %v222
    %v224 = vshll.u32 683565275, %v221
    %v225 = vshrl.u32 2475754826, %v222
    %v226 = vor.u32 %v224, %v225
    %v227 = vshll.u32 2475754826, %v221
    %v228 = vshrl.u32 2131351028, %v222
    %v229 = vor.u32 %v227, %v228
    %v230 = vshll.u32 2131351028, %v221
    %v231 = vshrl.u32 2102212464, %v222
    %v232 = vor.u32 %v230, %v231
    %v233 = vshll.u32 2102212464, %v221
    %v234 = vshrl.u32 920167782, %v222
    %v235 = vor.u32 %v233, %v234
    %v236 = vshll.u32 920167782, %v221
    %v237 = vshrl.u32 1326507024, %v222
    %v238 = vor.u32 %v236, %v237
    %vm239 = vcmp.lt.s32.totalorder %v220, 1
    %vm240 = vcmp.lt.s32.totalorder %v220, 2
    %vm241 = vcmp.lt.s32.totalorder %v220, 3
    %vm242 = vcmp.lt.s32.totalorder %v220, 4
    %v243 = vsel %vm239, %v223, %v226
    %v244 = vsel %vm242, %v232, 2102212464
    %v245 = vsel %vm241, %v229, %v244
    %v246 = vsel %vm240, %v243, %v245
    %v247 = vsel %vm239, %v226, %v229
    %v248 = vsel %vm242, %v235, 920167782
    %v249 = vsel %vm241, %v232, %v248
    %v250 = vsel %vm240, %v247, %v249
    %v251 = vsel %vm239, %v229, %v232
    %v252 = vsel %vm242, %v238, 1326507024
    %v253 = vsel %vm241, %v235, %v252
    %v254 = vsel %vm240, %v251, %v253
    %v255 = vshll.u32 %v215, 8
    %v256 = vmul.u32.u64.compose %v255, %v254
    %v257 = vextract.low.u32 %v256
    %v258 = vextract.high.u32 %v256
    %v259 = vmul.u32.u64.compose %v255, %v250
    %v260 = vextract.low.u32 %v259
    %v261 = vextract.high.u32 %v259
    %v262 = vmul.u32 %v255, %v246
    %v263 = vadd.s32 %v258, %v260
    %vm264 = vc.u32 %v258, %v260
    %v265 = vadd.s32 %v261, 1
    %v266 = vsel %vm264, %v265, %v261
    %v267 = vadd.s32 %v262, %v266
    %v268 = vadd.s32 %v267, 536870912
    %v269 = vshrl.u32 %v268, 30
    %v270 = vshll.u32 %v269, 30
    %v271 = vsub.s32 %v267, %v270
    %vm272 = vcmp.lt.s32.totalorder %v271, 0
    %v273 = vsub.s32 0, %v271
    %v274 = vsel %vm272, %v273, %v271
    %v275 = vclz %v274
    %v276 = vsub.s32 %v275, 2
    %vm277 = vcmp.gt.s32.totalorder 0, %v276
    %v278 = vsel %vm277, 0, %v276
    %v279 = vsub.s32 32, %v278
    %v280 = vshll.u32 %v271, %v278
    %v281 = vshrl.u32 %v263, %v279
    %v282 = vor.u32 %v280, %v281
    %v283 = vsub.s32 4294967266, %v278
    %v284 = vadd.s32 %v283, 127
    %v285 = vshll.u32 %v284, 23
    %v286 = vor.u32 4788187, %v285
    %v287 = vand.u32 2147483647, %v286
    %v289 = vcvt.s32.f32 %v282
    %v290 = vmul.f32 %v289, %v287
    %v291 = vxor.u32 %v290, 2147483648
    %v292 = vsel %vm209, %v291, %v290
    %v293 = vsub.s32 4, %v269
    %v294 = vsel %vm209, %v293, %v269
    %v295 = vsel %vm208, %v94, %v292
    %v296 = vsel %vm208, 0, %v294
    %v297 = vcosq.f32.pop %v295
    %v298 = vsinq.f32.pop %v295
    %vm299 = vweird.f32 %v94
    %v300 = vand.u32 %v296, 3
    %vm301 = vcmp.lt.s32.totalorder %v300, 2
    %vm302 = vcmp.eq.s32.totalorder %v300, 0
    %v303 = vxor.u32 %v298, 2147483648
    %v304 = vsel %vm302, %v297, %v303
    %vm305 = vcmp.eq.s32.totalorder %v300, 2
    %v306 = vxor.u32 %v297, 2147483648
    %v307 = vsel %vm305, %v306, %v298
    %v308 = vsel %vm301, %v304, %v307
    %v309 = vsel %vm299, nan, %v308
    %v310 = vmul.f32 %v77, %v206
    %v311 = vmul.f32 %v79, %v206
    %v312 = vmul.f32 %v81, %v206
    %v313 = vmul.f32 %v309, %v309
    %v314 = vmul.f32 %v310, %v310
    %v315 = vadd.f32 %v313, %v314
    %v316 = vmul.f32 %v311, %v311
    %v317 = vadd.f32 %v315, %v316
    %v318 = vmul.f32 %v312, %v312
    %v319 = vadd.f32 %v317, %v318
    %v320 = vrcp.pop %v319
    %v321 = vmul.f32 2.0, %v320
    %v322 = vadd.f32 %v316, %v318
    %v323 = vmul.f32 %v321, %v322
    %v324 = vsub.f32 1.0, %v323
    %v325 = vmul.f32 %v310, %v311
    %v326 = vmul.f32 %v312, %v309
    %v327 = vsub.f32 %v325, %v326
    %v328 = vmul.f32 %v321, %v327
    %v329 = vmul.f32 %v310, %v312
    %v330 = vmul.f32 %v311, %v309
    %v331 = vadd.f32 %v329, %v330
    %v332 = vmul.f32 %v321, %v331
    %v333 = vadd.f32 %v325, %v326
    %v334 = vmul.f32 %v321, %v333
    %v335 = vadd.f32 %v314, %v318
    %v336 = vmul.f32 %v321, %v335
    %v337 = vsub.f32 1.0, %v336
    %v338 = vmul.f32 %v311, %v312
    %v339 = vmul.f32 %v310, %v309
    %v340 = vsub.f32 %v338, %v339
    %v341 = vmul.f32 %v321, %v340
    %v342 = vsub.f32 %v329, %v330
    %v343 = vmul.f32 %v321, %v342
    %v344 = vadd.f32 %v338, %v339
    %v345 = vmul.f32 %v321, %v344
    %v346 = vadd.f32 %v314, %v316
    %v347 = vmul.f32 %v321, %v346
    %v348 = vsub.f32 1.0, %v347
    %v349 = vld [vmem:[#allocation5] sm:$0x1]
    %v350 = vld [vmem:[#allocation5 + $0x1] sm:$0x1]
    %v351 = vld [vmem:[#allocation5 + $0x2] sm:$0x1]
    %v352 = vld [vmem:[#allocation8] sm:$0xff]
    %v353 = vld [vmem:[#allocation8 + $0x8] sm:$0xff]
    %v354 = vld [vmem:[#allocation8 + $0x10] sm:$0xff]
    %v355 = vld [vmem:[#allocation8 + $0x18] sm:$0xff]
    %v356 = vld [vmem:[#allocation8 + $0x20] sm:$0xff]
    %v357 = vld [vmem:[#allocation8 + $0x28] sm:$0xff]
    %v358 = vld [vmem:[#allocation8 + $0x30] sm:$0xff]
    %v359 = vld [vmem:[#allocation8 + $0x38] sm:$0xff]
    %v360 = vld [vmem:[#allocation8 + $0x40] sm:$0xff]
    %v361 = vld [vmem:[#allocation8 + $0x48] sm:$0xff]
    %v362 = vld [vmem:[#allocation8 + $0x50] sm:$0xff]
    %v363 = vld [vmem:[#allocation8 + $0x58] sm:$0xff]
    %v364 = vld [vmem:[#allocation8 + $0x60] sm:$0xff]
    %v365 = vld [vmem:[#allocation8 + $0x68] sm:$0xff]
    %v366 = vld [vmem:[#allocation8 + $0x70] sm:$0xff]
    %v367 = vld [vmem:[#allocation8 + $0x78] sm:$0xff]
    %v368 = vld [vmem:[%s5] sm:$0x1]
    %v369 = vlaneseq
    %v370 = vshrl.u32 %v369, 7
    %v371 = vsub.s32 0, %v370
    %v372 = vrot.slane %v349, %v371
    %v373 = vlaneseq
    %v374 = vshrl.u32 %v373, 7
    %v375 = vsub.s32 0, %v374
    %v376 = vrot.slane %v350, %v375
    %v377 = vlaneseq
    %v378 = vshrl.u32 %v377, 7
    %v379 = vsub.s32 0, %v378
    %v380 = vrot.slane %v351, %v379
    %vm381 = vcmp.eq.f32.partialorder %v368, 1.0
    %382 = vmatprep.subr.mxu0 0.0
    %383 = vmatpush1.msra.mxu0 %v352
    %384 = vmatprep.subr.mxu0 0.0
    %385 = vmatpush1.msra.mxu0 %v353
    %386 = vmatprep.subr.mxu0 0.0
    %387 = vmatpush1.msra.mxu0 %v354
    %388 = vmatprep.subr.mxu0 0.0
    %389 = vmatpush1.msra.mxu0 %v355
    %390 = vmatprep.subr.mxu0 0.0
    %391 = vmatpush1.msra.mxu0 %v356
    %392 = vmatprep.subr.mxu0 0.0
    %393 = vmatpush1.msra.mxu0 %v357
    %394 = vmatprep.subr.mxu0 0.0
    %395 = vmatpush1.msra.mxu0 %v358
    %396 = vmatprep.subr.mxu0 0.0
    %397 = vmatpush1.msra.mxu0 %v359
    %398 = vmatprep.subr.mxu0 0.0
    %399 = vmatpush1.msra.mxu0 %v360
    %400 = vmatprep.subr.mxu0 0.0
    %401 = vmatpush1.msra.mxu0 %v361
    %402 = vmatprep.subr.mxu0 0.0
    %403 = vmatpush1.msra.mxu0 %v362
    %404 = vmatprep.subr.mxu0 0.0
    %405 = vmatpush1.msra.mxu0 %v363
    %406 = vmatprep.subr.mxu0 0.0
    %407 = vmatpush1.msra.mxu0 %v364
    %408 = vmatprep.subr.mxu0 0.0
    %409 = vmatpush1.msra.mxu0 %v365
    %410 = vmatprep.subr.mxu0 0.0
    %411 = vmatpush1.msra.mxu0 %v366
    %412 = vmatprep.subr.mxu0 0.0
    %413 = vmatpush1.msra.mxu0 %v367
    %414 = vmatprep.subr.mxu0 0.0
    %415 = vmatpush1.msra.mxu0 0.0
    %416 = vmatprep.subr.mxu0 0.0
    %417 = vmatpush1.msra.mxu0 0.0
    %418 = vmatprep.subr.mxu0 0.0
    %419 = vmatpush1.msra.mxu0 0.0
    %420 = vmatprep.subr.mxu0 0.0
    %421 = vmatpush1.msra.mxu0 0.0
    %422 = vmatprep.subr.mxu0 0.0
    %423 = vmatpush1.msra.mxu0 0.0
    %424 = vmatprep.subr.mxu0 0.0
    %425 = vmatpush1.msra.mxu0 0.0
    %426 = vmatprep.subr.mxu0 0.0
    %427 = vmatpush1.msra.mxu0 0.0
    %428 = vmatprep.subr.mxu0 0.0
    %429 = vmatpush1.msra.mxu0 0.0
    %430 = vmatprep.subr.mxu0 0.0
    %431 = vmatpush1.msra.mxu0 0.0
    %432 = vmatprep.subr.mxu0 0.0
    %433 = vmatpush1.msra.mxu0 0.0
    %434 = vmatprep.subr.mxu0 0.0
    %435 = vmatpush1.msra.mxu0 0.0
    %436 = vmatprep.subr.mxu0 0.0
    %437 = vmatpush1.msra.mxu0 0.0
    %438 = vmatprep.subr.mxu0 0.0
    %439 = vmatpush1.msra.mxu0 0.0
    %440 = vmatprep.subr.mxu0 0.0
    %441 = vmatpush1.msra.mxu0 0.0
    %442 = vmatprep.subr.mxu0 0.0
    %443 = vmatpush1.msra.mxu0 0.0
    %444 = vmatprep.subr.mxu0 0.0
    %445 = vmatpush1.msra.mxu0 0.0
    %446 = vmatprep.mubr.f32.mxu0 0.0
    %447 = vmatmul.mubr.f32.gmra.mrb[0].mxu0 %v324
    %v448 = vpop.f32.mrb[0].mxu0
    %v449 = vadd.f32 0.0, %v448
    %v450 = vpop.f32.mrb[0].mxu0
    %451 = vmatprep.mubr.f32.mxu0 0.0
    %452 = vmatmul.mubr.f32.gmra.mrb[0].mxu0 %v328
    %v453 = vpop.f32.mrb[0].mxu0
    %v454 = vadd.f32 0.0, %v453
    %v455 = vpop.f32.mrb[0].mxu0
    %456 = vmatprep.mubr.f32.mxu0 0.0
    %457 = vmatmul.mubr.f32.gmra.mrb[0].mxu0 %v332
    %v458 = vpop.f32.mrb[0].mxu0
    %v459 = vadd.f32 0.0, %v458
    %v460 = vpop.f32.mrb[0].mxu0
    %461 = vmatprep.mubr.f32.mxu0 0.0
    %462 = vmatmul.mubr.f32.gmra.mrb[0].mxu0 %v334
    %v463 = vpop.f32.mrb[0].mxu0
    %v464 = vadd.f32 0.0, %v463
    %v465 = vpop.f32.mrb[0].mxu0
    %466 = vmatprep.mubr.f32.mxu0 0.0
    %467 = vmatmul.mubr.f32.gmra.mrb[0].mxu0 %v337
    %v468 = vpop.f32.mrb[0].mxu0
    %v469 = vadd.f32 0.0, %v468
    %v470 = vpop.f32.mrb[0].mxu0
    %471 = vmatprep.mubr.f32.mxu0 0.0
    %472 = vmatmul.mubr.f32.gmra.mrb[0].mxu0 %v341
    %v473 = vpop.f32.mrb[0].mxu0
    %v474 = vadd.f32 0.0, %v473
    %v475 = vpop.f32.mrb[0].mxu0
    %476 = vmatprep.mubr.f32.mxu0 0.0
    %477 = vmatmul.mubr.f32.gmra.mrb[0].mxu0 %v343
    %v478 = vpop.f32.mrb[0].mxu0
    %v479 = vadd.f32 0.0, %v478
    %v480 = vpop.f32.mrb[0].mxu0
    %481 = vmatprep.mubr.f32.mxu0 0.0
    %482 = vmatmul.mubr.f32.gmra.mrb[0].mxu0 %v345
    %v483 = vpop.f32.mrb[0].mxu0
    %v484 = vadd.f32 0.0, %v483
    %v485 = vpop.f32.mrb[0].mxu0
    %486 = vmatprep.mubr.f32.mxu0 0.0
    %487 = vmatmul.mubr.f32.gmra.mrb[0].mxu0 %v348
    %v488 = vpop.f32.mrb[0].mxu0
    %v489 = vadd.f32 0.0, %v488
    %v490 = vpop.f32.mrb[0].mxu0
    %491 = vmatprep.mubr.f32.mxu0 0.0
    %492 = vmatmul.mubr.f32.gmra.mrb[0].mxu0 %v372
    %v493 = vpop.f32.mrb[0].mxu0
    %v494 = vadd.f32 0.0, %v493
    %v495 = vpop.f32.mrb[0].mxu0
    %496 = vmatprep.mubr.f32.mxu0 0.0
    %497 = vmatmul.mubr.f32.gmra.mrb[0].mxu0 %v376
    %v498 = vpop.f32.mrb[0].mxu0
    %v499 = vadd.f32 0.0, %v498
    %v500 = vpop.f32.mrb[0].mxu0
    %501 = vmatprep.mubr.f32.mxu0 0.0
    %502 = vmatmul.mubr.f32.gmra.mrb[0].mxu0 %v380
    %v503 = vpop.f32.mrb[0].mxu0
    %v504 = vadd.f32 0.0, %v503
    %v505 = vpop.f32.mrb[0].mxu0
    %506 = vdwg.mxu0
    %v507 = vmul.f32 %v449, %v324
    %v508 = vmul.f32 %v454, %v334
    %v509 = vadd.f32 %v507, %v508
    %v510 = vmul.f32 %v459, %v343
    %v511 = vadd.f32 %v509, %v510
    %v512 = vmul.f32 %v449, %v328
    %v513 = vmul.f32 %v454, %v337
    %v514 = vadd.f32 %v512, %v513
    %v515 = vmul.f32 %v459, %v345
    %v516 = vadd.f32 %v514, %v515
    %v517 = vmul.f32 %v449, %v332
    %v518 = vmul.f32 %v454, %v341
    %v519 = vadd.f32 %v517, %v518
    %v520 = vmul.f32 %v459, %v348
    %v521 = vadd.f32 %v519, %v520
    %v522 = vmul.f32 %v464, %v324
    %v523 = vmul.f32 %v469, %v334
    %v524 = vadd.f32 %v522, %v523
    %v525 = vmul.f32 %v474, %v343
    %v526 = vadd.f32 %v524, %v525
    %v527 = vmul.f32 %v464, %v328
    %v528 = vmul.f32 %v469, %v337
    %v529 = vadd.f32 %v527, %v528
    %v530 = vmul.f32 %v474, %v345
    %v531 = vadd.f32 %v529, %v530
    %v532 = vmul.f32 %v464, %v332
    %v533 = vmul.f32 %v469, %v341
    %v534 = vadd.f32 %v532, %v533
    %v535 = vmul.f32 %v474, %v348
    %v536 = vadd.f32 %v534, %v535
    %v537 = vmul.f32 %v479, %v324
    %v538 = vmul.f32 %v484, %v334
    %v539 = vadd.f32 %v537, %v538
    %v540 = vmul.f32 %v489, %v343
    %v541 = vadd.f32 %v539, %v540
    %v542 = vmul.f32 %v479, %v328
    %v543 = vmul.f32 %v484, %v337
    %v544 = vadd.f32 %v542, %v543
    %v545 = vmul.f32 %v489, %v345
    %v546 = vadd.f32 %v544, %v545
    %v547 = vmul.f32 %v479, %v332
    %v548 = vmul.f32 %v484, %v341
    %v549 = vadd.f32 %v547, %v548
    %v550 = vmul.f32 %v489, %v348
    %v551 = vadd.f32 %v549, %v550
    %v552 = vmul.f32 %v449, %v372
    %v553 = vmul.f32 %v454, %v376
    %v554 = vadd.f32 %v552, %v553
    %v555 = vmul.f32 %v459, %v380
    %v556 = vadd.f32 %v554, %v555
    %v557 = vadd.f32 %v556, %v494
    %v558 = vmul.f32 %v464, %v372
    %v559 = vmul.f32 %v469, %v376
    %v560 = vadd.f32 %v558, %v559
    %v561 = vmul.f32 %v474, %v380
    %v562 = vadd.f32 %v560, %v561
    %v563 = vadd.f32 %v562, %v499
    %v564 = vmul.f32 %v479, %v372
    %v565 = vmul.f32 %v484, %v376
    %v566 = vadd.f32 %v564, %v565
    %v567 = vmul.f32 %v489, %v380
    %v568 = vadd.f32 %v566, %v567
    %v569 = vadd.f32 %v568, %v504
    %v570 = vsel %vm381, 1, 0
    %v571 = vlaneseq
    %v572 = vshrl.u32 %v571, 7
    %v573 = vsub.s32 0, %v572
    %v574 = vrot.slane %v570, %v573
    %vm575 = vcmp.eq.s32.totalorder %v574, 1
    %v576 = vsel %vm575, %v511, %v324
    %v577 = vsel %vm575, %v516, %v328
    %v578 = vsel %vm575, %v521, %v332
    %v579 = vsel %vm575, %v526, %v334
    %v580 = vsel %vm575, %v531, %v337
    %v581 = vsel %vm575, %v536, %v341
    %v582 = vsel %vm575, %v541, %v343
    %v583 = vsel %vm575, %v546, %v345
    %v584 = vsel %vm575, %v551, %v348
    %v585 = vsel %vm575, %v557, %v372
    %v586 = vsel %vm575, %v563, %v376
    %v587 = vsel %vm575, %v569, %v380
    %vm588 = vcmp.eq.f32.partialorder %v368, 2.0
    %589 = vmatprep.subr.mxu0 0.0
    %590 = vmatpush1.msra.mxu0 %v352
    %591 = vmatprep.subr.mxu0 0.0
    %592 = vmatpush1.msra.mxu0 %v353
    %593 = vmatprep.subr.mxu0 0.0
    %594 = vmatpush1.msra.mxu0 %v354
    %595 = vmatprep.subr.mxu0 0.0
    %596 = vmatpush1.msra.mxu0 %v355
    %597 = vmatprep.subr.mxu0 0.0
    %598 = vmatpush1.msra.mxu0 %v356
    %599 = vmatprep.subr.mxu0 0.0
    %600 = vmatpush1.msra.mxu0 %v357
    %601 = vmatprep.subr.mxu0 0.0
    %602 = vmatpush1.msra.mxu0 %v358
    %603 = vmatprep.subr.mxu0 0.0
    %604 = vmatpush1.msra.mxu0 %v359
    %605 = vmatprep.subr.mxu0 0.0
    %606 = vmatpush1.msra.mxu0 %v360
    %607 = vmatprep.subr.mxu0 0.0
    %608 = vmatpush1.msra.mxu0 %v361
    %609 = vmatprep.subr.mxu0 0.0
    %610 = vmatpush1.msra.mxu0 %v362
    %611 = vmatprep.subr.mxu0 0.0
    %612 = vmatpush1.msra.mxu0 %v363
    %613 = vmatprep.subr.mxu0 0.0
    %614 = vmatpush1.msra.mxu0 %v364
    %615 = vmatprep.subr.mxu0 0.0
    %616 = vmatpush1.msra.mxu0 %v365
    %617 = vmatprep.subr.mxu0 0.0
    %618 = vmatpush1.msra.mxu0 %v366
    %619 = vmatprep.subr.mxu0 0.0
    %620 = vmatpush1.msra.mxu0 %v367
    %621 = vmatprep.subr.mxu0 0.0
    %622 = vmatpush1.msra.mxu0 0.0
    %623 = vmatprep.subr.mxu0 0.0
    %624 = vmatpush1.msra.mxu0 0.0
    %625 = vmatprep.subr.mxu0 0.0
    %626 = vmatpush1.msra.mxu0 0.0
    %627 = vmatprep.subr.mxu0 0.0
    %628 = vmatpush1.msra.mxu0 0.0
    %629 = vmatprep.subr.mxu0 0.0
    %630 = vmatpush1.msra.mxu0 0.0
    %631 = vmatprep.subr.mxu0 0.0
    %632 = vmatpush1.msra.mxu0 0.0
    %633 = vmatprep.subr.mxu0 0.0
    %634 = vmatpush1.msra.mxu0 0.0
    %635 = vmatprep.subr.mxu0 0.0
    %636 = vmatpush1.msra.mxu0 0.0
    %637 = vmatprep.subr.mxu0 0.0
    %638 = vmatpush1.msra.mxu0 0.0
    %639 = vmatprep.subr.mxu0 0.0
    %640 = vmatpush1.msra.mxu0 0.0
    %641 = vmatprep.subr.mxu0 0.0
    %642 = vmatpush1.msra.mxu0 0.0
    %643 = vmatprep.subr.mxu0 0.0
    %644 = vmatpush1.msra.mxu0 0.0
    %645 = vmatprep.subr.mxu0 0.0
    %646 = vmatpush1.msra.mxu0 0.0
    %647 = vmatprep.subr.mxu0 0.0
    %648 = vmatpush1.msra.mxu0 0.0
    %649 = vmatprep.subr.mxu0 0.0
    %650 = vmatpush1.msra.mxu0 0.0
    %651 = vmatprep.subr.mxu0 0.0
    %652 = vmatpush1.msra.mxu0 0.0
    %653 = vmatprep.mubr.f32.mxu0 0.0
    %654 = vmatmul.mubr.f32.gmra.mrb[0].mxu0 %v576
    %v655 = vpop.f32.mrb[0].mxu0
    %v656 = vadd.f32 0.0, %v655
    %v657 = vpop.f32.mrb[0].mxu0
    %658 = vmatprep.mubr.f32.mxu0 0.0
    %659 = vmatmul.mubr.f32.gmra.mrb[0].mxu0 %v577
    %v660 = vpop.f32.mrb[0].mxu0
    %v661 = vadd.f32 0.0, %v660
    %v662 = vpop.f32.mrb[0].mxu0
    %663 = vmatprep.mubr.f32.mxu0 0.0
    %664 = vmatmul.mubr.f32.gmra.mrb[0].mxu0 %v578
    %v665 = vpop.f32.mrb[0].mxu0
    %v666 = vadd.f32 0.0, %v665
    %v667 = vpop.f32.mrb[0].mxu0
    %668 = vmatprep.mubr.f32.mxu0 0.0
    %669 = vmatmul.mubr.f32.gmra.mrb[0].mxu0 %v579
    %v670 = vpop.f32.mrb[0].mxu0
    %v671 = vadd.f32 0.0, %v670
    %v672 = vpop.f32.mrb[0].mxu0
    %673 = vmatprep.mubr.f32.mxu0 0.0
    %674 = vmatmul.mubr.f32.gmra.mrb[0].mxu0 %v580
    %v675 = vpop.f32.mrb[0].mxu0
    %v676 = vadd.f32 0.0, %v675
    %v677 = vpop.f32.mrb[0].mxu0
    %678 = vmatprep.mubr.f32.mxu0 0.0
    %679 = vmatmul.mubr.f32.gmra.mrb[0].mxu0 %v581
    %v680 = vpop.f32.mrb[0].mxu0
    %v681 = vadd.f32 0.0, %v680
    %v682 = vpop.f32.mrb[0].mxu0
    %683 = vmatprep.mubr.f32.mxu0 0.0
    %684 = vmatmul.mubr.f32.gmra.mrb[0].mxu0 %v582
    %v685 = vpop.f32.mrb[0].mxu0
    %v686 = vadd.f32 0.0, %v685
    %v687 = vpop.f32.mrb[0].mxu0
    %688 = vmatprep.mubr.f32.mxu0 0.0
    %689 = vmatmul.mubr.f32.gmra.mrb[0].mxu0 %v583
    %v690 = vpop.f32.mrb[0].mxu0
    %v691 = vadd.f32 0.0, %v690
    %v692 = vpop.f32.mrb[0].mxu0
    %693 = vmatprep.mubr.f32.mxu0 0.0
    %694 = vmatmul.mubr.f32.gmra.mrb[0].mxu0 %v584
    %v695 = vpop.f32.mrb[0].mxu0
    %v696 = vadd.f32 0.0, %v695
    %v697 = vpop.f32.mrb[0].mxu0
    %698 = vmatprep.mubr.f32.mxu0 0.0
    %699 = vmatmul.mubr.f32.gmra.mrb[0].mxu0 %v585
    %v700 = vpop.f32.mrb[0].mxu0
    %v701 = vadd.f32 0.0, %v700
    %v702 = vpop.f32.mrb[0].mxu0
    %703 = vmatprep.mubr.f32.mxu0 0.0
    %704 = vmatmul.mubr.f32.gmra.mrb[0].mxu0 %v586
    %v705 = vpop.f32.mrb[0].mxu0
    %v706 = vadd.f32 0.0, %v705
    %v707 = vpop.f32.mrb[0].mxu0
    %708 = vmatprep.mubr.f32.mxu0 0.0
    %709 = vmatmul.mubr.f32.gmra.mrb[0].mxu0 %v587
    %v710 = vpop.f32.mrb[0].mxu0
    %v711 = vadd.f32 0.0, %v710
    %v712 = vpop.f32.mrb[0].mxu0
    %713 = vdwg.mxu0
    %v714 = vmul.f32 %v656, %v324
    %v715 = vmul.f32 %v661, %v334
    %v716 = vadd.f32 %v714, %v715
    %v717 = vmul.f32 %v666, %v343
    %v718 = vadd.f32 %v716, %v717
    %v719 = vmul.f32 %v656, %v328
    %v720 = vmul.f32 %v661, %v337
    %v721 = vadd.f32 %v719, %v720
    %v722 = vmul.f32 %v666, %v345
    %v723 = vadd.f32 %v721, %v722
    %v724 = vmul.f32 %v656, %v332
    %v725 = vmul.f32 %v661, %v341
    %v726 = vadd.f32 %v724, %v725
    %v727 = vmul.f32 %v666, %v348
    %v728 = vadd.f32 %v726, %v727
    %v729 = vmul.f32 %v671, %v324
    %v730 = vmul.f32 %v676, %v334
    %v731 = vadd.f32 %v729, %v730
    %v732 = vmul.f32 %v681, %v343
    %v733 = vadd.f32 %v731, %v732
    %v734 = vmul.f32 %v671, %v328
    %v735 = vmul.f32 %v676, %v337
    %v736 = vadd.f32 %v734, %v735
    %v737 = vmul.f32 %v681, %v345
    %v738 = vadd.f32 %v736, %v737
    %v739 = vmul.f32 %v671, %v332
    %v740 = vmul.f32 %v676, %v341
    %v741 = vadd.f32 %v739, %v740
    %v742 = vmul.f32 %v681, %v348
    %v743 = vadd.f32 %v741, %v742
    %v744 = vmul.f32 %v686, %v324
    %v745 = vmul.f32 %v691, %v334
    %v746 = vadd.f32 %v744, %v745
    %v747 = vmul.f32 %v696, %v343
    %v748 = vadd.f32 %v746, %v747
    %v749 = vmul.f32 %v686, %v328
    %v750 = vmul.f32 %v691, %v337
    %v751 = vadd.f32 %v749, %v750
    %v752 = vmul.f32 %v696, %v345
    %v753 = vadd.f32 %v751, %v752
    %v754 = vmul.f32 %v686, %v332
    %v755 = vmul.f32 %v691, %v341
    %v756 = vadd.f32 %v754, %v755
    %v757 = vmul.f32 %v696, %v348
    %v758 = vadd.f32 %v756, %v757
    %v759 = vmul.f32 %v656, %v372
    %v760 = vmul.f32 %v661, %v376
    %v761 = vadd.f32 %v759, %v760
    %v762 = vmul.f32 %v666, %v380
    %v763 = vadd.f32 %v761, %v762
    %v764 = vadd.f32 %v763, %v701
    %v765 = vmul.f32 %v671, %v372
    %v766 = vmul.f32 %v676, %v376
    %v767 = vadd.f32 %v765, %v766
    %v768 = vmul.f32 %v681, %v380
    %v769 = vadd.f32 %v767, %v768
    %v770 = vadd.f32 %v769, %v706
    %v771 = vmul.f32 %v686, %v372
    %v772 = vmul.f32 %v691, %v376
    %v773 = vadd.f32 %v771, %v772
    %v774 = vmul.f32 %v696, %v380
    %v775 = vadd.f32 %v773, %v774
    %v776 = vadd.f32 %v775, %v711
    %v777 = vsel %vm588, 1, 0
    %v778 = vlaneseq
    %v779 = vshrl.u32 %v778, 7
    %v780 = vsub.s32 0, %v779
    %v781 = vrot.slane %v777, %v780
    %vm782 = vcmp.eq.s32.totalorder %v781, 1
    %v783 = vsel %vm782, %v718, %v576
    %v784 = vsel %vm782, %v723, %v577
    %v785 = vsel %vm782, %v728, %v578
    %v786 = vsel %vm782, %v733, %v579
    %v787 = vsel %vm782, %v738, %v580
    %v788 = vsel %vm782, %v743, %v581
    %v789 = vsel %vm782, %v748, %v582
    %v790 = vsel %vm782, %v753, %v583
    %v791 = vsel %vm782, %v758, %v584
    %v792 = vsel %vm782, %v764, %v585
    %v793 = vsel %vm782, %v770, %v586
    %v794 = vsel %vm782, %v776, %v587
    %vm795 = vcmp.eq.f32.partialorder %v368, 3.0
    %796 = vmatprep.subr.mxu0 0.0
    %797 = vmatpush1.msra.mxu0 %v352
    %798 = vmatprep.subr.mxu0 0.0
    %799 = vmatpush1.msra.mxu0 %v353
    %800 = vmatprep.subr.mxu0 0.0
    %801 = vmatpush1.msra.mxu0 %v354
    %802 = vmatprep.subr.mxu0 0.0
    %803 = vmatpush1.msra.mxu0 %v355
    %804 = vmatprep.subr.mxu0 0.0
    %805 = vmatpush1.msra.mxu0 %v356
    %806 = vmatprep.subr.mxu0 0.0
    %807 = vmatpush1.msra.mxu0 %v357
    %808 = vmatprep.subr.mxu0 0.0
    %809 = vmatpush1.msra.mxu0 %v358
    %810 = vmatprep.subr.mxu0 0.0
    %811 = vmatpush1.msra.mxu0 %v359
    %812 = vmatprep.subr.mxu0 0.0
    %813 = vmatpush1.msra.mxu0 %v360
    %814 = vmatprep.subr.mxu0 0.0
    %815 = vmatpush1.msra.mxu0 %v361
    %816 = vmatprep.subr.mxu0 0.0
    %817 = vmatpush1.msra.mxu0 %v362
    %818 = vmatprep.subr.mxu0 0.0
    %819 = vmatpush1.msra.mxu0 %v363
    %820 = vmatprep.subr.mxu0 0.0
    %821 = vmatpush1.msra.mxu0 %v364
    %822 = vmatprep.subr.mxu0 0.0
    %823 = vmatpush1.msra.mxu0 %v365
    %824 = vmatprep.subr.mxu0 0.0
    %825 = vmatpush1.msra.mxu0 %v366
    %826 = vmatprep.subr.mxu0 0.0
    %827 = vmatpush1.msra.mxu0 %v367
    %828 = vmatprep.subr.mxu0 0.0
    %829 = vmatpush1.msra.mxu0 0.0
    %830 = vmatprep.subr.mxu0 0.0
    %831 = vmatpush1.msra.mxu0 0.0
    %832 = vmatprep.subr.mxu0 0.0
    %833 = vmatpush1.msra.mxu0 0.0
    %834 = vmatprep.subr.mxu0 0.0
    %835 = vmatpush1.msra.mxu0 0.0
    %836 = vmatprep.subr.mxu0 0.0
    %837 = vmatpush1.msra.mxu0 0.0
    %838 = vmatprep.subr.mxu0 0.0
    %839 = vmatpush1.msra.mxu0 0.0
    %840 = vmatprep.subr.mxu0 0.0
    %841 = vmatpush1.msra.mxu0 0.0
    %842 = vmatprep.subr.mxu0 0.0
    %843 = vmatpush1.msra.mxu0 0.0
    %844 = vmatprep.subr.mxu0 0.0
    %845 = vmatpush1.msra.mxu0 0.0
    %846 = vmatprep.subr.mxu0 0.0
    %847 = vmatpush1.msra.mxu0 0.0
    %848 = vmatprep.subr.mxu0 0.0
    %849 = vmatpush1.msra.mxu0 0.0
    %850 = vmatprep.subr.mxu0 0.0
    %851 = vmatpush1.msra.mxu0 0.0
    %852 = vmatprep.subr.mxu0 0.0
    %853 = vmatpush1.msra.mxu0 0.0
    %854 = vmatprep.subr.mxu0 0.0
    %855 = vmatpush1.msra.mxu0 0.0
    %856 = vmatprep.subr.mxu0 0.0
    %857 = vmatpush1.msra.mxu0 0.0
    %858 = vmatprep.subr.mxu0 0.0
    %859 = vmatpush1.msra.mxu0 0.0
    %860 = vmatprep.mubr.f32.mxu0 0.0
    %861 = vmatmul.mubr.f32.gmra.mrb[0].mxu0 %v783
    %v862 = vpop.f32.mrb[0].mxu0
    %v863 = vadd.f32 0.0, %v862
    %v864 = vpop.f32.mrb[0].mxu0
    %865 = vmatprep.mubr.f32.mxu0 0.0
    %866 = vmatmul.mubr.f32.gmra.mrb[0].mxu0 %v784
    %v867 = vpop.f32.mrb[0].mxu0
    %v868 = vadd.f32 0.0, %v867
    %v869 = vpop.f32.mrb[0].mxu0
    %870 = vmatprep.mubr.f32.mxu0 0.0
    %871 = vmatmul.mubr.f32.gmra.mrb[0].mxu0 %v785
    %v872 = vpop.f32.mrb[0].mxu0
    %v873 = vadd.f32 0.0, %v872
    %v874 = vpop.f32.mrb[0].mxu0
    %875 = vmatprep.mubr.f32.mxu0 0.0
    %876 = vmatmul.mubr.f32.gmra.mrb[0].mxu0 %v786
    %v877 = vpop.f32.mrb[0].mxu0
    %v878 = vadd.f32 0.0, %v877
    %v879 = vpop.f32.mrb[0].mxu0
    %880 = vmatprep.mubr.f32.mxu0 0.0
    %881 = vmatmul.mubr.f32.gmra.mrb[0].mxu0 %v787
    %v882 = vpop.f32.mrb[0].mxu0
    %v883 = vadd.f32 0.0, %v882
    %v884 = vpop.f32.mrb[0].mxu0
    %885 = vmatprep.mubr.f32.mxu0 0.0
    %886 = vmatmul.mubr.f32.gmra.mrb[0].mxu0 %v788
    %v887 = vpop.f32.mrb[0].mxu0
    %v888 = vadd.f32 0.0, %v887
    %v889 = vpop.f32.mrb[0].mxu0
    %890 = vmatprep.mubr.f32.mxu0 0.0
    %891 = vmatmul.mubr.f32.gmra.mrb[0].mxu0 %v789
    %v892 = vpop.f32.mrb[0].mxu0
    %v893 = vadd.f32 0.0, %v892
    %v894 = vpop.f32.mrb[0].mxu0
    %895 = vmatprep.mubr.f32.mxu0 0.0
    %896 = vmatmul.mubr.f32.gmra.mrb[0].mxu0 %v790
    %v897 = vpop.f32.mrb[0].mxu0
    %v898 = vadd.f32 0.0, %v897
    %v899 = vpop.f32.mrb[0].mxu0
    %900 = vmatprep.mubr.f32.mxu0 0.0
    %901 = vmatmul.mubr.f32.gmra.mrb[0].mxu0 %v791
    %v902 = vpop.f32.mrb[0].mxu0
    %v903 = vadd.f32 0.0, %v902
    %v904 = vpop.f32.mrb[0].mxu0
    %905 = vmatprep.mubr.f32.mxu0 0.0
    %906 = vmatmul.mubr.f32.gmra.mrb[0].mxu0 %v792
    %v907 = vpop.f32.mrb[0].mxu0
    %v908 = vadd.f32 0.0, %v907
    %v909 = vpop.f32.mrb[0].mxu0
    %910 = vmatprep.mubr.f32.mxu0 0.0
    %911 = vmatmul.mubr.f32.gmra.mrb[0].mxu0 %v793
    %v912 = vpop.f32.mrb[0].mxu0
    %v913 = vadd.f32 0.0, %v912
    %v914 = vpop.f32.mrb[0].mxu0
    %915 = vmatprep.mubr.f32.mxu0 0.0
    %916 = vmatmul.mubr.f32.gmra.mrb[0].mxu0 %v794
    %v917 = vpop.f32.mrb[0].mxu0
    %v918 = vadd.f32 0.0, %v917
    %v919 = vpop.f32.mrb[0].mxu0
    %920 = vdwg.mxu0
    %v921 = vmul.f32 %v863, %v324
    %v922 = vmul.f32 %v868, %v334
    %v923 = vadd.f32 %v921, %v922
    %v924 = vmul.f32 %v873, %v343
    %v925 = vadd.f32 %v923, %v924
    %v926 = vmul.f32 %v863, %v328
    %v927 = vmul.f32 %v868, %v337
    %v928 = vadd.f32 %v926, %v927
    %v929 = vmul.f32 %v873, %v345
    %v930 = vadd.f32 %v928, %v929
    %v931 = vmul.f32 %v863, %v332
    %v932 = vmul.f32 %v868, %v341
    %v933 = vadd.f32 %v931, %v932
    %v934 = vmul.f32 %v873, %v348
    %v935 = vadd.f32 %v933, %v934
    %v936 = vmul.f32 %v878, %v324
    %v937 = vmul.f32 %v883, %v334
    %v938 = vadd.f32 %v936, %v937
    %v939 = vmul.f32 %v888, %v343
    %v940 = vadd.f32 %v938, %v939
    %v941 = vmul.f32 %v878, %v328
    %v942 = vmul.f32 %v883, %v337
    %v943 = vadd.f32 %v941, %v942
    %v944 = vmul.f32 %v888, %v345
    %v945 = vadd.f32 %v943, %v944
    %v946 = vmul.f32 %v878, %v332
    %v947 = vmul.f32 %v883, %v341
    %v948 = vadd.f32 %v946, %v947
    %v949 = vmul.f32 %v888, %v348
    %v950 = vadd.f32 %v948, %v949
    %v951 = vmul.f32 %v893, %v324
    %v952 = vmul.f32 %v898, %v334
    %v953 = vadd.f32 %v951, %v952
    %v954 = vmul.f32 %v903, %v343
    %v955 = vadd.f32 %v953, %v954
    %v956 = vmul.f32 %v893, %v328
    %v957 = vmul.f32 %v898, %v337
    %v958 = vadd.f32 %v956, %v957
    %v959 = vmul.f32 %v903, %v345
    %v960 = vadd.f32 %v958, %v959
    %v961 = vmul.f32 %v893, %v332
    %v962 = vmul.f32 %v898, %v341
    %v963 = vadd.f32 %v961, %v962
    %v964 = vmul.f32 %v903, %v348
    %v965 = vadd.f32 %v963, %v964
    %v966 = vmul.f32 %v863, %v372
    %v967 = vmul.f32 %v868, %v376
    %v968 = vadd.f32 %v966, %v967
    %v969 = vmul.f32 %v873, %v380
    %v970 = vadd.f32 %v968, %v969
    %v971 = vadd.f32 %v970, %v908
    %v972 = vmul.f32 %v878, %v372
    %v973 = vmul.f32 %v883, %v376
    %v974 = vadd.f32 %v972, %v973
    %v975 = vmul.f32 %v888, %v380
    %v976 = vadd.f32 %v974, %v975
    %v977 = vadd.f32 %v976, %v913
    %v978 = vmul.f32 %v893, %v372
    %v979 = vmul.f32 %v898, %v376
    %v980 = vadd.f32 %v978, %v979
    %v981 = vmul.f32 %v903, %v380
    %v982 = vadd.f32 %v980, %v981
    %v983 = vadd.f32 %v982, %v918
    %v984 = vsel %vm795, 1, 0
    %v985 = vlaneseq
    %v986 = vshrl.u32 %v985, 7
    %v987 = vsub.s32 0, %v986
    %v988 = vrot.slane %v984, %v987
    %vm989 = vcmp.eq.s32.totalorder %v988, 1
    %v990 = vsel %vm989, %v925, %v783
    %v991 = vsel %vm989, %v930, %v784
    %v992 = vsel %vm989, %v935, %v785
    %v993 = vsel %vm989, %v940, %v786
    %v994 = vsel %vm989, %v945, %v787
    %v995 = vsel %vm989, %v950, %v788
    %v996 = vsel %vm989, %v955, %v789
    %v997 = vsel %vm989, %v960, %v790
    %v998 = vsel %vm989, %v965, %v791
    %v999 = vsel %vm989, %v971, %v792
    %v1000 = vsel %vm989, %v977, %v793
    %v1001 = vsel %vm989, %v983, %v794
    %vm1002 = vcmp.eq.f32.partialorder %v368, 4.0
    %1003 = vmatprep.subr.mxu0 0.0
    %1004 = vmatpush1.msra.mxu0 %v352
    %1005 = vmatprep.subr.mxu0 0.0
    %1006 = vmatpush1.msra.mxu0 %v353
    %1007 = vmatprep.subr.mxu0 0.0
    %1008 = vmatpush1.msra.mxu0 %v354
    %1009 = vmatprep.subr.mxu0 0.0
    %1010 = vmatpush1.msra.mxu0 %v355
    %1011 = vmatprep.subr.mxu0 0.0
    %1012 = vmatpush1.msra.mxu0 %v356
    %1013 = vmatprep.subr.mxu0 0.0
    %1014 = vmatpush1.msra.mxu0 %v357
    %1015 = vmatprep.subr.mxu0 0.0
    %1016 = vmatpush1.msra.mxu0 %v358
    %1017 = vmatprep.subr.mxu0 0.0
    %1018 = vmatpush1.msra.mxu0 %v359
    %1019 = vmatprep.subr.mxu0 0.0
    %1020 = vmatpush1.msra.mxu0 %v360
    %1021 = vmatprep.subr.mxu0 0.0
    %1022 = vmatpush1.msra.mxu0 %v361
    %1023 = vmatprep.subr.mxu0 0.0
    %1024 = vmatpush1.msra.mxu0 %v362
    %1025 = vmatprep.subr.mxu0 0.0
    %1026 = vmatpush1.msra.mxu0 %v363
    %1027 = vmatprep.subr.mxu0 0.0
    %1028 = vmatpush1.msra.mxu0 %v364
    %1029 = vmatprep.subr.mxu0 0.0
    %1030 = vmatpush1.msra.mxu0 %v365
    %1031 = vmatprep.subr.mxu0 0.0
    %1032 = vmatpush1.msra.mxu0 %v366
    %1033 = vmatprep.subr.mxu0 0.0
    %1034 = vmatpush1.msra.mxu0 %v367
    %1035 = vmatprep.subr.mxu0 0.0
    %1036 = vmatpush1.msra.mxu0 0.0
    %1037 = vmatprep.subr.mxu0 0.0
    %1038 = vmatpush1.msra.mxu0 0.0
    %1039 = vmatprep.subr.mxu0 0.0
    %1040 = vmatpush1.msra.mxu0 0.0
    %1041 = vmatprep.subr.mxu0 0.0
    %1042 = vmatpush1.msra.mxu0 0.0
    %1043 = vmatprep.subr.mxu0 0.0
    %1044 = vmatpush1.msra.mxu0 0.0
    %1045 = vmatprep.subr.mxu0 0.0
    %1046 = vmatpush1.msra.mxu0 0.0
    %1047 = vmatprep.subr.mxu0 0.0
    %1048 = vmatpush1.msra.mxu0 0.0
    %1049 = vmatprep.subr.mxu0 0.0
    %1050 = vmatpush1.msra.mxu0 0.0
    %1051 = vmatprep.subr.mxu0 0.0
    %1052 = vmatpush1.msra.mxu0 0.0
    %1053 = vmatprep.subr.mxu0 0.0
    %1054 = vmatpush1.msra.mxu0 0.0
    %1055 = vmatprep.subr.mxu0 0.0
    %1056 = vmatpush1.msra.mxu0 0.0
    %1057 = vmatprep.subr.mxu0 0.0
    %1058 = vmatpush1.msra.mxu0 0.0
    %1059 = vmatprep.subr.mxu0 0.0
    %1060 = vmatpush1.msra.mxu0 0.0
    %1061 = vmatprep.subr.mxu0 0.0
    %1062 = vmatpush1.msra.mxu0 0.0
    %1063 = vmatprep.subr.mxu0 0.0
    %1064 = vmatpush1.msra.mxu0 0.0
    %1065 = vmatprep.subr.mxu0 0.0
    %1066 = vmatpush1.msra.mxu0 0.0
    %1067 = vmatprep.mubr.f32.mxu0 0.0
    %1068 = vmatmul.mubr.f32.gmra.mrb[0].mxu0 %v990
    %v1069 = vpop.f32.mrb[0].mxu0
    %v1070 = vadd.f32 0.0, %v1069
    %v1071 = vpop.f32.mrb[0].mxu0
    %1072 = vmatprep.mubr.f32.mxu0 0.0
    %1073 = vmatmul.mubr.f32.gmra.mrb[0].mxu0 %v991
    %v1074 = vpop.f32.mrb[0].mxu0
    %v1075 = vadd.f32 0.0, %v1074
    %v1076 = vpop.f32.mrb[0].mxu0
    %1077 = vmatprep.mubr.f32.mxu0 0.0
    %1078 = vmatmul.mubr.f32.gmra.mrb[0].mxu0 %v992
    %v1079 = vpop.f32.mrb[0].mxu0
    %v1080 = vadd.f32 0.0, %v1079
    %v1081 = vpop.f32.mrb[0].mxu0
    %1082 = vmatprep.mubr.f32.mxu0 0.0
    %1083 = vmatmul.mubr.f32.gmra.mrb[0].mxu0 %v993
    %v1084 = vpop.f32.mrb[0].mxu0
    %v1085 = vadd.f32 0.0, %v1084
    %v1086 = vpop.f32.mrb[0].mxu0
    %1087 = vmatprep.mubr.f32.mxu0 0.0
    %1088 = vmatmul.mubr.f32.gmra.mrb[0].mxu0 %v994
    %v1089 = vpop.f32.mrb[0].mxu0
    %v1090 = vadd.f32 0.0, %v1089
    %v1091 = vpop.f32.mrb[0].mxu0
    %1092 = vmatprep.mubr.f32.mxu0 0.0
    %1093 = vmatmul.mubr.f32.gmra.mrb[0].mxu0 %v995
    %v1094 = vpop.f32.mrb[0].mxu0
    %v1095 = vadd.f32 0.0, %v1094
    %v1096 = vpop.f32.mrb[0].mxu0
    %1097 = vmatprep.mubr.f32.mxu0 0.0
    %1098 = vmatmul.mubr.f32.gmra.mrb[0].mxu0 %v996
    %v1099 = vpop.f32.mrb[0].mxu0
    %v1100 = vadd.f32 0.0, %v1099
    %v1101 = vpop.f32.mrb[0].mxu0
    %1102 = vmatprep.mubr.f32.mxu0 0.0
    %1103 = vmatmul.mubr.f32.gmra.mrb[0].mxu0 %v997
    %v1104 = vpop.f32.mrb[0].mxu0
    %v1105 = vadd.f32 0.0, %v1104
    %v1106 = vpop.f32.mrb[0].mxu0
    %1107 = vmatprep.mubr.f32.mxu0 0.0
    %1108 = vmatmul.mubr.f32.gmra.mrb[0].mxu0 %v998
    %v1109 = vpop.f32.mrb[0].mxu0
    %v1110 = vadd.f32 0.0, %v1109
    %v1111 = vpop.f32.mrb[0].mxu0
    %1112 = vmatprep.mubr.f32.mxu0 0.0
    %1113 = vmatmul.mubr.f32.gmra.mrb[0].mxu0 %v999
    %v1114 = vpop.f32.mrb[0].mxu0
    %v1115 = vadd.f32 0.0, %v1114
    %v1116 = vpop.f32.mrb[0].mxu0
    %1117 = vmatprep.mubr.f32.mxu0 0.0
    %1118 = vmatmul.mubr.f32.gmra.mrb[0].mxu0 %v1000
    %v1119 = vpop.f32.mrb[0].mxu0
    %v1120 = vadd.f32 0.0, %v1119
    %v1121 = vpop.f32.mrb[0].mxu0
    %1122 = vmatprep.mubr.f32.mxu0 0.0
    %1123 = vmatmul.mubr.f32.gmra.mrb[0].mxu0 %v1001
    %v1124 = vpop.f32.mrb[0].mxu0
    %v1125 = vadd.f32 0.0, %v1124
    %v1126 = vpop.f32.mrb[0].mxu0
    %1127 = vdwg.mxu0
    %v1128 = vmul.f32 %v1070, %v324
    %v1129 = vmul.f32 %v1075, %v334
    %v1130 = vadd.f32 %v1128, %v1129
    %v1131 = vmul.f32 %v1080, %v343
    %v1132 = vadd.f32 %v1130, %v1131
    %v1133 = vmul.f32 %v1070, %v328
    %v1134 = vmul.f32 %v1075, %v337
    %v1135 = vadd.f32 %v1133, %v1134
    %v1136 = vmul.f32 %v1080, %v345
    %v1137 = vadd.f32 %v1135, %v1136
    %v1138 = vmul.f32 %v1070, %v332
    %v1139 = vmul.f32 %v1075, %v341
    %v1140 = vadd.f32 %v1138, %v1139
    %v1141 = vmul.f32 %v1080, %v348
    %v1142 = vadd.f32 %v1140, %v1141
    %v1143 = vmul.f32 %v1085, %v324
    %v1144 = vmul.f32 %v1090, %v334
    %v1145 = vadd.f32 %v1143, %v1144
    %v1146 = vmul.f32 %v1095, %v343
    %v1147 = vadd.f32 %v1145, %v1146
    %v1148 = vmul.f32 %v1085, %v328
    %v1149 = vmul.f32 %v1090, %v337
    %v1150 = vadd.f32 %v1148, %v1149
    %v1151 = vmul.f32 %v1095, %v345
    %v1152 = vadd.f32 %v1150, %v1151
    %v1153 = vmul.f32 %v1085, %v332
    %v1154 = vmul.f32 %v1090, %v341
    %v1155 = vadd.f32 %v1153, %v1154
    %v1156 = vmul.f32 %v1095, %v348
    %v1157 = vadd.f32 %v1155, %v1156
    %v1158 = vmul.f32 %v1100, %v324
    %v1159 = vmul.f32 %v1105, %v334
    %v1160 = vadd.f32 %v1158, %v1159
    %v1161 = vmul.f32 %v1110, %v343
    %v1162 = vadd.f32 %v1160, %v1161
    %v1163 = vmul.f32 %v1100, %v328
    %v1164 = vmul.f32 %v1105, %v337
    %v1165 = vadd.f32 %v1163, %v1164
    %v1166 = vmul.f32 %v1110, %v345
    %v1167 = vadd.f32 %v1165, %v1166
    %v1168 = vmul.f32 %v1100, %v332
    %v1169 = vmul.f32 %v1105, %v341
    %v1170 = vadd.f32 %v1168, %v1169
    %v1171 = vmul.f32 %v1110, %v348
    %v1172 = vadd.f32 %v1170, %v1171
    %v1173 = vmul.f32 %v1070, %v372
    %v1174 = vmul.f32 %v1075, %v376
    %v1175 = vadd.f32 %v1173, %v1174
    %v1176 = vmul.f32 %v1080, %v380
    %v1177 = vadd.f32 %v1175, %v1176
    %v1178 = vadd.f32 %v1177, %v1115
    %v1179 = vmul.f32 %v1085, %v372
    %v1180 = vmul.f32 %v1090, %v376
    %v1181 = vadd.f32 %v1179, %v1180
    %v1182 = vmul.f32 %v1095, %v380
    %v1183 = vadd.f32 %v1181, %v1182
    %v1184 = vadd.f32 %v1183, %v1120
    %v1185 = vmul.f32 %v1100, %v372
    %v1186 = vmul.f32 %v1105, %v376
    %v1187 = vadd.f32 %v1185, %v1186
    %v1188 = vmul.f32 %v1110, %v380
    %v1189 = vadd.f32 %v1187, %v1188
    %v1190 = vadd.f32 %v1189, %v1125
    %v1191 = vsel %vm1002, 1, 0
    %v1192 = vlaneseq
    %v1193 = vshrl.u32 %v1192, 7
    %v1194 = vsub.s32 0, %v1193
    %v1195 = vrot.slane %v1191, %v1194
    %vm1196 = vcmp.eq.s32.totalorder %v1195, 1
    %v1197 = vsel %vm1196, %v1132, %v990
    %v1198 = vsel %vm1196, %v1137, %v991
    %v1199 = vsel %vm1196, %v1142, %v992
    %v1200 = vsel %vm1196, %v1147, %v993
    %v1201 = vsel %vm1196, %v1152, %v994
    %v1202 = vsel %vm1196, %v1157, %v995
    %v1203 = vsel %vm1196, %v1162, %v996
    %v1204 = vsel %vm1196, %v1167, %v997
    %v1205 = vsel %vm1196, %v1172, %v998
    %v1206 = vsel %vm1196, %v1178, %v999
    %v1207 = vsel %vm1196, %v1184, %v1000
    %v1208 = vsel %vm1196, %v1190, %v1001
    %vm1209 = vcmp.eq.f32.partialorder %v368, 5.0
    %1210 = vmatprep.subr.mxu0 0.0
    %1211 = vmatpush1.msra.mxu0 %v352
    %1212 = vmatprep.subr.mxu0 0.0
    %1213 = vmatpush1.msra.mxu0 %v353
    %1214 = vmatprep.subr.mxu0 0.0
    %1215 = vmatpush1.msra.mxu0 %v354
    %1216 = vmatprep.subr.mxu0 0.0
    %1217 = vmatpush1.msra.mxu0 %v355
    %1218 = vmatprep.subr.mxu0 0.0
    %1219 = vmatpush1.msra.mxu0 %v356
    %1220 = vmatprep.subr.mxu0 0.0
    %1221 = vmatpush1.msra.mxu0 %v357
    %1222 = vmatprep.subr.mxu0 0.0
    %1223 = vmatpush1.msra.mxu0 %v358
    %1224 = vmatprep.subr.mxu0 0.0
    %1225 = vmatpush1.msra.mxu0 %v359
    %1226 = vmatprep.subr.mxu0 0.0
    %1227 = vmatpush1.msra.mxu0 %v360
    %1228 = vmatprep.subr.mxu0 0.0
    %1229 = vmatpush1.msra.mxu0 %v361
    %1230 = vmatprep.subr.mxu0 0.0
    %1231 = vmatpush1.msra.mxu0 %v362
    %1232 = vmatprep.subr.mxu0 0.0
    %1233 = vmatpush1.msra.mxu0 %v363
    %1234 = vmatprep.subr.mxu0 0.0
    %1235 = vmatpush1.msra.mxu0 %v364
    %1236 = vmatprep.subr.mxu0 0.0
    %1237 = vmatpush1.msra.mxu0 %v365
    %1238 = vmatprep.subr.mxu0 0.0
    %1239 = vmatpush1.msra.mxu0 %v366
    %1240 = vmatprep.subr.mxu0 0.0
    %1241 = vmatpush1.msra.mxu0 %v367
    %1242 = vmatprep.subr.mxu0 0.0
    %1243 = vmatpush1.msra.mxu0 0.0
    %1244 = vmatprep.subr.mxu0 0.0
    %1245 = vmatpush1.msra.mxu0 0.0
    %1246 = vmatprep.subr.mxu0 0.0
    %1247 = vmatpush1.msra.mxu0 0.0
    %1248 = vmatprep.subr.mxu0 0.0
    %1249 = vmatpush1.msra.mxu0 0.0
    %1250 = vmatprep.subr.mxu0 0.0
    %1251 = vmatpush1.msra.mxu0 0.0
    %1252 = vmatprep.subr.mxu0 0.0
    %1253 = vmatpush1.msra.mxu0 0.0
    %1254 = vmatprep.subr.mxu0 0.0
    %1255 = vmatpush1.msra.mxu0 0.0
    %1256 = vmatprep.subr.mxu0 0.0
    %1257 = vmatpush1.msra.mxu0 0.0
    %1258 = vmatprep.subr.mxu0 0.0
    %1259 = vmatpush1.msra.mxu0 0.0
    %1260 = vmatprep.subr.mxu0 0.0
    %1261 = vmatpush1.msra.mxu0 0.0
    %1262 = vmatprep.subr.mxu0 0.0
    %1263 = vmatpush1.msra.mxu0 0.0
    %1264 = vmatprep.subr.mxu0 0.0
    %1265 = vmatpush1.msra.mxu0 0.0
    %1266 = vmatprep.subr.mxu0 0.0
    %1267 = vmatpush1.msra.mxu0 0.0
    %1268 = vmatprep.subr.mxu0 0.0
    %1269 = vmatpush1.msra.mxu0 0.0
    %1270 = vmatprep.subr.mxu0 0.0
    %1271 = vmatpush1.msra.mxu0 0.0
    %1272 = vmatprep.subr.mxu0 0.0
    %1273 = vmatpush1.msra.mxu0 0.0
    %1274 = vmatprep.mubr.f32.mxu0 0.0
    %1275 = vmatmul.mubr.f32.gmra.mrb[0].mxu0 %v1197
    %v1276 = vpop.f32.mrb[0].mxu0
    %v1277 = vadd.f32 0.0, %v1276
    %v1278 = vpop.f32.mrb[0].mxu0
    %1279 = vmatprep.mubr.f32.mxu0 0.0
    %1280 = vmatmul.mubr.f32.gmra.mrb[0].mxu0 %v1198
    %v1281 = vpop.f32.mrb[0].mxu0
    %v1282 = vadd.f32 0.0, %v1281
    %v1283 = vpop.f32.mrb[0].mxu0
    %1284 = vmatprep.mubr.f32.mxu0 0.0
    %1285 = vmatmul.mubr.f32.gmra.mrb[0].mxu0 %v1199
    %v1286 = vpop.f32.mrb[0].mxu0
    %v1287 = vadd.f32 0.0, %v1286
    %v1288 = vpop.f32.mrb[0].mxu0
    %1289 = vmatprep.mubr.f32.mxu0 0.0
    %1290 = vmatmul.mubr.f32.gmra.mrb[0].mxu0 %v1200
    %v1291 = vpop.f32.mrb[0].mxu0
    %v1292 = vadd.f32 0.0, %v1291
    %v1293 = vpop.f32.mrb[0].mxu0
    %1294 = vmatprep.mubr.f32.mxu0 0.0
    %1295 = vmatmul.mubr.f32.gmra.mrb[0].mxu0 %v1201
    %v1296 = vpop.f32.mrb[0].mxu0
    %v1297 = vadd.f32 0.0, %v1296
    %v1298 = vpop.f32.mrb[0].mxu0
    %1299 = vmatprep.mubr.f32.mxu0 0.0
    %1300 = vmatmul.mubr.f32.gmra.mrb[0].mxu0 %v1202
    %v1301 = vpop.f32.mrb[0].mxu0
    %v1302 = vadd.f32 0.0, %v1301
    %v1303 = vpop.f32.mrb[0].mxu0
    %1304 = vmatprep.mubr.f32.mxu0 0.0
    %1305 = vmatmul.mubr.f32.gmra.mrb[0].mxu0 %v1203
    %v1306 = vpop.f32.mrb[0].mxu0
    %v1307 = vadd.f32 0.0, %v1306
    %v1308 = vpop.f32.mrb[0].mxu0
    %1309 = vmatprep.mubr.f32.mxu0 0.0
    %1310 = vmatmul.mubr.f32.gmra.mrb[0].mxu0 %v1204
    %v1311 = vpop.f32.mrb[0].mxu0
    %v1312 = vadd.f32 0.0, %v1311
    %v1313 = vpop.f32.mrb[0].mxu0
    %1314 = vmatprep.mubr.f32.mxu0 0.0
    %1315 = vmatmul.mubr.f32.gmra.mrb[0].mxu0 %v1205
    %v1316 = vpop.f32.mrb[0].mxu0
    %v1317 = vadd.f32 0.0, %v1316
    %v1318 = vpop.f32.mrb[0].mxu0
    %1319 = vmatprep.mubr.f32.mxu0 0.0
    %1320 = vmatmul.mubr.f32.gmra.mrb[0].mxu0 %v1206
    %v1321 = vpop.f32.mrb[0].mxu0
    %v1322 = vadd.f32 0.0, %v1321
    %v1323 = vpop.f32.mrb[0].mxu0
    %1324 = vmatprep.mubr.f32.mxu0 0.0
    %1325 = vmatmul.mubr.f32.gmra.mrb[0].mxu0 %v1207
    %v1326 = vpop.f32.mrb[0].mxu0
    %v1327 = vadd.f32 0.0, %v1326
    %v1328 = vpop.f32.mrb[0].mxu0
    %1329 = vmatprep.mubr.f32.mxu0 0.0
    %1330 = vmatmul.mubr.f32.gmra.mrb[0].mxu0 %v1208
    %v1331 = vpop.f32.mrb[0].mxu0
    %v1332 = vadd.f32 0.0, %v1331
    %v1333 = vpop.f32.mrb[0].mxu0
    %1334 = vdwg.mxu0
    %v1335 = vmul.f32 %v1277, %v324
    %v1336 = vmul.f32 %v1282, %v334
    %v1337 = vadd.f32 %v1335, %v1336
    %v1338 = vmul.f32 %v1287, %v343
    %v1339 = vadd.f32 %v1337, %v1338
    %v1340 = vmul.f32 %v1277, %v328
    %v1341 = vmul.f32 %v1282, %v337
    %v1342 = vadd.f32 %v1340, %v1341
    %v1343 = vmul.f32 %v1287, %v345
    %v1344 = vadd.f32 %v1342, %v1343
    %v1345 = vmul.f32 %v1277, %v332
    %v1346 = vmul.f32 %v1282, %v341
    %v1347 = vadd.f32 %v1345, %v1346
    %v1348 = vmul.f32 %v1287, %v348
    %v1349 = vadd.f32 %v1347, %v1348
    %v1350 = vmul.f32 %v1292, %v324
    %v1351 = vmul.f32 %v1297, %v334
    %v1352 = vadd.f32 %v1350, %v1351
    %v1353 = vmul.f32 %v1302, %v343
    %v1354 = vadd.f32 %v1352, %v1353
    %v1355 = vmul.f32 %v1292, %v328
    %v1356 = vmul.f32 %v1297, %v337
    %v1357 = vadd.f32 %v1355, %v1356
    %v1358 = vmul.f32 %v1302, %v345
    %v1359 = vadd.f32 %v1357, %v1358
    %v1360 = vmul.f32 %v1292, %v332
    %v1361 = vmul.f32 %v1297, %v341
    %v1362 = vadd.f32 %v1360, %v1361
    %v1363 = vmul.f32 %v1302, %v348
    %v1364 = vadd.f32 %v1362, %v1363
    %v1365 = vmul.f32 %v1307, %v324
    %v1366 = vmul.f32 %v1312, %v334
    %v1367 = vadd.f32 %v1365, %v1366
    %v1368 = vmul.f32 %v1317, %v343
    %v1369 = vadd.f32 %v1367, %v1368
    %v1370 = vmul.f32 %v1307, %v328
    %v1371 = vmul.f32 %v1312, %v337
    %v1372 = vadd.f32 %v1370, %v1371
    %v1373 = vmul.f32 %v1317, %v345
    %v1374 = vadd.f32 %v1372, %v1373
    %v1375 = vmul.f32 %v1307, %v332
    %v1376 = vmul.f32 %v1312, %v341
    %v1377 = vadd.f32 %v1375, %v1376
    %v1378 = vmul.f32 %v1317, %v348
    %v1379 = vadd.f32 %v1377, %v1378
    %v1380 = vmul.f32 %v1277, %v372
    %v1381 = vmul.f32 %v1282, %v376
    %v1382 = vadd.f32 %v1380, %v1381
    %v1383 = vmul.f32 %v1287, %v380
    %v1384 = vadd.f32 %v1382, %v1383
    %v1385 = vadd.f32 %v1384, %v1322
    %v1386 = vmul.f32 %v1292, %v372
    %v1387 = vmul.f32 %v1297, %v376
    %v1388 = vadd.f32 %v1386, %v1387
    %v1389 = vmul.f32 %v1302, %v380
    %v1390 = vadd.f32 %v1388, %v1389
    %v1391 = vadd.f32 %v1390, %v1327
    %v1392 = vmul.f32 %v1307, %v372
    %v1393 = vmul.f32 %v1312, %v376
    %v1394 = vadd.f32 %v1392, %v1393
    %v1395 = vmul.f32 %v1317, %v380
    %v1396 = vadd.f32 %v1394, %v1395
    %v1397 = vadd.f32 %v1396, %v1332
    %v1398 = vsel %vm1209, 1, 0
    %v1399 = vlaneseq
    %v1400 = vshrl.u32 %v1399, 7
    %v1401 = vsub.s32 0, %v1400
    %v1402 = vrot.slane %v1398, %v1401
    %vm1403 = vcmp.eq.s32.totalorder %v1402, 1
    %v1404 = vsel %vm1403, %v1339, %v1197
    %v1405 = vsel %vm1403, %v1344, %v1198
    %v1406 = vsel %vm1403, %v1349, %v1199
    %v1407 = vsel %vm1403, %v1354, %v1200
    %v1408 = vsel %vm1403, %v1359, %v1201
    %v1409 = vsel %vm1403, %v1364, %v1202
    %v1410 = vsel %vm1403, %v1369, %v1203
    %v1411 = vsel %vm1403, %v1374, %v1204
    %v1412 = vsel %vm1403, %v1379, %v1205
    %v1413 = vsel %vm1403, %v1385, %v1206
    %v1414 = vsel %vm1403, %v1391, %v1207
    %v1415 = vsel %vm1403, %v1397, %v1208
    %vm1416 = vcmp.eq.f32.partialorder %v368, 6.0
    %1417 = vmatprep.subr.mxu0 0.0
    %1418 = vmatpush1.msra.mxu0 %v352
    %1419 = vmatprep.subr.mxu0 0.0
    %1420 = vmatpush1.msra.mxu0 %v353
    %1421 = vmatprep.subr.mxu0 0.0
    %1422 = vmatpush1.msra.mxu0 %v354
    %1423 = vmatprep.subr.mxu0 0.0
    %1424 = vmatpush1.msra.mxu0 %v355
    %1425 = vmatprep.subr.mxu0 0.0
    %1426 = vmatpush1.msra.mxu0 %v356
    %1427 = vmatprep.subr.mxu0 0.0
    %1428 = vmatpush1.msra.mxu0 %v357
    %1429 = vmatprep.subr.mxu0 0.0
    %1430 = vmatpush1.msra.mxu0 %v358
    %1431 = vmatprep.subr.mxu0 0.0
    %1432 = vmatpush1.msra.mxu0 %v359
    %1433 = vmatprep.subr.mxu0 0.0
    %1434 = vmatpush1.msra.mxu0 %v360
    %1435 = vmatprep.subr.mxu0 0.0
    %1436 = vmatpush1.msra.mxu0 %v361
    %1437 = vmatprep.subr.mxu0 0.0
    %1438 = vmatpush1.msra.mxu0 %v362
    %1439 = vmatprep.subr.mxu0 0.0
    %1440 = vmatpush1.msra.mxu0 %v363
    %1441 = vmatprep.subr.mxu0 0.0
    %1442 = vmatpush1.msra.mxu0 %v364
    %1443 = vmatprep.subr.mxu0 0.0
    %1444 = vmatpush1.msra.mxu0 %v365
    %1445 = vmatprep.subr.mxu0 0.0
    %1446 = vmatpush1.msra.mxu0 %v366
    %1447 = vmatprep.subr.mxu0 0.0
    %1448 = vmatpush1.msra.mxu0 %v367
    %1449 = vmatprep.subr.mxu0 0.0
    %1450 = vmatpush1.msra.mxu0 0.0
    %1451 = vmatprep.subr.mxu0 0.0
    %1452 = vmatpush1.msra.mxu0 0.0
    %1453 = vmatprep.subr.mxu0 0.0
    %1454 = vmatpush1.msra.mxu0 0.0
    %1455 = vmatprep.subr.mxu0 0.0
    %1456 = vmatpush1.msra.mxu0 0.0
    %1457 = vmatprep.subr.mxu0 0.0
    %1458 = vmatpush1.msra.mxu0 0.0
    %1459 = vmatprep.subr.mxu0 0.0
    %1460 = vmatpush1.msra.mxu0 0.0
    %1461 = vmatprep.subr.mxu0 0.0
    %1462 = vmatpush1.msra.mxu0 0.0
    %1463 = vmatprep.subr.mxu0 0.0
    %1464 = vmatpush1.msra.mxu0 0.0
    %1465 = vmatprep.subr.mxu0 0.0
    %1466 = vmatpush1.msra.mxu0 0.0
    %1467 = vmatprep.subr.mxu0 0.0
    %1468 = vmatpush1.msra.mxu0 0.0
    %1469 = vmatprep.subr.mxu0 0.0
    %1470 = vmatpush1.msra.mxu0 0.0
    %1471 = vmatprep.subr.mxu0 0.0
    %1472 = vmatpush1.msra.mxu0 0.0
    %1473 = vmatprep.subr.mxu0 0.0
    %1474 = vmatpush1.msra.mxu0 0.0
    %1475 = vmatprep.subr.mxu0 0.0
    %1476 = vmatpush1.msra.mxu0 0.0
    %1477 = vmatprep.subr.mxu0 0.0
    %1478 = vmatpush1.msra.mxu0 0.0
    %1479 = vmatprep.subr.mxu0 0.0
    %1480 = vmatpush1.msra.mxu0 0.0
    %1481 = vmatprep.mubr.f32.mxu0 0.0
    %1482 = vmatmul.mubr.f32.gmra.mrb[0].mxu0 %v1404
    %v1483 = vpop.f32.mrb[0].mxu0
    %v1484 = vadd.f32 0.0, %v1483
    %v1485 = vpop.f32.mrb[0].mxu0
    %1486 = vmatprep.mubr.f32.mxu0 0.0
    %1487 = vmatmul.mubr.f32.gmra.mrb[0].mxu0 %v1405
    %v1488 = vpop.f32.mrb[0].mxu0
    %v1489 = vadd.f32 0.0, %v1488
    %v1490 = vpop.f32.mrb[0].mxu0
    %1491 = vmatprep.mubr.f32.mxu0 0.0
    %1492 = vmatmul.mubr.f32.gmra.mrb[0].mxu0 %v1406
    %v1493 = vpop.f32.mrb[0].mxu0
    %v1494 = vadd.f32 0.0, %v1493
    %v1495 = vpop.f32.mrb[0].mxu0
    %1496 = vmatprep.mubr.f32.mxu0 0.0
    %1497 = vmatmul.mubr.f32.gmra.mrb[0].mxu0 %v1407
    %v1498 = vpop.f32.mrb[0].mxu0
    %v1499 = vadd.f32 0.0, %v1498
    %v1500 = vpop.f32.mrb[0].mxu0
    %1501 = vmatprep.mubr.f32.mxu0 0.0
    %1502 = vmatmul.mubr.f32.gmra.mrb[0].mxu0 %v1408
    %v1503 = vpop.f32.mrb[0].mxu0
    %v1504 = vadd.f32 0.0, %v1503
    %v1505 = vpop.f32.mrb[0].mxu0
    %1506 = vmatprep.mubr.f32.mxu0 0.0
    %1507 = vmatmul.mubr.f32.gmra.mrb[0].mxu0 %v1409
    %v1508 = vpop.f32.mrb[0].mxu0
    %v1509 = vadd.f32 0.0, %v1508
    %v1510 = vpop.f32.mrb[0].mxu0
    %1511 = vmatprep.mubr.f32.mxu0 0.0
    %1512 = vmatmul.mubr.f32.gmra.mrb[0].mxu0 %v1410
    %v1513 = vpop.f32.mrb[0].mxu0
    %v1514 = vadd.f32 0.0, %v1513
    %v1515 = vpop.f32.mrb[0].mxu0
    %1516 = vmatprep.mubr.f32.mxu0 0.0
    %1517 = vmatmul.mubr.f32.gmra.mrb[0].mxu0 %v1411
    %v1518 = vpop.f32.mrb[0].mxu0
    %v1519 = vadd.f32 0.0, %v1518
    %v1520 = vpop.f32.mrb[0].mxu0
    %1521 = vmatprep.mubr.f32.mxu0 0.0
    %1522 = vmatmul.mubr.f32.gmra.mrb[0].mxu0 %v1412
    %v1523 = vpop.f32.mrb[0].mxu0
    %v1524 = vadd.f32 0.0, %v1523
    %v1525 = vpop.f32.mrb[0].mxu0
    %1526 = vmatprep.mubr.f32.mxu0 0.0
    %1527 = vmatmul.mubr.f32.gmra.mrb[0].mxu0 %v1413
    %v1528 = vpop.f32.mrb[0].mxu0
    %v1529 = vadd.f32 0.0, %v1528
    %v1530 = vpop.f32.mrb[0].mxu0
    %1531 = vmatprep.mubr.f32.mxu0 0.0
    %1532 = vmatmul.mubr.f32.gmra.mrb[0].mxu0 %v1414
    %v1533 = vpop.f32.mrb[0].mxu0
    %v1534 = vadd.f32 0.0, %v1533
    %v1535 = vpop.f32.mrb[0].mxu0
    %1536 = vmatprep.mubr.f32.mxu0 0.0
    %1537 = vmatmul.mubr.f32.gmra.mrb[0].mxu0 %v1415
    %v1538 = vpop.f32.mrb[0].mxu0
    %v1539 = vadd.f32 0.0, %v1538
    %v1540 = vpop.f32.mrb[0].mxu0
    %1541 = vdwg.mxu0
    %v1542 = vmul.f32 %v1484, %v324
    %v1543 = vmul.f32 %v1489, %v334
    %v1544 = vadd.f32 %v1542, %v1543
    %v1545 = vmul.f32 %v1494, %v343
    %v1546 = vadd.f32 %v1544, %v1545
    %v1547 = vmul.f32 %v1484, %v328
    %v1548 = vmul.f32 %v1489, %v337
    %v1549 = vadd.f32 %v1547, %v1548
    %v1550 = vmul.f32 %v1494, %v345
    %v1551 = vadd.f32 %v1549, %v1550
    %v1552 = vmul.f32 %v1484, %v332
    %v1553 = vmul.f32 %v1489, %v341
    %v1554 = vadd.f32 %v1552, %v1553
    %v1555 = vmul.f32 %v1494, %v348
    %v1556 = vadd.f32 %v1554, %v1555
    %v1557 = vmul.f32 %v1499, %v324
    %v1558 = vmul.f32 %v1504, %v334
    %v1559 = vadd.f32 %v1557, %v1558
    %v1560 = vmul.f32 %v1509, %v343
    %v1561 = vadd.f32 %v1559, %v1560
    %v1562 = vmul.f32 %v1499, %v328
    %v1563 = vmul.f32 %v1504, %v337
    %v1564 = vadd.f32 %v1562, %v1563
    %v1565 = vmul.f32 %v1509, %v345
    %v1566 = vadd.f32 %v1564, %v1565
    %v1567 = vmul.f32 %v1499, %v332
    %v1568 = vmul.f32 %v1504, %v341
    %v1569 = vadd.f32 %v1567, %v1568
    %v1570 = vmul.f32 %v1509, %v348
    %v1571 = vadd.f32 %v1569, %v1570
    %v1572 = vmul.f32 %v1514, %v324
    %v1573 = vmul.f32 %v1519, %v334
    %v1574 = vadd.f32 %v1572, %v1573
    %v1575 = vmul.f32 %v1524, %v343
    %v1576 = vadd.f32 %v1574, %v1575
    %v1577 = vmul.f32 %v1514, %v328
    %v1578 = vmul.f32 %v1519, %v337
    %v1579 = vadd.f32 %v1577, %v1578
    %v1580 = vmul.f32 %v1524, %v345
    %v1581 = vadd.f32 %v1579, %v1580
    %v1582 = vmul.f32 %v1514, %v332
    %v1583 = vmul.f32 %v1519, %v341
    %v1584 = vadd.f32 %v1582, %v1583
    %v1585 = vmul.f32 %v1524, %v348
    %v1586 = vadd.f32 %v1584, %v1585
    %v1587 = vmul.f32 %v1484, %v372
    %v1588 = vmul.f32 %v1489, %v376
    %v1589 = vadd.f32 %v1587, %v1588
    %v1590 = vmul.f32 %v1494, %v380
    %v1591 = vadd.f32 %v1589, %v1590
    %v1592 = vadd.f32 %v1591, %v1529
    %v1593 = vmul.f32 %v1499, %v372
    %v1594 = vmul.f32 %v1504, %v376
    %v1595 = vadd.f32 %v1593, %v1594
    %v1596 = vmul.f32 %v1509, %v380
    %v1597 = vadd.f32 %v1595, %v1596
    %v1598 = vadd.f32 %v1597, %v1534
    %v1599 = vmul.f32 %v1514, %v372
    %v1600 = vmul.f32 %v1519, %v376
    %v1601 = vadd.f32 %v1599, %v1600
    %v1602 = vmul.f32 %v1524, %v380
    %v1603 = vadd.f32 %v1601, %v1602
    %v1604 = vadd.f32 %v1603, %v1539
    %v1605 = vsel %vm1416, 1, 0
    %v1606 = vlaneseq
    %v1607 = vshrl.u32 %v1606, 7
    %v1608 = vsub.s32 0, %v1607
    %v1609 = vrot.slane %v1605, %v1608
    %vm1610 = vcmp.eq.s32.totalorder %v1609, 1
    %v1611 = vsel %vm1610, %v1546, %v1404
    %v1612 = vsel %vm1610, %v1551, %v1405
    %v1613 = vsel %vm1610, %v1556, %v1406
    %v1614 = vsel %vm1610, %v1561, %v1407
    %v1615 = vsel %vm1610, %v1566, %v1408
    %v1616 = vsel %vm1610, %v1571, %v1409
    %v1617 = vsel %vm1610, %v1576, %v1410
    %v1618 = vsel %vm1610, %v1581, %v1411
    %v1619 = vsel %vm1610, %v1586, %v1412
    %v1620 = vsel %vm1610, %v1592, %v1413
    %v1621 = vsel %vm1610, %v1598, %v1414
    %v1622 = vsel %vm1610, %v1604, %v1415
    %vm1623 = vcmp.eq.f32.partialorder %v368, 7.0
    %1624 = vmatprep.subr.mxu0 0.0
    %1625 = vmatpush1.msra.mxu0 %v352
    %1626 = vmatprep.subr.mxu0 0.0
    %1627 = vmatpush1.msra.mxu0 %v353
    %1628 = vmatprep.subr.mxu0 0.0
    %1629 = vmatpush1.msra.mxu0 %v354
    %1630 = vmatprep.subr.mxu0 0.0
    %1631 = vmatpush1.msra.mxu0 %v355
    %1632 = vmatprep.subr.mxu0 0.0
    %1633 = vmatpush1.msra.mxu0 %v356
    %1634 = vmatprep.subr.mxu0 0.0
    %1635 = vmatpush1.msra.mxu0 %v357
    %1636 = vmatprep.subr.mxu0 0.0
    %1637 = vmatpush1.msra.mxu0 %v358
    %1638 = vmatprep.subr.mxu0 0.0
    %1639 = vmatpush1.msra.mxu0 %v359
    %1640 = vmatprep.subr.mxu0 0.0
    %1641 = vmatpush1.msra.mxu0 %v360
    %1642 = vmatprep.subr.mxu0 0.0
    %1643 = vmatpush1.msra.mxu0 %v361
    %1644 = vmatprep.subr.mxu0 0.0
    %1645 = vmatpush1.msra.mxu0 %v362
    %1646 = vmatprep.subr.mxu0 0.0
    %1647 = vmatpush1.msra.mxu0 %v363
    %1648 = vmatprep.subr.mxu0 0.0
    %1649 = vmatpush1.msra.mxu0 %v364
    %1650 = vmatprep.subr.mxu0 0.0
    %1651 = vmatpush1.msra.mxu0 %v365
    %1652 = vmatprep.subr.mxu0 0.0
    %1653 = vmatpush1.msra.mxu0 %v366
    %1654 = vmatprep.subr.mxu0 0.0
    %1655 = vmatpush1.msra.mxu0 %v367
    %1656 = vmatprep.subr.mxu0 0.0
    %1657 = vmatpush1.msra.mxu0 0.0
    %1658 = vmatprep.subr.mxu0 0.0
    %1659 = vmatpush1.msra.mxu0 0.0
    %1660 = vmatprep.subr.mxu0 0.0
    %1661 = vmatpush1.msra.mxu0 0.0
    %1662 = vmatprep.subr.mxu0 0.0
    %1663 = vmatpush1.msra.mxu0 0.0
    %1664 = vmatprep.subr.mxu0 0.0
    %1665 = vmatpush1.msra.mxu0 0.0
    %1666 = vmatprep.subr.mxu0 0.0
    %1667 = vmatpush1.msra.mxu0 0.0
    %1668 = vmatprep.subr.mxu0 0.0
    %1669 = vmatpush1.msra.mxu0 0.0
    %1670 = vmatprep.subr.mxu0 0.0
    %1671 = vmatpush1.msra.mxu0 0.0
    %1672 = vmatprep.subr.mxu0 0.0
    %1673 = vmatpush1.msra.mxu0 0.0
    %1674 = vmatprep.subr.mxu0 0.0
    %1675 = vmatpush1.msra.mxu0 0.0
    %1676 = vmatprep.subr.mxu0 0.0
    %1677 = vmatpush1.msra.mxu0 0.0
    %1678 = vmatprep.subr.mxu0 0.0
    %1679 = vmatpush1.msra.mxu0 0.0
    %1680 = vmatprep.subr.mxu0 0.0
    %1681 = vmatpush1.msra.mxu0 0.0
    %1682 = vmatprep.subr.mxu0 0.0
    %1683 = vmatpush1.msra.mxu0 0.0
    %1684 = vmatprep.subr.mxu0 0.0
    %1685 = vmatpush1.msra.mxu0 0.0
    %1686 = vmatprep.subr.mxu0 0.0
    %1687 = vmatpush1.msra.mxu0 0.0
    %1688 = vmatprep.mubr.f32.mxu0 0.0
    %1689 = vmatmul.mubr.f32.gmra.mrb[0].mxu0 %v1611
    %v1690 = vpop.f32.mrb[0].mxu0
    %v1691 = vadd.f32 0.0, %v1690
    %v1692 = vpop.f32.mrb[0].mxu0
    %1693 = vmatprep.mubr.f32.mxu0 0.0
    %1694 = vmatmul.mubr.f32.gmra.mrb[0].mxu0 %v1612
    %v1695 = vpop.f32.mrb[0].mxu0
    %v1696 = vadd.f32 0.0, %v1695
    %v1697 = vpop.f32.mrb[0].mxu0
    %1698 = vmatprep.mubr.f32.mxu0 0.0
    %1699 = vmatmul.mubr.f32.gmra.mrb[0].mxu0 %v1613
    %v1700 = vpop.f32.mrb[0].mxu0
    %v1701 = vadd.f32 0.0, %v1700
    %v1702 = vpop.f32.mrb[0].mxu0
    %1703 = vmatprep.mubr.f32.mxu0 0.0
    %1704 = vmatmul.mubr.f32.gmra.mrb[0].mxu0 %v1614
    %v1705 = vpop.f32.mrb[0].mxu0
    %v1706 = vadd.f32 0.0, %v1705
    %v1707 = vpop.f32.mrb[0].mxu0
    %1708 = vmatprep.mubr.f32.mxu0 0.0
    %1709 = vmatmul.mubr.f32.gmra.mrb[0].mxu0 %v1615
    %v1710 = vpop.f32.mrb[0].mxu0
    %v1711 = vadd.f32 0.0, %v1710
    %v1712 = vpop.f32.mrb[0].mxu0
    %1713 = vmatprep.mubr.f32.mxu0 0.0
    %1714 = vmatmul.mubr.f32.gmra.mrb[0].mxu0 %v1616
    %v1715 = vpop.f32.mrb[0].mxu0
    %v1716 = vadd.f32 0.0, %v1715
    %v1717 = vpop.f32.mrb[0].mxu0
    %1718 = vmatprep.mubr.f32.mxu0 0.0
    %1719 = vmatmul.mubr.f32.gmra.mrb[0].mxu0 %v1617
    %v1720 = vpop.f32.mrb[0].mxu0
    %v1721 = vadd.f32 0.0, %v1720
    %v1722 = vpop.f32.mrb[0].mxu0
    %1723 = vmatprep.mubr.f32.mxu0 0.0
    %1724 = vmatmul.mubr.f32.gmra.mrb[0].mxu0 %v1618
    %v1725 = vpop.f32.mrb[0].mxu0
    %v1726 = vadd.f32 0.0, %v1725
    %v1727 = vpop.f32.mrb[0].mxu0
    %1728 = vmatprep.mubr.f32.mxu0 0.0
    %1729 = vmatmul.mubr.f32.gmra.mrb[0].mxu0 %v1619
    %v1730 = vpop.f32.mrb[0].mxu0
    %v1731 = vadd.f32 0.0, %v1730
    %v1732 = vpop.f32.mrb[0].mxu0
    %1733 = vmatprep.mubr.f32.mxu0 0.0
    %1734 = vmatmul.mubr.f32.gmra.mrb[0].mxu0 %v1620
    %v1735 = vpop.f32.mrb[0].mxu0
    %v1736 = vadd.f32 0.0, %v1735
    %v1737 = vpop.f32.mrb[0].mxu0
    %1738 = vmatprep.mubr.f32.mxu0 0.0
    %1739 = vmatmul.mubr.f32.gmra.mrb[0].mxu0 %v1621
    %v1740 = vpop.f32.mrb[0].mxu0
    %v1741 = vadd.f32 0.0, %v1740
    %v1742 = vpop.f32.mrb[0].mxu0
    %1743 = vmatprep.mubr.f32.mxu0 0.0
    %1744 = vmatmul.mubr.f32.gmra.mrb[0].mxu0 %v1622
    %v1745 = vpop.f32.mrb[0].mxu0
    %v1746 = vadd.f32 0.0, %v1745
    %v1747 = vpop.f32.mrb[0].mxu0
    %1748 = vdwg.mxu0
    %v1749 = vmul.f32 %v1691, %v324
    %v1750 = vmul.f32 %v1696, %v334
    %v1751 = vadd.f32 %v1749, %v1750
    %v1752 = vmul.f32 %v1701, %v343
    %v1753 = vadd.f32 %v1751, %v1752
    %v1754 = vmul.f32 %v1691, %v328
    %v1755 = vmul.f32 %v1696, %v337
    %v1756 = vadd.f32 %v1754, %v1755
    %v1757 = vmul.f32 %v1701, %v345
    %v1758 = vadd.f32 %v1756, %v1757
    %v1759 = vmul.f32 %v1691, %v332
    %v1760 = vmul.f32 %v1696, %v341
    %v1761 = vadd.f32 %v1759, %v1760
    %v1762 = vmul.f32 %v1701, %v348
    %v1763 = vadd.f32 %v1761, %v1762
    %v1764 = vmul.f32 %v1706, %v324
    %v1765 = vmul.f32 %v1711, %v334
    %v1766 = vadd.f32 %v1764, %v1765
    %v1767 = vmul.f32 %v1716, %v343
    %v1768 = vadd.f32 %v1766, %v1767
    %v1769 = vmul.f32 %v1706, %v328
    %v1770 = vmul.f32 %v1711, %v337
    %v1771 = vadd.f32 %v1769, %v1770
    %v1772 = vmul.f32 %v1716, %v345
    %v1773 = vadd.f32 %v1771, %v1772
    %v1774 = vmul.f32 %v1706, %v332
    %v1775 = vmul.f32 %v1711, %v341
    %v1776 = vadd.f32 %v1774, %v1775
    %v1777 = vmul.f32 %v1716, %v348
    %v1778 = vadd.f32 %v1776, %v1777
    %v1779 = vmul.f32 %v1721, %v324
    %v1780 = vmul.f32 %v1726, %v334
    %v1781 = vadd.f32 %v1779, %v1780
    %v1782 = vmul.f32 %v1731, %v343
    %v1783 = vadd.f32 %v1781, %v1782
    %v1784 = vmul.f32 %v1721, %v328
    %v1785 = vmul.f32 %v1726, %v337
    %v1786 = vadd.f32 %v1784, %v1785
    %v1787 = vmul.f32 %v1731, %v345
    %v1788 = vadd.f32 %v1786, %v1787
    %v1789 = vmul.f32 %v1721, %v332
    %v1790 = vmul.f32 %v1726, %v341
    %v1791 = vadd.f32 %v1789, %v1790
    %v1792 = vmul.f32 %v1731, %v348
    %v1793 = vadd.f32 %v1791, %v1792
    %v1794 = vmul.f32 %v1691, %v372
    %v1795 = vmul.f32 %v1696, %v376
    %v1796 = vadd.f32 %v1794, %v1795
    %v1797 = vmul.f32 %v1701, %v380
    %v1798 = vadd.f32 %v1796, %v1797
    %v1799 = vadd.f32 %v1798, %v1736
    %v1800 = vmul.f32 %v1706, %v372
    %v1801 = vmul.f32 %v1711, %v376
    %v1802 = vadd.f32 %v1800, %v1801
    %v1803 = vmul.f32 %v1716, %v380
    %v1804 = vadd.f32 %v1802, %v1803
    %v1805 = vadd.f32 %v1804, %v1741
    %v1806 = vmul.f32 %v1721, %v372
    %v1807 = vmul.f32 %v1726, %v376
    %v1808 = vadd.f32 %v1806, %v1807
    %v1809 = vmul.f32 %v1731, %v380
    %v1810 = vadd.f32 %v1808, %v1809
    %v1811 = vadd.f32 %v1810, %v1746
    %v1812 = vsel %vm1623, 1, 0
    %v1813 = vlaneseq
    %v1814 = vshrl.u32 %v1813, 7
    %v1815 = vsub.s32 0, %v1814
    %v1816 = vrot.slane %v1812, %v1815
    %vm1817 = vcmp.eq.s32.totalorder %v1816, 1
    %v1818 = vsel %vm1817, %v1753, %v1611
    %v1819 = vsel %vm1817, %v1758, %v1612
    %v1820 = vsel %vm1817, %v1763, %v1613
    %v1821 = vsel %vm1817, %v1768, %v1614
    %v1822 = vsel %vm1817, %v1773, %v1615
    %v1823 = vsel %vm1817, %v1778, %v1616
    %v1824 = vsel %vm1817, %v1783, %v1617
    %v1825 = vsel %vm1817, %v1788, %v1618
    %v1826 = vsel %vm1817, %v1793, %v1619
    %v1827 = vsel %vm1817, %v1799, %v1620
    %v1828 = vsel %vm1817, %v1805, %v1621
    %v1829 = vsel %vm1817, %v1811, %v1622
    %vm1830 = vcmp.eq.f32.partialorder %v368, 8.0
    %1831 = vmatprep.subr.mxu0 0.0
    %1832 = vmatpush1.msra.mxu0 %v352
    %1833 = vmatprep.subr.mxu0 0.0
    %1834 = vmatpush1.msra.mxu0 %v353
    %1835 = vmatprep.subr.mxu0 0.0
    %1836 = vmatpush1.msra.mxu0 %v354
    %1837 = vmatprep.subr.mxu0 0.0
    %1838 = vmatpush1.msra.mxu0 %v355
    %1839 = vmatprep.subr.mxu0 0.0
    %1840 = vmatpush1.msra.mxu0 %v356
    %1841 = vmatprep.subr.mxu0 0.0
    %1842 = vmatpush1.msra.mxu0 %v357
    %1843 = vmatprep.subr.mxu0 0.0
    %1844 = vmatpush1.msra.mxu0 %v358
    %1845 = vmatprep.subr.mxu0 0.0
    %1846 = vmatpush1.msra.mxu0 %v359
    %1847 = vmatprep.subr.mxu0 0.0
    %1848 = vmatpush1.msra.mxu0 %v360
    %1849 = vmatprep.subr.mxu0 0.0
    %1850 = vmatpush1.msra.mxu0 %v361
    %1851 = vmatprep.subr.mxu0 0.0
    %1852 = vmatpush1.msra.mxu0 %v362
    %1853 = vmatprep.subr.mxu0 0.0
    %1854 = vmatpush1.msra.mxu0 %v363
    %1855 = vmatprep.subr.mxu0 0.0
    %1856 = vmatpush1.msra.mxu0 %v364
    %1857 = vmatprep.subr.mxu0 0.0
    %1858 = vmatpush1.msra.mxu0 %v365
    %1859 = vmatprep.subr.mxu0 0.0
    %1860 = vmatpush1.msra.mxu0 %v366
    %1861 = vmatprep.subr.mxu0 0.0
    %1862 = vmatpush1.msra.mxu0 %v367
    %1863 = vmatprep.subr.mxu0 0.0
    %1864 = vmatpush1.msra.mxu0 0.0
    %1865 = vmatprep.subr.mxu0 0.0
    %1866 = vmatpush1.msra.mxu0 0.0
    %1867 = vmatprep.subr.mxu0 0.0
    %1868 = vmatpush1.msra.mxu0 0.0
    %1869 = vmatprep.subr.mxu0 0.0
    %1870 = vmatpush1.msra.mxu0 0.0
    %1871 = vmatprep.subr.mxu0 0.0
    %1872 = vmatpush1.msra.mxu0 0.0
    %1873 = vmatprep.subr.mxu0 0.0
    %1874 = vmatpush1.msra.mxu0 0.0
    %1875 = vmatprep.subr.mxu0 0.0
    %1876 = vmatpush1.msra.mxu0 0.0
    %1877 = vmatprep.subr.mxu0 0.0
    %1878 = vmatpush1.msra.mxu0 0.0
    %1879 = vmatprep.subr.mxu0 0.0
    %1880 = vmatpush1.msra.mxu0 0.0
    %1881 = vmatprep.subr.mxu0 0.0
    %1882 = vmatpush1.msra.mxu0 0.0
    %1883 = vmatprep.subr.mxu0 0.0
    %1884 = vmatpush1.msra.mxu0 0.0
    %1885 = vmatprep.subr.mxu0 0.0
    %1886 = vmatpush1.msra.mxu0 0.0
    %1887 = vmatprep.subr.mxu0 0.0
    %1888 = vmatpush1.msra.mxu0 0.0
    %1889 = vmatprep.subr.mxu0 0.0
    %1890 = vmatpush1.msra.mxu0 0.0
    %1891 = vmatprep.subr.mxu0 0.0
    %1892 = vmatpush1.msra.mxu0 0.0
    %1893 = vmatprep.subr.mxu0 0.0
    %1894 = vmatpush1.msra.mxu0 0.0
    %1895 = vmatprep.mubr.f32.mxu0 0.0
    %1896 = vmatmul.mubr.f32.gmra.mrb[0].mxu0 %v1818
    %v1897 = vpop.f32.mrb[0].mxu0
    %v1898 = vadd.f32 0.0, %v1897
    %v1899 = vpop.f32.mrb[0].mxu0
    %1900 = vmatprep.mubr.f32.mxu0 0.0
    %1901 = vmatmul.mubr.f32.gmra.mrb[0].mxu0 %v1819
    %v1902 = vpop.f32.mrb[0].mxu0
    %v1903 = vadd.f32 0.0, %v1902
    %v1904 = vpop.f32.mrb[0].mxu0
    %1905 = vmatprep.mubr.f32.mxu0 0.0
    %1906 = vmatmul.mubr.f32.gmra.mrb[0].mxu0 %v1820
    %v1907 = vpop.f32.mrb[0].mxu0
    %v1908 = vadd.f32 0.0, %v1907
    %v1909 = vpop.f32.mrb[0].mxu0
    %1910 = vmatprep.mubr.f32.mxu0 0.0
    %1911 = vmatmul.mubr.f32.gmra.mrb[0].mxu0 %v1821
    %v1912 = vpop.f32.mrb[0].mxu0
    %v1913 = vadd.f32 0.0, %v1912
    %v1914 = vpop.f32.mrb[0].mxu0
    %1915 = vmatprep.mubr.f32.mxu0 0.0
    %1916 = vmatmul.mubr.f32.gmra.mrb[0].mxu0 %v1822
    %v1917 = vpop.f32.mrb[0].mxu0
    %v1918 = vadd.f32 0.0, %v1917
    %v1919 = vpop.f32.mrb[0].mxu0
    %1920 = vmatprep.mubr.f32.mxu0 0.0
    %1921 = vmatmul.mubr.f32.gmra.mrb[0].mxu0 %v1823
    %v1922 = vpop.f32.mrb[0].mxu0
    %v1923 = vadd.f32 0.0, %v1922
    %v1924 = vpop.f32.mrb[0].mxu0
    %1925 = vmatprep.mubr.f32.mxu0 0.0
    %1926 = vmatmul.mubr.f32.gmra.mrb[0].mxu0 %v1824
    %v1927 = vpop.f32.mrb[0].mxu0
    %v1928 = vadd.f32 0.0, %v1927
    %v1929 = vpop.f32.mrb[0].mxu0
    %1930 = vmatprep.mubr.f32.mxu0 0.0
    %1931 = vmatmul.mubr.f32.gmra.mrb[0].mxu0 %v1825
    %v1932 = vpop.f32.mrb[0].mxu0
    %v1933 = vadd.f32 0.0, %v1932
    %v1934 = vpop.f32.mrb[0].mxu0
    %1935 = vmatprep.mubr.f32.mxu0 0.0
    %1936 = vmatmul.mubr.f32.gmra.mrb[0].mxu0 %v1826
    %v1937 = vpop.f32.mrb[0].mxu0
    %v1938 = vadd.f32 0.0, %v1937
    %v1939 = vpop.f32.mrb[0].mxu0
    %1940 = vmatprep.mubr.f32.mxu0 0.0
    %1941 = vmatmul.mubr.f32.gmra.mrb[0].mxu0 %v1827
    %v1942 = vpop.f32.mrb[0].mxu0
    %v1943 = vadd.f32 0.0, %v1942
    %v1944 = vpop.f32.mrb[0].mxu0
    %1945 = vmatprep.mubr.f32.mxu0 0.0
    %1946 = vmatmul.mubr.f32.gmra.mrb[0].mxu0 %v1828
    %v1947 = vpop.f32.mrb[0].mxu0
    %v1948 = vadd.f32 0.0, %v1947
    %v1949 = vpop.f32.mrb[0].mxu0
    %1950 = vmatprep.mubr.f32.mxu0 0.0
    %1951 = vmatmul.mubr.f32.gmra.mrb[0].mxu0 %v1829
    %v1952 = vpop.f32.mrb[0].mxu0
    %v1953 = vadd.f32 0.0, %v1952
    %v1954 = vpop.f32.mrb[0].mxu0
    %1955 = vdwg.mxu0
    %v1956 = vmul.f32 %v1898, %v324
    %v1957 = vmul.f32 %v1903, %v334
    %v1958 = vadd.f32 %v1956, %v1957
    %v1959 = vmul.f32 %v1908, %v343
    %v1960 = vadd.f32 %v1958, %v1959
    %v1961 = vmul.f32 %v1898, %v328
    %v1962 = vmul.f32 %v1903, %v337
    %v1963 = vadd.f32 %v1961, %v1962
    %v1964 = vmul.f32 %v1908, %v345
    %v1965 = vadd.f32 %v1963, %v1964
    %v1966 = vmul.f32 %v1898, %v332
    %v1967 = vmul.f32 %v1903, %v341
    %v1968 = vadd.f32 %v1966, %v1967
    %v1969 = vmul.f32 %v1908, %v348
    %v1970 = vadd.f32 %v1968, %v1969
    %v1971 = vmul.f32 %v1913, %v324
    %v1972 = vmul.f32 %v1918, %v334
    %v1973 = vadd.f32 %v1971, %v1972
    %v1974 = vmul.f32 %v1923, %v343
    %v1975 = vadd.f32 %v1973, %v1974
    %v1976 = vmul.f32 %v1913, %v328
    %v1977 = vmul.f32 %v1918, %v337
    %v1978 = vadd.f32 %v1976, %v1977
    %v1979 = vmul.f32 %v1923, %v345
    %v1980 = vadd.f32 %v1978, %v1979
    %v1981 = vmul.f32 %v1913, %v332
    %v1982 = vmul.f32 %v1918, %v341
    %v1983 = vadd.f32 %v1981, %v1982
    %v1984 = vmul.f32 %v1923, %v348
    %v1985 = vadd.f32 %v1983, %v1984
    %v1986 = vmul.f32 %v1928, %v324
    %v1987 = vmul.f32 %v1933, %v334
    %v1988 = vadd.f32 %v1986, %v1987
    %v1989 = vmul.f32 %v1938, %v343
    %v1990 = vadd.f32 %v1988, %v1989
    %v1991 = vmul.f32 %v1928, %v328
    %v1992 = vmul.f32 %v1933, %v337
    %v1993 = vadd.f32 %v1991, %v1992
    %v1994 = vmul.f32 %v1938, %v345
    %v1995 = vadd.f32 %v1993, %v1994
    %v1996 = vmul.f32 %v1928, %v332
    %v1997 = vmul.f32 %v1933, %v341
    %v1998 = vadd.f32 %v1996, %v1997
    %v1999 = vmul.f32 %v1938, %v348
    %v2000 = vadd.f32 %v1998, %v1999
    %v2001 = vmul.f32 %v1898, %v372
    %v2002 = vmul.f32 %v1903, %v376
    %v2003 = vadd.f32 %v2001, %v2002
    %v2004 = vmul.f32 %v1908, %v380
    %v2005 = vadd.f32 %v2003, %v2004
    %v2006 = vadd.f32 %v2005, %v1943
    %v2007 = vmul.f32 %v1913, %v372
    %v2008 = vmul.f32 %v1918, %v376
    %v2009 = vadd.f32 %v2007, %v2008
    %v2010 = vmul.f32 %v1923, %v380
    %v2011 = vadd.f32 %v2009, %v2010
    %v2012 = vadd.f32 %v2011, %v1948
    %v2013 = vmul.f32 %v1928, %v372
    %v2014 = vmul.f32 %v1933, %v376
    %v2015 = vadd.f32 %v2013, %v2014
    %v2016 = vmul.f32 %v1938, %v380
    %v2017 = vadd.f32 %v2015, %v2016
    %v2018 = vadd.f32 %v2017, %v1953
    %v2019 = vsel %vm1830, 1, 0
    %v2020 = vlaneseq
    %v2021 = vshrl.u32 %v2020, 7
    %v2022 = vsub.s32 0, %v2021
    %v2023 = vrot.slane %v2019, %v2022
    %vm2024 = vcmp.eq.s32.totalorder %v2023, 1
    %v2025 = vsel %vm2024, %v1960, %v1818
    %v2026 = vsel %vm2024, %v1965, %v1819
    %v2027 = vsel %vm2024, %v1970, %v1820
    %v2028 = vsel %vm2024, %v1975, %v1821
    %v2029 = vsel %vm2024, %v1980, %v1822
    %v2030 = vsel %vm2024, %v1985, %v1823
    %v2031 = vsel %vm2024, %v1990, %v1824
    %v2032 = vsel %vm2024, %v1995, %v1825
    %v2033 = vsel %vm2024, %v2000, %v1826
    %v2034 = vsel %vm2024, %v2006, %v1827
    %v2035 = vsel %vm2024, %v2012, %v1828
    %v2036 = vsel %vm2024, %v2018, %v1829
    %v2037 = vld [vmem:[%s2] sm:$0x1]
    %v2038 = vld [vmem:[%s2 + $0x1] sm:$0x1]
    %v2039 = vld [vmem:[%s2 + $0x2] sm:$0x1]
    %v2040 = vlaneseq
    %v2041 = vshrl.u32 %v2040, 7
    %v2042 = vsub.s32 0, %v2041
    %v2043 = vrot.slane %v2037, %v2042
    %v2044 = vmul.f32 %v2025, %v2043
    %v2045 = vlaneseq
    %v2046 = vshrl.u32 %v2045, 7
    %v2047 = vsub.s32 0, %v2046
    %v2048 = vrot.slane %v2038, %v2047
    %v2049 = vmul.f32 %v2026, %v2048
    %v2050 = vadd.f32 %v2044, %v2049
    %v2051 = vlaneseq
    %v2052 = vshrl.u32 %v2051, 7
    %v2053 = vsub.s32 0, %v2052
    %v2054 = vrot.slane %v2039, %v2053
    %v2055 = vmul.f32 %v2027, %v2054
    %v2056 = vadd.f32 %v2050, %v2055
    %v2057 = vsub.f32 %v2034, %v2056
    %v2058 = vmul.f32 %v2028, %v2043
    %v2059 = vmul.f32 %v2029, %v2048
    %v2060 = vadd.f32 %v2058, %v2059
    %v2061 = vmul.f32 %v2030, %v2054
    %v2062 = vadd.f32 %v2060, %v2061
    %v2063 = vsub.f32 %v2035, %v2062
    %v2064 = vmul.f32 %v2031, %v2043
    %v2065 = vmul.f32 %v2032, %v2048
    %v2066 = vadd.f32 %v2064, %v2065
    %v2067 = vmul.f32 %v2033, %v2054
    %v2068 = vadd.f32 %v2066, %v2067
    %v2069 = vsub.f32 %v2036, %v2068
    %v2070 = vld [vmem:[#allocation7] sm:$0x1]
    %v2071 = vlaneseq
    %v2072 = vshrl.u32 %v2071, 7
    %v2073 = vsub.s32 0, %v2072
    %v2074 = vrot.slane %v2070, %v2073
    %v2075 = vmul.f32 %v2025, %v2074
    %v2076 = vld [vmem:[#allocation7 + $0x4] sm:$0x1]
    %v2077 = vlaneseq
    %v2078 = vshrl.u32 %v2077, 7
    %v2079 = vsub.s32 0, %v2078
    %v2080 = vrot.slane %v2076, %v2079
    %v2081 = vmul.f32 %v2026, %v2080
    %v2082 = vadd.f32 %v2075, %v2081
    %v2083 = vld [vmem:[#allocation7 + $0x8] sm:$0x1]
    %v2084 = vlaneseq
    %v2085 = vshrl.u32 %v2084, 7
    %v2086 = vsub.s32 0, %v2085
    %v2087 = vrot.slane %v2083, %v2086
    %v2088 = vmul.f32 %v2027, %v2087
    %v2089 = vadd.f32 %v2082, %v2088
    %v2090 = vld [vmem:[#allocation7 + $0xc] sm:$0x1]
    %v2091 = vlaneseq
    %v2092 = vshrl.u32 %v2091, 7
    %v2093 = vsub.s32 0, %v2092
    %v2094 = vrot.slane %v2090, %v2093
    %v2095 = vmul.f32 %v2057, %v2094
    %v2096 = vadd.f32 %v2089, %v2095
    %2097 = vst [vmem:[#allocation10] sm:$0xff] %v2096
    %v2098 = vld [vmem:[#allocation7 + $0x1] sm:$0x1]
    %v2099 = vlaneseq
    %v2100 = vshrl.u32 %v2099, 7
    %v2101 = vsub.s32 0, %v2100
    %v2102 = vrot.slane %v2098, %v2101
    %v2103 = vmul.f32 %v2025, %v2102
    %v2104 = vld [vmem:[#allocation7 + $0x5] sm:$0x1]
    %v2105 = vlaneseq
    %v2106 = vshrl.u32 %v2105, 7
    %v2107 = vsub.s32 0, %v2106
    %v2108 = vrot.slane %v2104, %v2107
    %v2109 = vmul.f32 %v2026, %v2108
    %v2110 = vadd.f32 %v2103, %v2109
    %v2111 = vld [vmem:[#allocation7 + $0x9] sm:$0x1]
    %v2112 = vlaneseq
    %v2113 = vshrl.u32 %v2112, 7
    %v2114 = vsub.s32 0, %v2113
    %v2115 = vrot.slane %v2111, %v2114
    %v2116 = vmul.f32 %v2027, %v2115
    %v2117 = vadd.f32 %v2110, %v2116
    %v2118 = vld [vmem:[#allocation7 + $0xd] sm:$0x1]
    %v2119 = vlaneseq
    %v2120 = vshrl.u32 %v2119, 7
    %v2121 = vsub.s32 0, %v2120
    %v2122 = vrot.slane %v2118, %v2121
    %v2123 = vmul.f32 %v2057, %v2122
    %v2124 = vadd.f32 %v2117, %v2123
    %s2125 = scalar_lea.vmem [#allocation10], 8
    %2126 = vst [vmem:[%s2125] sm:$0xff] %v2124
    %v2127 = vld [vmem:[#allocation7 + $0x2] sm:$0x1]
    %v2128 = vlaneseq
    %v2129 = vshrl.u32 %v2128, 7
    %v2130 = vsub.s32 0, %v2129
    %v2131 = vrot.slane %v2127, %v2130
    %v2132 = vmul.f32 %v2025, %v2131
    %v2133 = vld [vmem:[#allocation7 + $0x6] sm:$0x1]
    %v2134 = vlaneseq
    %v2135 = vshrl.u32 %v2134, 7
    %v2136 = vsub.s32 0, %v2135
    %v2137 = vrot.slane %v2133, %v2136
    %v2138 = vmul.f32 %v2026, %v2137
    %v2139 = vadd.f32 %v2132, %v2138
    %v2140 = vld [vmem:[#allocation7 + $0xa] sm:$0x1]
    %v2141 = vlaneseq
    %v2142 = vshrl.u32 %v2141, 7
    %v2143 = vsub.s32 0, %v2142
    %v2144 = vrot.slane %v2140, %v2143
    %v2145 = vmul.f32 %v2027, %v2144
    %v2146 = vadd.f32 %v2139, %v2145
    %v2147 = vld [vmem:[#allocation7 + $0xe] sm:$0x1]
    %v2148 = vlaneseq
    %v2149 = vshrl.u32 %v2148, 7
    %v2150 = vsub.s32 0, %v2149
    %v2151 = vrot.slane %v2147, %v2150
    %v2152 = vmul.f32 %v2057, %v2151
    %v2153 = vadd.f32 %v2146, %v2152
    %s2154 = scalar_lea.vmem [#allocation10], 16
    %2155 = vst [vmem:[%s2154] sm:$0xff] %v2153
    %v2156 = vld [vmem:[#allocation7 + $0x3] sm:$0x1]
    %v2157 = vlaneseq
    %v2158 = vshrl.u32 %v2157, 7
    %v2159 = vsub.s32 0, %v2158
    %v2160 = vrot.slane %v2156, %v2159
    %v2161 = vmul.f32 %v2025, %v2160
    %v2162 = vld [vmem:[#allocation7 + $0x7] sm:$0x1]
    %v2163 = vlaneseq
    %v2164 = vshrl.u32 %v2163, 7
    %v2165 = vsub.s32 0, %v2164
    %v2166 = vrot.slane %v2162, %v2165
    %v2167 = vmul.f32 %v2026, %v2166
    %v2168 = vadd.f32 %v2161, %v2167
    %v2169 = vld [vmem:[#allocation7 + $0xb] sm:$0x1]
    %v2170 = vlaneseq
    %v2171 = vshrl.u32 %v2170, 7
    %v2172 = vsub.s32 0, %v2171
    %v2173 = vrot.slane %v2169, %v2172
    %v2174 = vmul.f32 %v2027, %v2173
    %v2175 = vadd.f32 %v2168, %v2174
    %v2176 = vld [vmem:[#allocation7 + $0xf] sm:$0x1]
    %v2177 = vlaneseq
    %v2178 = vshrl.u32 %v2177, 7
    %v2179 = vsub.s32 0, %v2178
    %v2180 = vrot.slane %v2176, %v2179
    %v2181 = vmul.f32 %v2057, %v2180
    %v2182 = vadd.f32 %v2175, %v2181
    %s2183 = scalar_lea.vmem [#allocation10], 24
    %2184 = vst [vmem:[%s2183] sm:$0xff] %v2182
    %v2185 = vld [vmem:[#allocation7] sm:$0x1]
    %v2186 = vlaneseq
    %v2187 = vshrl.u32 %v2186, 7
    %v2188 = vsub.s32 0, %v2187
    %v2189 = vrot.slane %v2185, %v2188
    %v2190 = vmul.f32 %v2028, %v2189
    %v2191 = vld [vmem:[#allocation7 + $0x4] sm:$0x1]
    %v2192 = vlaneseq
    %v2193 = vshrl.u32 %v2192, 7
    %v2194 = vsub.s32 0, %v2193
    %v2195 = vrot.slane %v2191, %v2194
    %v2196 = vmul.f32 %v2029, %v2195
    %v2197 = vadd.f32 %v2190, %v2196
    %v2198 = vld [vmem:[#allocation7 + $0x8] sm:$0x1]
    %v2199 = vlaneseq
    %v2200 = vshrl.u32 %v2199, 7
    %v2201 = vsub.s32 0, %v2200
    %v2202 = vrot.slane %v2198, %v2201
    %v2203 = vmul.f32 %v2030, %v2202
    %v2204 = vadd.f32 %v2197, %v2203
    %v2205 = vld [vmem:[#allocation7 + $0xc] sm:$0x1]
    %v2206 = vlaneseq
    %v2207 = vshrl.u32 %v2206, 7
    %v2208 = vsub.s32 0, %v2207
    %v2209 = vrot.slane %v2205, %v2208
    %v2210 = vmul.f32 %v2063, %v2209
    %v2211 = vadd.f32 %v2204, %v2210
    %s2212 = scalar_lea.vmem [#allocation10], 32
    %2213 = vst [vmem:[%s2212] sm:$0xff] %v2211
    %v2214 = vld [vmem:[#allocation7 + $0x1] sm:$0x1]
    %v2215 = vlaneseq
    %v2216 = vshrl.u32 %v2215, 7
    %v2217 = vsub.s32 0, %v2216
    %v2218 = vrot.slane %v2214, %v2217
    %v2219 = vmul.f32 %v2028, %v2218
    %v2220 = vld [vmem:[#allocation7 + $0x5] sm:$0x1]
    %v2221 = vlaneseq
    %v2222 = vshrl.u32 %v2221, 7
    %v2223 = vsub.s32 0, %v2222
    %v2224 = vrot.slane %v2220, %v2223
    %v2225 = vmul.f32 %v2029, %v2224
    %v2226 = vadd.f32 %v2219, %v2225
    %v2227 = vld [vmem:[#allocation7 + $0x9] sm:$0x1]
    %v2228 = vlaneseq
    %v2229 = vshrl.u32 %v2228, 7
    %v2230 = vsub.s32 0, %v2229
    %v2231 = vrot.slane %v2227, %v2230
    %v2232 = vmul.f32 %v2030, %v2231
    %v2233 = vadd.f32 %v2226, %v2232
    %v2234 = vld [vmem:[#allocation7 + $0xd] sm:$0x1]
    %v2235 = vlaneseq
    %v2236 = vshrl.u32 %v2235, 7
    %v2237 = vsub.s32 0, %v2236
    %v2238 = vrot.slane %v2234, %v2237
    %v2239 = vmul.f32 %v2063, %v2238
    %v2240 = vadd.f32 %v2233, %v2239
    %s2241 = scalar_lea.vmem [#allocation10], 40
    %2242 = vst [vmem:[%s2241] sm:$0xff] %v2240
    %v2243 = vld [vmem:[#allocation7 + $0x2] sm:$0x1]
    %v2244 = vlaneseq
    %v2245 = vshrl.u32 %v2244, 7
    %v2246 = vsub.s32 0, %v2245
    %v2247 = vrot.slane %v2243, %v2246
    %v2248 = vmul.f32 %v2028, %v2247
    %v2249 = vld [vmem:[#allocation7 + $0x6] sm:$0x1]
    %v2250 = vlaneseq
    %v2251 = vshrl.u32 %v2250, 7
    %v2252 = vsub.s32 0, %v2251
    %v2253 = vrot.slane %v2249, %v2252
    %v2254 = vmul.f32 %v2029, %v2253
    %v2255 = vadd.f32 %v2248, %v2254
    %v2256 = vld [vmem:[#allocation7 + $0xa] sm:$0x1]
    %v2257 = vlaneseq
    %v2258 = vshrl.u32 %v2257, 7
    %v2259 = vsub.s32 0, %v2258
    %v2260 = vrot.slane %v2256, %v2259
    %v2261 = vmul.f32 %v2030, %v2260
    %v2262 = vadd.f32 %v2255, %v2261
    %v2263 = vld [vmem:[#allocation7 + $0xe] sm:$0x1]
    %v2264 = vlaneseq
    %v2265 = vshrl.u32 %v2264, 7
    %v2266 = vsub.s32 0, %v2265
    %v2267 = vrot.slane %v2263, %v2266
    %v2268 = vmul.f32 %v2063, %v2267
    %v2269 = vadd.f32 %v2262, %v2268
    %s2270 = scalar_lea.vmem [#allocation10], 48
    %2271 = vst [vmem:[%s2270] sm:$0xff] %v2269
    %v2272 = vld [vmem:[#allocation7 + $0x3] sm:$0x1]
    %v2273 = vlaneseq
    %v2274 = vshrl.u32 %v2273, 7
    %v2275 = vsub.s32 0, %v2274
    %v2276 = vrot.slane %v2272, %v2275
    %v2277 = vmul.f32 %v2028, %v2276
    %v2278 = vld [vmem:[#allocation7 + $0x7] sm:$0x1]
    %v2279 = vlaneseq
    %v2280 = vshrl.u32 %v2279, 7
    %v2281 = vsub.s32 0, %v2280
    %v2282 = vrot.slane %v2278, %v2281
    %v2283 = vmul.f32 %v2029, %v2282
    %v2284 = vadd.f32 %v2277, %v2283
    %v2285 = vld [vmem:[#allocation7 + $0xb] sm:$0x1]
    %v2286 = vlaneseq
    %v2287 = vshrl.u32 %v2286, 7
    %v2288 = vsub.s32 0, %v2287
    %v2289 = vrot.slane %v2285, %v2288
    %v2290 = vmul.f32 %v2030, %v2289
    %v2291 = vadd.f32 %v2284, %v2290
    %v2292 = vld [vmem:[#allocation7 + $0xf] sm:$0x1]
    %v2293 = vlaneseq
    %v2294 = vshrl.u32 %v2293, 7
    %v2295 = vsub.s32 0, %v2294
    %v2296 = vrot.slane %v2292, %v2295
    %v2297 = vmul.f32 %v2063, %v2296
    %v2298 = vadd.f32 %v2291, %v2297
    %s2299 = scalar_lea.vmem [#allocation10], 56
    %2300 = vst [vmem:[%s2299] sm:$0xff] %v2298
    %v2301 = vld [vmem:[#allocation7] sm:$0x1]
    %v2302 = vlaneseq
    %v2303 = vshrl.u32 %v2302, 7
    %v2304 = vsub.s32 0, %v2303
    %v2305 = vrot.slane %v2301, %v2304
    %v2306 = vmul.f32 %v2031, %v2305
    %v2307 = vld [vmem:[#allocation7 + $0x4] sm:$0x1]
    %v2308 = vlaneseq
    %v2309 = vshrl.u32 %v2308, 7
    %v2310 = vsub.s32 0, %v2309
    %v2311 = vrot.slane %v2307, %v2310
    %v2312 = vmul.f32 %v2032, %v2311
    %v2313 = vadd.f32 %v2306, %v2312
    %v2314 = vld [vmem:[#allocation7 + $0x8] sm:$0x1]
    %v2315 = vlaneseq
    %v2316 = vshrl.u32 %v2315, 7
    %v2317 = vsub.s32 0, %v2316
    %v2318 = vrot.slane %v2314, %v2317
    %v2319 = vmul.f32 %v2033, %v2318
    %v2320 = vadd.f32 %v2313, %v2319
    %v2321 = vld [vmem:[#allocation7 + $0xc] sm:$0x1]
    %v2322 = vlaneseq
    %v2323 = vshrl.u32 %v2322, 7
    %v2324 = vsub.s32 0, %v2323
    %v2325 = vrot.slane %v2321, %v2324
    %v2326 = vmul.f32 %v2069, %v2325
    %v2327 = vadd.f32 %v2320, %v2326
    %s2328 = scalar_lea.vmem [#allocation10], 64
    %2329 = vst [vmem:[%s2328] sm:$0xff] %v2327
    %v2330 = vld [vmem:[#allocation7 + $0x1] sm:$0x1]
    %v2331 = vlaneseq
    %v2332 = vshrl.u32 %v2331, 7
    %v2333 = vsub.s32 0, %v2332
    %v2334 = vrot.slane %v2330, %v2333
    %v2335 = vmul.f32 %v2031, %v2334
    %v2336 = vld [vmem:[#allocation7 + $0x5] sm:$0x1]
    %v2337 = vlaneseq
    %v2338 = vshrl.u32 %v2337, 7
    %v2339 = vsub.s32 0, %v2338
    %v2340 = vrot.slane %v2336, %v2339
    %v2341 = vmul.f32 %v2032, %v2340
    %v2342 = vadd.f32 %v2335, %v2341
    %v2343 = vld [vmem:[#allocation7 + $0x9] sm:$0x1]
    %v2344 = vlaneseq
    %v2345 = vshrl.u32 %v2344, 7
    %v2346 = vsub.s32 0, %v2345
    %v2347 = vrot.slane %v2343, %v2346
    %v2348 = vmul.f32 %v2033, %v2347
    %v2349 = vadd.f32 %v2342, %v2348
    %v2350 = vld [vmem:[#allocation7 + $0xd] sm:$0x1]
    %v2351 = vlaneseq
    %v2352 = vshrl.u32 %v2351, 7
    %v2353 = vsub.s32 0, %v2352
    %v2354 = vrot.slane %v2350, %v2353
    %v2355 = vmul.f32 %v2069, %v2354
    %v2356 = vadd.f32 %v2349, %v2355
    %s2357 = scalar_lea.vmem [#allocation10], 72
    %2358 = vst [vmem:[%s2357] sm:$0xff] %v2356
    %v2359 = vld [vmem:[#allocation7 + $0x2] sm:$0x1]
    %v2360 = vlaneseq
    %v2361 = vshrl.u32 %v2360, 7
    %v2362 = vsub.s32 0, %v2361
    %v2363 = vrot.slane %v2359, %v2362
    %v2364 = vmul.f32 %v2031, %v2363
    %v2365 = vld [vmem:[#allocation7 + $0x6] sm:$0x1]
    %v2366 = vlaneseq
    %v2367 = vshrl.u32 %v2366, 7
    %v2368 = vsub.s32 0, %v2367
    %v2369 = vrot.slane %v2365, %v2368
    %v2370 = vmul.f32 %v2032, %v2369
    %v2371 = vadd.f32 %v2364, %v2370
    %v2372 = vld [vmem:[#allocation7 + $0xa] sm:$0x1]
    %v2373 = vlaneseq
    %v2374 = vshrl.u32 %v2373, 7
    %v2375 = vsub.s32 0, %v2374
    %v2376 = vrot.slane %v2372, %v2375
    %v2377 = vmul.f32 %v2033, %v2376
    %v2378 = vadd.f32 %v2371, %v2377
    %v2379 = vld [vmem:[#allocation7 + $0xe] sm:$0x1]
    %v2380 = vlaneseq
    %v2381 = vshrl.u32 %v2380, 7
    %v2382 = vsub.s32 0, %v2381
    %v2383 = vrot.slane %v2379, %v2382
    %v2384 = vmul.f32 %v2069, %v2383
    %v2385 = vadd.f32 %v2378, %v2384
    %s2386 = scalar_lea.vmem [#allocation10], 80
    %2387 = vst [vmem:[%s2386] sm:$0xff] %v2385
    %v2388 = vld [vmem:[#allocation7 + $0x3] sm:$0x1]
    %v2389 = vlaneseq
    %v2390 = vshrl.u32 %v2389, 7
    %v2391 = vsub.s32 0, %v2390
    %v2392 = vrot.slane %v2388, %v2391
    %v2393 = vmul.f32 %v2031, %v2392
    %v2394 = vld [vmem:[#allocation7 + $0x7] sm:$0x1]
    %v2395 = vlaneseq
    %v2396 = vshrl.u32 %v2395, 7
    %v2397 = vsub.s32 0, %v2396
    %v2398 = vrot.slane %v2394, %v2397
    %v2399 = vmul.f32 %v2032, %v2398
    %v2400 = vadd.f32 %v2393, %v2399
    %v2401 = vld [vmem:[#allocation7 + $0xb] sm:$0x1]
    %v2402 = vlaneseq
    %v2403 = vshrl.u32 %v2402, 7
    %v2404 = vsub.s32 0, %v2403
    %v2405 = vrot.slane %v2401, %v2404
    %v2406 = vmul.f32 %v2033, %v2405
    %v2407 = vadd.f32 %v2400, %v2406
    %v2408 = vld [vmem:[#allocation7 + $0xf] sm:$0x1]
    %v2409 = vlaneseq
    %v2410 = vshrl.u32 %v2409, 7
    %v2411 = vsub.s32 0, %v2410
    %v2412 = vrot.slane %v2408, %v2411
    %v2413 = vmul.f32 %v2069, %v2412
    %v2414 = vadd.f32 %v2407, %v2413
    %s2415 = scalar_lea.vmem [#allocation10], 88
    %2416 = vst [vmem:[%s2415] sm:$0xff] %v2414
    %v2417 = vld [vmem:[#allocation7 + $0xc] sm:$0x1]
    %v2418 = vlaneseq
    %v2419 = vshrl.u32 %v2418, 7
    %v2420 = vsub.s32 0, %v2419
    %v2421 = vrot.slane %v2417, %v2420
    %s2422 = scalar_lea.vmem [#allocation10], 96
    %2423 = vst [vmem:[%s2422] sm:$0xff] %v2421
    %v2424 = vld [vmem:[#allocation7 + $0xd] sm:$0x1]
    %v2425 = vlaneseq
    %v2426 = vshrl.u32 %v2425, 7
    %v2427 = vsub.s32 0, %v2426
    %v2428 = vrot.slane %v2424, %v2427
    %s2429 = scalar_lea.vmem [#allocation10], 104
    %2430 = vst [vmem:[%s2429] sm:$0xff] %v2428
    %v2431 = vld [vmem:[#allocation7 + $0xe] sm:$0x1]
    %v2432 = vlaneseq
    %v2433 = vshrl.u32 %v2432, 7
    %v2434 = vsub.s32 0, %v2433
    %v2435 = vrot.slane %v2431, %v2434
    %s2436 = scalar_lea.vmem [#allocation10], 112
    %2437 = vst [vmem:[%s2436] sm:$0xff] %v2435
    %v2438 = vld [vmem:[#allocation7 + $0xf] sm:$0x1]
    %v2439 = vlaneseq
    %v2440 = vshrl.u32 %v2439, 7
    %v2441 = vsub.s32 0, %v2440
    %v2442 = vrot.slane %v2438, %v2441
    %s2443 = scalar_lea.vmem [#allocation10], 120
    %2444 = vst [vmem:[%s2443] sm:$0xff] %v2442
    // Predicated region
    $region42: #{tpu_custom_call.1} parent=1 // pred_check
      _
    $region43: #{tpu_custom_call.1} parent=1 // pred_check_branch
      %2446 = sbr.rel (0) target = $region45
    $region44: #{tpu_custom_call.1} parent=1 // pred_region
      %s2448 = ssub.s32 2048, 2048
      %2449 = vsyncadd [#allocation4], %s2448
      %s2450 = sshll.u32 [#allocation10], 4
      %s2451 = int_to_ptr.vmem [resolvable:$true] %s2450
      %2456 = dma.vmem_to_hbm [thread:$0]  %s2451, 2048, %s6, [#allocation4], 128, 128, 8
    $region45: #{tpu_custom_call.1} parent=1 // pred_fallthru
      _
    // Predicated region
    $region46: #{tpu_custom_call.1} parent=1 // pred_check
      _
    $region47: #{tpu_custom_call.1} parent=1 // pred_check_branch
      %2458 = sbr.rel (0) target = $region49
    $region48: #{tpu_custom_call.1} parent=1 // pred_region
      %2459 = dma.done [#allocation4], 2048
    $region49: #{tpu_custom_call.1} parent=1 // pred_fallthru
      _
    %2460 = vsyncpa [#allocation3], 1
    %2461 = vsyncpa [#allocation6], 1
    %2462 = vsyncpa [#allocation9], 1
    %2463 = vsyncpa [#allocation4], 1

</llo_original>
